<compile_context>
chip_gen: v6e
topology: v6e:2x2x1
jax: 0.10.0
libtpu: 0.0.40
codegen_flags: <defaults>
</compile_context>

<pallas_src>
import functools

import jax
import jax.numpy as jnp
import numpy as np
from jax import lax
from jax.experimental import pallas as pl
from jax.experimental.pallas import tpu as pltpu

_LOG_CLAMP = -100.0      # F.binary_cross_entropy clamps log() at -100
_BIG = 3.0e38            # sentinel so non-positive / padded rows sort last


def _bce_elem(p, t):
    logp = jnp.maximum(jnp.log(p), _LOG_CLAMP)
    log1mp = jnp.maximum(jnp.log(1.0 - p), _LOG_CLAMP)
    return -(t * logp + (1.0 - t) * log1mp)


def _bce_ohem_kernel(x_row_ref, t_row_ref, x_col_ref, t_col_ref, loss_ref, *,
                     ratio, n_valid):
    # x_row_ref / t_row_ref : (C, Np)  predictions / targets, rows along the lane axis
    # x_col_ref / t_col_ref : (Np, 1)  column-0 predictions / targets, rows along sublanes
    # loss_ref              : (1, 128) lane-dense scalar output (value splatted)
    C, Np = x_row_ref.shape

    x_row = x_row_ref[...]
    t_row = t_row_ref[...]
    x_col = x_col_ref[...]
    t_col = t_col_ref[...]

    valid_row = lax.broadcasted_iota(jnp.int32, (1, Np), 1) < n_valid   # (1, Np)
    valid_col = lax.broadcasted_iota(jnp.int32, (Np, 1), 0) < n_valid   # (Np, 1)

    p0 = x_row[0:1, :]                      # (1, Np) column-0 predictions
    t0 = t_row[0:1, :]                      # (1, Np) column-0 targets

    pos_row = valid_row & (t0 >= 0.5)       # (1, Np)
    neg_row = valid_row & (t0 < 0.5)        # (1, Np)
    pos_col = valid_col & (t_col >= 0.5)    # (Np, 1)

    num_pos_f = jnp.sum(pos_row.astype(jnp.float32))
    num_neg_f = jnp.sum(neg_row.astype(jnp.float32))
    num_pos_i = num_pos_f.astype(jnp.int32)
    num_neg_i = num_neg_f.astype(jnp.int32)

    # ---------- negative branch: mean BCE over every column of the negative rows
    neg_bce = _bce_elem(x_row, t_row)                        # (C, Np)
    neg_sum = jnp.sum(jnp.where(neg_row, neg_bce, 0.0))      # mask broadcasts over C
    neg_mean = neg_sum / jnp.maximum(num_neg_f * jnp.float32(C), 1.0)

    # ---------- positive branch: OHEM = k positives with the smallest column-0 prediction
    # k = min(max(int(ratio * num_pos), 1), num_pos)   (int() truncates toward zero)
    num_hard = jnp.maximum((jnp.float32(ratio) * num_pos_f).astype(jnp.int32), 1)
    k = jnp.minimum(num_hard, num_pos_i)
    k_f = k.astype(jnp.float32)

    pm_row = jnp.where(pos_row, p0, jnp.float32(_BIG))       # (1, Np)
    pm_col = jnp.where(pos_col, x_col, jnp.float32(_BIG))    # (Np, 1)

    idx_i = lax.broadcasted_iota(jnp.int32, (Np, Np), 1)     # candidate index (lanes)
    idx_j = lax.broadcasted_iota(jnp.int32, (Np, Np), 0)     # competitor index (sublanes)
    # competitor j sorts strictly before candidate i (stable tie-break by index)
    before = (pm_col < pm_row) | ((pm_col == pm_row) & (idx_j < idx_i))
    rank = jnp.sum(before.astype(jnp.float32), axis=0, keepdims=True)   # (1, Np)

    selected = pos_row & (rank < k_f)                        # the k hardest positives
    pos_bce = _bce_elem(p0, t0)                              # (1, Np)
    pos_sum = jnp.sum(jnp.where(selected, pos_bce, 0.0))
    pos_mean = pos_sum / jnp.maximum(k_f, 1.0)

    # ---------- branch logic of the PyTorch forward
    both = 0.5 * pos_mean + 0.5 * neg_mean
    loss = jnp.where(num_pos_i == 0, neg_mean,
                     jnp.where(num_neg_i == 0, pos_mean, both))
    loss_ref[...] = jnp.broadcast_to(loss, loss_ref.shape)


def bce_ohem_pos_class(inputs, targets, *, ratio):
    """JAX/Pallas forward of BCEOHEM_pos_class(ratio). inputs/targets: (N, C) probs/labels."""
    assert ratio <= 1
    inputs = jnp.asarray(inputs, jnp.float32)
    targets = jnp.asarray(targets, jnp.float32)
    if inputs.ndim == 1:
        inputs = inputs[:, None]
    if targets.ndim == 1:
        targets = targets[:, None]
    N, C = inputs.shape
    # TODO(synk): the "both sides empty" exception can only trigger for N == 0, which has
    # no static-shape equivalent here; callers must pass N >= 1.
    Np = max(128, ((N + 127) // 128) * 128)   # pad rows up to a lane-dense multiple of 128
    pad = Np - N

    # rows along lanes (lane-dense); padded tail uses harmless (p=0.5, t=0) values that the
    # in-kernel validity mask excludes from every statistic anyway.
    x_row = jnp.pad(jnp.transpose(inputs), ((0, 0), (0, pad)), constant_values=0.5)
    t_row = jnp.pad(jnp.transpose(targets), ((0, 0), (0, pad)), constant_values=0.0)
    # column-0 view with rows along sublanes (for the pairwise-rank matrix; avoids any
    # in-kernel lane<->sublane relayout)
    x_col = jnp.pad(inputs[:, 0:1], ((0, pad), (0, 0)), constant_values=0.5)
    t_col = jnp.pad(targets[:, 0:1], ((0, pad), (0, 0)), constant_values=0.0)

    out = pl.pallas_call(
        functools.partial(_bce_ohem_kernel, ratio=float(ratio), n_valid=N),
        out_shape=jax.ShapeDtypeStruct((1, 128), jnp.float32),
        grid_spec=pltpu.PrefetchScalarGridSpec(
            num_scalar_prefetch=0,
            grid=(1,),
            in_specs=[
                pl.BlockSpec((C, Np), lambda i: (0, 0)),
                pl.BlockSpec((C, Np), lambda i: (0, 0)),
                pl.BlockSpec((Np, 1), lambda i: (0, 0)),
                pl.BlockSpec((Np, 1), lambda i: (0, 0)),
            ],
            out_specs=pl.BlockSpec((1, 128), lambda i: (0, 0)),
        ),
        compiler_params=pltpu.CompilerParams(dimension_semantics=("arbitrary",)),
    )(x_row, t_row, x_col, t_col)
    return out[0, 0]


def _reference(inputs, targets, ratio):
    """NumPy re-implementation that mirrors the PyTorch module line-by-line."""
    inputs = np.asarray(inputs, np.float64)
    targets = np.asarray(targets, np.float64)

    def bce(p, t):
        return -(t * np.maximum(np.log(p), -100.0)
                 + (1.0 - t) * np.maximum(np.log(1.0 - p), -100.0))

    p0, t0 = inputs[:, 0], targets[:, 0]
    pos_idcs = t0 >= 0.5
    neg_idcs = t0 < 0.5
    pos_output, pos_labels = p0[pos_idcs], t0[pos_idcs]
    neg_output, neg_labels = inputs[neg_idcs], targets[neg_idcs]

    def hard_mining(pred, lab):
        num_hard = max(int(ratio * pred.shape[0]), 1)
        k = min(num_hard, pred.shape[0])
        order = np.argsort(pred, kind="stable")[:k]   # torch.topk(..., largest=False)
        return pred[order], lab[order]

    if pos_output.shape[0] == 0 and neg_output.shape[0] == 0:
        raise ValueError("empty tensors")
    if pos_output.shape[0] == 0:
        return float(np.mean(bce(neg_output, neg_labels)))
    if neg_output.shape[0] == 0:
        mp, ml = hard_mining(pos_output, pos_labels)
        return float(np.mean(bce(mp, ml)))
    neg_loss = bce(neg_output, neg_labels)
    mp, ml = hard_mining(pos_output, pos_labels)
    pos_loss = bce(mp, ml)
    classify_loss = 0.5 * pos_loss + 0.5 * neg_loss   # same broadcast as torch (C == 1)
    return float(np.mean(classify_loss))


if __name__ == "__main__":
    # Typical detector-classifier shapes: N candidate proposals, 1 probability column.
    N, C = 500, 1
    ratio = 0.5

    key = jax.random.PRNGKey(0)
    k1, k2 = jax.random.split(key)
    inputs = jax.nn.sigmoid(jax.random.normal(k1, (N, C), jnp.float32))      # probs in (0,1)
    targets = (jax.random.uniform(k2, (N, C)) < 0.3).astype(jnp.float32)     # binary labels

    loss = bce_ohem_pos_class(inputs, targets, ratio=ratio)
    loss = jax.block_until_ready(loss)

    ref = _reference(np.asarray(inputs), np.asarray(targets), ratio)
    np.testing.assert_allclose(float(loss), ref, rtol=1e-4, atol=1e-5)

    print("KERNEL_OK")
</pallas_src>

<mosaic_0001>
module attributes {stable_mosaic.version = 11 : i64} {
  func.func @_bce_ohem_kernel(%arg0: i32, %arg1: memref<1x512xf32, #tpu.memory_space<vmem>>, %arg2: memref<1x512xf32, #tpu.memory_space<vmem>>, %arg3: memref<512x1xf32, #tpu.memory_space<vmem>>, %arg4: memref<512x1xf32, #tpu.memory_space<vmem>>, %arg5: memref<1x128xf32, #tpu.memory_space<vmem>>) attributes {dimension_semantics = [#tpu.dimension_semantics<arbitrary>], iteration_bounds = array<i64: 1>, scalar_prefetch = 0 : i64, scratch_operands = 0 : i64, tpu.core_type = #tpu.core_type<tc>, window_params = [{pipeline_mode = #tpu.pipeline_mode<synchronous>, transform_indices = @transform_0, window_bounds = array<i64: 1, 512>}, {pipeline_mode = #tpu.pipeline_mode<synchronous>, transform_indices = @transform_1, window_bounds = array<i64: 1, 512>}, {pipeline_mode = #tpu.pipeline_mode<synchronous>, transform_indices = @transform_2, window_bounds = array<i64: 512, 1>}, {pipeline_mode = #tpu.pipeline_mode<synchronous>, transform_indices = @transform_3, window_bounds = array<i64: 512, 1>}, {pipeline_mode = #tpu.pipeline_mode<synchronous>, transform_indices = @transform_4, window_bounds = array<i64: 1, 128>}]} {
    %c0 = arith.constant 0 : index
    %c0_0 = arith.constant 0 : index
    %0 = vector.load %arg1[%c0, %c0_0] : memref<1x512xf32, #tpu.memory_space<vmem>>, vector<1x512xf32>
    %c0_1 = arith.constant 0 : index
    %c0_2 = arith.constant 0 : index
    %1 = vector.load %arg2[%c0_1, %c0_2] : memref<1x512xf32, #tpu.memory_space<vmem>>, vector<1x512xf32>
    %c0_3 = arith.constant 0 : index
    %c0_4 = arith.constant 0 : index
    %2 = vector.load %arg3[%c0_3, %c0_4] : memref<512x1xf32, #tpu.memory_space<vmem>>, vector<512x1xf32>
    %c0_5 = arith.constant 0 : index
    %c0_6 = arith.constant 0 : index
    %3 = vector.load %arg4[%c0_5, %c0_6] : memref<512x1xf32, #tpu.memory_space<vmem>>, vector<512x1xf32>
    %4 = tpu.iota {dimensions = array<i32: 1>} : vector<1x512xi32>
    %c500_i32 = arith.constant 500 : i32
    %5 = vector.broadcast %c500_i32 : i32 to vector<1x512xi32>
    %6 = arith.cmpi slt, %4, %5 : vector<1x512xi32>
    %7 = tpu.iota {dimensions = array<i32: 0>} : vector<512x1xi32>
    %c500_i32_7 = arith.constant 500 : i32
    %8 = vector.broadcast %c500_i32_7 : i32 to vector<512x1xi32>
    %9 = arith.cmpi slt, %7, %8 : vector<512x1xi32>
    %cst = arith.constant 5.000000e-01 : f32
    %10 = vector.broadcast %cst : f32 to vector<1x512xf32>
    %11 = arith.cmpf oge, %1, %10 : vector<1x512xf32>
    %12 = arith.andi %6, %11 : vector<1x512xi1>
    %cst_8 = arith.constant 5.000000e-01 : f32
    %13 = vector.broadcast %cst_8 : f32 to vector<1x512xf32>
    %14 = arith.cmpf olt, %1, %13 : vector<1x512xf32>
    %15 = arith.andi %6, %14 : vector<1x512xi1>
    %cst_9 = arith.constant 5.000000e-01 : f32
    %16 = vector.broadcast %cst_9 : f32 to vector<512x1xf32>
    %17 = arith.cmpf oge, %3, %16 : vector<512x1xf32>
    %18 = arith.andi %9, %17 : vector<512x1xi1>
    %19 = arith.extui %12 : vector<1x512xi1> to vector<1x512xi32>
    %20 = arith.sitofp %19 : vector<1x512xi32> to vector<1x512xf32>
    %21 = vector.shape_cast %20 : vector<1x512xf32> to vector<1x1x512xf32>
    %cst_10 = arith.constant dense<0.000000e+00> : vector<1xf32>
    %22 = vector.multi_reduction <add>, %21, %cst_10 [1, 2] : vector<1x1x512xf32> to vector<1xf32>
    %23 = vector.shape_cast %22 : vector<1xf32> to vector<1x1x1xf32>
    %24 = vector.extract %23[0, 0, 0] : f32 from vector<1x1x1xf32>
    %25 = arith.extui %15 : vector<1x512xi1> to vector<1x512xi32>
    %26 = arith.sitofp %25 : vector<1x512xi32> to vector<1x512xf32>
    %27 = vector.shape_cast %26 : vector<1x512xf32> to vector<1x1x512xf32>
    %cst_11 = arith.constant dense<0.000000e+00> : vector<1xf32>
    %28 = vector.multi_reduction <add>, %27, %cst_11 [1, 2] : vector<1x1x512xf32> to vector<1xf32>
    %29 = vector.shape_cast %28 : vector<1xf32> to vector<1x1x1xf32>
    %30 = vector.extract %29[0, 0, 0] : f32 from vector<1x1x1xf32>
    %31 = arith.fptosi %24 : f32 to i32
    %32 = arith.fptosi %30 : f32 to i32
    %33 = math.log %0 : vector<1x512xf32>
    %cst_12 = arith.constant -1.000000e+02 : f32
    %34 = vector.broadcast %cst_12 : f32 to vector<1x512xf32>
    %35 = arith.maximumf %33, %34 : vector<1x512xf32>
    %cst_13 = arith.constant 1.000000e+00 : f32
    %36 = vector.broadcast %cst_13 : f32 to vector<1x512xf32>
    %37 = arith.subf %36, %0 : vector<1x512xf32>
    %38 = math.log %37 : vector<1x512xf32>
    %cst_14 = arith.constant -1.000000e+02 : f32
    %39 = vector.broadcast %cst_14 : f32 to vector<1x512xf32>
    %40 = arith.maximumf %38, %39 : vector<1x512xf32>
    %41 = arith.mulf %1, %35 : vector<1x512xf32>
    %cst_15 = arith.constant 1.000000e+00 : f32
    %42 = vector.broadcast %cst_15 : f32 to vector<1x512xf32>
    %43 = arith.subf %42, %1 : vector<1x512xf32>
    %44 = arith.mulf %43, %40 : vector<1x512xf32>
    %45 = arith.addf %41, %44 : vector<1x512xf32>
    %cst_16 = arith.constant 0.000000e+00 : f32
    %46 = vector.broadcast %cst_16 : f32 to vector<1x512xf32>
    %47 = arith.subf %46, %45 : vector<1x512xf32>
    %cst_17 = arith.constant 0.000000e+00 : f32
    %48 = vector.broadcast %cst_17 : f32 to vector<1x512xf32>
    %49 = arith.select %15, %47, %48 : vector<1x512xi1>, vector<1x512xf32>
    %50 = vector.shape_cast %49 : vector<1x512xf32> to vector<1x1x512xf32>
    %cst_18 = arith.constant dense<0.000000e+00> : vector<1xf32>
    %51 = vector.multi_reduction <add>, %50, %cst_18 [1, 2] : vector<1x1x512xf32> to vector<1xf32>
    %52 = vector.shape_cast %51 : vector<1xf32> to vector<1x1x1xf32>
    %53 = vector.extract %52[0, 0, 0] : f32 from vector<1x1x1xf32>
    %cst_19 = arith.constant 1.000000e+00 : f32
    %54 = arith.mulf %30, %cst_19 : f32
    %cst_20 = arith.constant 1.000000e+00 : f32
    %55 = arith.maximumf %54, %cst_20 : f32
    %56 = arith.divf %53, %55 : f32
    %cst_21 = arith.constant 5.000000e-01 : f32
    %57 = arith.mulf %cst_21, %24 : f32
    %58 = arith.fptosi %57 : f32 to i32
    %c1_i32 = arith.constant 1 : i32
    %59 = arith.maxsi %58, %c1_i32 : i32
    %60 = arith.minsi %59, %31 : i32
    %61 = arith.sitofp %60 : i32 to f32
    %cst_22 = arith.constant 3.000000e+38 : f32
    %62 = vector.broadcast %cst_22 : f32 to vector<1x512xf32>
    %63 = arith.select %12, %0, %62 : vector<1x512xi1>, vector<1x512xf32>
    %cst_23 = arith.constant 3.000000e+38 : f32
    %64 = vector.broadcast %cst_23 : f32 to vector<512x1xf32>
    %65 = arith.select %18, %2, %64 : vector<512x1xi1>, vector<512x1xf32>
    %66 = tpu.iota {dimensions = array<i32: 1>} : vector<512x512xi32>
    %67 = tpu.iota {dimensions = array<i32: 0>} : vector<512x512xi32>
    %68 = vector.broadcast %65 : vector<512x1xf32> to vector<512x512xf32>
    %69 = vector.broadcast %63 : vector<1x512xf32> to vector<512x512xf32>
    %70 = arith.cmpf olt, %68, %69 : vector<512x512xf32>
    %71 = vector.broadcast %65 : vector<512x1xf32> to vector<512x512xf32>
    %72 = vector.broadcast %63 : vector<1x512xf32> to vector<512x512xf32>
    %73 = arith.cmpf oeq, %71, %72 : vector<512x512xf32>
    %74 = arith.cmpi slt, %67, %66 : vector<512x512xi32>
    %75 = arith.andi %73, %74 : vector<512x512xi1>
    %76 = arith.ori %70, %75 : vector<512x512xi1>
    %77 = arith.extui %76 : vector<512x512xi1> to vector<512x512xi32>
    %78 = arith.sitofp %77 : vector<512x512xi32> to vector<512x512xf32>
    %cst_24 = arith.constant dense<0.000000e+00> : vector<512xf32>
    %79 = vector.multi_reduction <add>, %78, %cst_24 [0] : vector<512x512xf32> to vector<512xf32>
    %80 = vector.shape_cast %79 : vector<512xf32> to vector<1x512xf32>
    %81 = vector.broadcast %61 : f32 to vector<1x512xf32>
    %82 = arith.cmpf olt, %80, %81 : vector<1x512xf32>
    %83 = arith.andi %12, %82 : vector<1x512xi1>
    %84 = math.log %0 : vector<1x512xf32>
    %cst_25 = arith.constant -1.000000e+02 : f32
    %85 = vector.broadcast %cst_25 : f32 to vector<1x512xf32>
    %86 = arith.maximumf %84, %85 : vector<1x512xf32>
    %cst_26 = arith.constant 1.000000e+00 : f32
    %87 = vector.broadcast %cst_26 : f32 to vector<1x512xf32>
    %88 = arith.subf %87, %0 : vector<1x512xf32>
    %89 = math.log %88 : vector<1x512xf32>
    %cst_27 = arith.constant -1.000000e+02 : f32
    %90 = vector.broadcast %cst_27 : f32 to vector<1x512xf32>
    %91 = arith.maximumf %89, %90 : vector<1x512xf32>
    %92 = arith.mulf %1, %86 : vector<1x512xf32>
    %cst_28 = arith.constant 1.000000e+00 : f32
    %93 = vector.broadcast %cst_28 : f32 to vector<1x512xf32>
    %94 = arith.subf %93, %1 : vector<1x512xf32>
    %95 = arith.mulf %94, %91 : vector<1x512xf32>
    %96 = arith.addf %92, %95 : vector<1x512xf32>
    %cst_29 = arith.constant 0.000000e+00 : f32
    %97 = vector.broadcast %cst_29 : f32 to vector<1x512xf32>
    %98 = arith.subf %97, %96 : vector<1x512xf32>
    %cst_30 = arith.constant 0.000000e+00 : f32
    %99 = vector.broadcast %cst_30 : f32 to vector<1x512xf32>
    %100 = arith.select %83, %98, %99 : vector<1x512xi1>, vector<1x512xf32>
    %101 = vector.shape_cast %100 : vector<1x512xf32> to vector<1x1x512xf32>
    %cst_31 = arith.constant dense<0.000000e+00> : vector<1xf32>
    %102 = vector.multi_reduction <add>, %101, %cst_31 [1, 2] : vector<1x1x512xf32> to vector<1xf32>
    %103 = vector.shape_cast %102 : vector<1xf32> to vector<1x1x1xf32>
    %104 = vector.extract %103[0, 0, 0] : f32 from vector<1x1x1xf32>
    %cst_32 = arith.constant 1.000000e+00 : f32
    %105 = arith.maximumf %61, %cst_32 : f32
    %106 = arith.divf %104, %105 : f32
    %cst_33 = arith.constant 5.000000e-01 : f32
    %107 = arith.mulf %cst_33, %106 : f32
    %cst_34 = arith.constant 5.000000e-01 : f32
    %108 = arith.mulf %cst_34, %56 : f32
    %109 = arith.addf %107, %108 : f32
    %c0_i32 = arith.constant 0 : i32
    %110 = arith.cmpi eq, %31, %c0_i32 : i32
    %c0_i32_35 = arith.constant 0 : i32
    %111 = arith.cmpi eq, %32, %c0_i32_35 : i32
    %112 = arith.select %111, %106, %109 : f32
    %113 = arith.select %110, %56, %112 : f32
    %114 = vector.broadcast %113 : f32 to vector<1x128xf32>
    %c0_36 = arith.constant 0 : index
    %c0_37 = arith.constant 0 : index
    %115 = vector.load %arg5[%c0_36, %c0_37] : memref<1x128xf32, #tpu.memory_space<vmem>>, vector<1x128xf32>
    tpu.vector_store %arg5[%c0_36, %c0_37], %114 {strides = array<i32>} : memref<1x128xf32, #tpu.memory_space<vmem>>, vector<1x128xf32>,
    return
  }
  func.func @transform_0(%arg0: i32) -> (i32, i32) {
    %c0_i32 = arith.constant 0 : i32
    %c0_i32_0 = arith.constant 0 : i32
    %c0_i32_1 = arith.constant 0 : i32
    return %c0_i32, %c0_i32_0 : i32, i32
  }
  func.func @transform_1(%arg0: i32) -> (i32, i32) {
    %c0_i32 = arith.constant 0 : i32
    %c0_i32_0 = arith.constant 0 : i32
    %c0_i32_1 = arith.constant 0 : i32
    return %c0_i32, %c0_i32_0 : i32, i32
  }
  func.func @transform_2(%arg0: i32) -> (i32, i32) {
    %c0_i32 = arith.constant 0 : i32
    %c0_i32_0 = arith.constant 0 : i32
    %c0_i32_1 = arith.constant 0 : i32
    return %c0_i32, %c0_i32_0 : i32, i32
  }
  func.func @transform_3(%arg0: i32) -> (i32, i32) {
    %c0_i32 = arith.constant 0 : i32
    %c0_i32_0 = arith.constant 0 : i32
    %c0_i32_1 = arith.constant 0 : i32
    return %c0_i32, %c0_i32_0 : i32, i32
  }
  func.func @transform_4(%arg0: i32) -> (i32, i32) {
    %c0_i32 = arith.constant 0 : i32
    %c0_i32_0 = arith.constant 0 : i32
    %c0_i32_1 = arith.constant 0 : i32
    return %c0_i32, %c0_i32_0 : i32, i32
  }
}

</mosaic_0001>

<llo_original>
// kernel: tpu_custom_call.1
$region0: #{tpu_custom_call.1}
  #allocation0 [shape = 'u32[]', space=smem, size = 0x4, offset = 0x4, fixed_abs, tag = 'smem constant byte address 0x4 - core index']
  #allocation1 [shape = 'u32[144,128]{1,0:T(1,128)}', space=vmem, size = 0x12000, scoped, tag = 'internal scratch']
  %s0 = inlined_call_operand.vmem [shape: f32[1,512], index: 0, kind: input, shape index: {}]
  %s1 = inlined_call_operand.vmem [shape: f32[1,512], index: 1, kind: input, shape index: {}]
  %s2 = inlined_call_operand.vmem [shape: f32[512,1], index: 2, kind: input, shape index: {}]
  %s3 = inlined_call_operand.vmem [shape: f32[512,1], index: 3, kind: input, shape index: {}]
  %s4 = inlined_call_operand.hbm [shape: f32[1,128], index: 4, kind: output, shape index: {}]
  %s5 = sld [smem:[#allocation0]]
  $region26: #{tpu_custom_call.1} parent=0
    _
  %s7 = ssub.s32 1, %s5
  %s8 = scalar_select 0, %s7, %s5
  $region1: #{tpu_custom_call.1} parent=0
    #allocation2 [shape = 'u8[512]{0}', space=vmem, size = 0x400, scoped, tag = 'output window, operand 0, single buffered']
    #allocation3 [shape = 's32[1]{0}', space=sflag, size = 0x4, scoped, tag = 'scoped memory for tpu_custom_call.1']
    %9 = vsyncpa [#allocation3], 0
    // Predicated region
    $region2: #{tpu_custom_call.1} parent=1 // pred_check
      _
    $region3: #{tpu_custom_call.1} parent=1 // pred_check_branch
      %11 = sbr.rel (0) target = $region5
    $region4: #{tpu_custom_call.1} parent=1 // pred_region
      _
    $region5: #{tpu_custom_call.1} parent=1 // pred_fallthru
      _
    // Predicated region
    $region6: #{tpu_custom_call.1} parent=1 // pred_check
      _
    $region7: #{tpu_custom_call.1} parent=1 // pred_check_branch
      %13 = sbr.rel (0) target = $region9
    $region8: #{tpu_custom_call.1} parent=1 // pred_region
      _
    $region9: #{tpu_custom_call.1} parent=1 // pred_fallthru
      _
    // Predicated region
    $region10: #{tpu_custom_call.1} parent=1 // pred_check
      _
    $region11: #{tpu_custom_call.1} parent=1 // pred_check_branch
      %15 = sbr.rel (0) target = $region13
    $region12: #{tpu_custom_call.1} parent=1 // pred_region
      _
    $region13: #{tpu_custom_call.1} parent=1 // pred_fallthru
      _
    // Predicated region
    $region14: #{tpu_custom_call.1} parent=1 // pred_check
      _
    $region15: #{tpu_custom_call.1} parent=1 // pred_check_branch
      %17 = sbr.rel (0) target = $region17
    $region16: #{tpu_custom_call.1} parent=1 // pred_region
      _
    $region17: #{tpu_custom_call.1} parent=1 // pred_fallthru
      _
    %v18 = vld [vmem:[%s0] sm:$0xf]
    %v19 = vld [vmem:[%s1] sm:$0xf]
    %v20 = vld [vmem:[%s2] sm:$0xff]
    %v21 = vld [vmem:[%s2 + $0x8] sm:$0xff]
    %v22 = vld [vmem:[%s2 + $0x10] sm:$0xff]
    %v23 = vld [vmem:[%s2 + $0x18] sm:$0xff]
    %v24 = vld [vmem:[%s2 + $0x20] sm:$0xff]
    %v25 = vld [vmem:[%s2 + $0x28] sm:$0xff]
    %v26 = vld [vmem:[%s2 + $0x30] sm:$0xff]
    %v27 = vld [vmem:[%s2 + $0x38] sm:$0xff]
    %v28 = vld [vmem:[%s2 + $0x40] sm:$0xff]
    %v29 = vld [vmem:[%s2 + $0x48] sm:$0xff]
    %v30 = vld [vmem:[%s2 + $0x50] sm:$0xff]
    %v31 = vld [vmem:[%s2 + $0x58] sm:$0xff]
    %v32 = vld [vmem:[%s2 + $0x60] sm:$0xff]
    %v33 = vld [vmem:[%s2 + $0x68] sm:$0xff]
    %v34 = vld [vmem:[%s2 + $0x70] sm:$0xff]
    %v35 = vld [vmem:[%s2 + $0x78] sm:$0xff]
    %v36 = vld [vmem:[%s2 + $0x80] sm:$0xff]
    %v37 = vld [vmem:[%s2 + $0x88] sm:$0xff]
    %v38 = vld [vmem:[%s2 + $0x90] sm:$0xff]
    %v39 = vld [vmem:[%s2 + $0x98] sm:$0xff]
    %v40 = vld [vmem:[%s2 + $0xa0] sm:$0xff]
    %v41 = vld [vmem:[%s2 + $0xa8] sm:$0xff]
    %v42 = vld [vmem:[%s2 + $0xb0] sm:$0xff]
    %v43 = vld [vmem:[%s2 + $0xb8] sm:$0xff]
    %v44 = vld [vmem:[%s2 + $0xc0] sm:$0xff]
    %v45 = vld [vmem:[%s2 + $0xc8] sm:$0xff]
    %v46 = vld [vmem:[%s2 + $0xd0] sm:$0xff]
    %v47 = vld [vmem:[%s2 + $0xd8] sm:$0xff]
    %v48 = vld [vmem:[%s2 + $0xe0] sm:$0xff]
    %v49 = vld [vmem:[%s2 + $0xe8] sm:$0xff]
    %v50 = vld [vmem:[%s2 + $0xf0] sm:$0xff]
    %v51 = vld [vmem:[%s2 + $0xf8] sm:$0xff]
    %v52 = vld [vmem:[%s2 + $0x100] sm:$0xff]
    %v53 = vld [vmem:[%s2 + $0x108] sm:$0xff]
    %v54 = vld [vmem:[%s2 + $0x110] sm:$0xff]
    %v55 = vld [vmem:[%s2 + $0x118] sm:$0xff]
    %v56 = vld [vmem:[%s2 + $0x120] sm:$0xff]
    %v57 = vld [vmem:[%s2 + $0x128] sm:$0xff]
    %v58 = vld [vmem:[%s2 + $0x130] sm:$0xff]
    %v59 = vld [vmem:[%s2 + $0x138] sm:$0xff]
    %v60 = vld [vmem:[%s2 + $0x140] sm:$0xff]
    %v61 = vld [vmem:[%s2 + $0x148] sm:$0xff]
    %v62 = vld [vmem:[%s2 + $0x150] sm:$0xff]
    %v63 = vld [vmem:[%s2 + $0x158] sm:$0xff]
    %v64 = vld [vmem:[%s2 + $0x160] sm:$0xff]
    %v65 = vld [vmem:[%s2 + $0x168] sm:$0xff]
    %v66 = vld [vmem:[%s2 + $0x170] sm:$0xff]
    %v67 = vld [vmem:[%s2 + $0x178] sm:$0xff]
    %v68 = vld [vmem:[%s2 + $0x180] sm:$0xff]
    %v69 = vld [vmem:[%s2 + $0x188] sm:$0xff]
    %v70 = vld [vmem:[%s2 + $0x190] sm:$0xff]
    %v71 = vld [vmem:[%s2 + $0x198] sm:$0xff]
    %v72 = vld [vmem:[%s2 + $0x1a0] sm:$0xff]
    %v73 = vld [vmem:[%s2 + $0x1a8] sm:$0xff]
    %v74 = vld [vmem:[%s2 + $0x1b0] sm:$0xff]
    %v75 = vld [vmem:[%s2 + $0x1b8] sm:$0xff]
    %v76 = vld [vmem:[%s2 + $0x1c0] sm:$0xff]
    %v77 = vld [vmem:[%s2 + $0x1c8] sm:$0xff]
    %v78 = vld [vmem:[%s2 + $0x1d0] sm:$0xff]
    %v79 = vld [vmem:[%s2 + $0x1d8] sm:$0xff]
    %v80 = vld [vmem:[%s2 + $0x1e0] sm:$0xff]
    %v81 = vld [vmem:[%s2 + $0x1e8] sm:$0xff]
    %v82 = vld [vmem:[%s2 + $0x1f0] sm:$0xff]
    %v83 = vld [vmem:[%s2 + $0x1f8] sm:$0xff]
    %v84 = vld [vmem:[%s3] sm:$0xff]
    %v85 = vld [vmem:[%s3 + $0x8] sm:$0xff]
    %v86 = vld [vmem:[%s3 + $0x10] sm:$0xff]
    %v87 = vld [vmem:[%s3 + $0x18] sm:$0xff]
    %v88 = vld [vmem:[%s3 + $0x20] sm:$0xff]
    %v89 = vld [vmem:[%s3 + $0x28] sm:$0xff]
    %v90 = vld [vmem:[%s3 + $0x30] sm:$0xff]
    %v91 = vld [vmem:[%s3 + $0x38] sm:$0xff]
    %v92 = vld [vmem:[%s3 + $0x40] sm:$0xff]
    %v93 = vld [vmem:[%s3 + $0x48] sm:$0xff]
    %v94 = vld [vmem:[%s3 + $0x50] sm:$0xff]
    %v95 = vld [vmem:[%s3 + $0x58] sm:$0xff]
    %v96 = vld [vmem:[%s3 + $0x60] sm:$0xff]
    %v97 = vld [vmem:[%s3 + $0x68] sm:$0xff]
    %v98 = vld [vmem:[%s3 + $0x70] sm:$0xff]
    %v99 = vld [vmem:[%s3 + $0x78] sm:$0xff]
    %v100 = vld [vmem:[%s3 + $0x80] sm:$0xff]
    %v101 = vld [vmem:[%s3 + $0x88] sm:$0xff]
    %v102 = vld [vmem:[%s3 + $0x90] sm:$0xff]
    %v103 = vld [vmem:[%s3 + $0x98] sm:$0xff]
    %v104 = vld [vmem:[%s3 + $0xa0] sm:$0xff]
    %v105 = vld [vmem:[%s3 + $0xa8] sm:$0xff]
    %v106 = vld [vmem:[%s3 + $0xb0] sm:$0xff]
    %v107 = vld [vmem:[%s3 + $0xb8] sm:$0xff]
    %v108 = vld [vmem:[%s3 + $0xc0] sm:$0xff]
    %v109 = vld [vmem:[%s3 + $0xc8] sm:$0xff]
    %v110 = vld [vmem:[%s3 + $0xd0] sm:$0xff]
    %v111 = vld [vmem:[%s3 + $0xd8] sm:$0xff]
    %v112 = vld [vmem:[%s3 + $0xe0] sm:$0xff]
    %v113 = vld [vmem:[%s3 + $0xe8] sm:$0xff]
    %v114 = vld [vmem:[%s3 + $0xf0] sm:$0xff]
    %v115 = vld [vmem:[%s3 + $0xf8] sm:$0xff]
    %v116 = vld [vmem:[%s3 + $0x100] sm:$0xff]
    %v117 = vld [vmem:[%s3 + $0x108] sm:$0xff]
    %v118 = vld [vmem:[%s3 + $0x110] sm:$0xff]
    %v119 = vld [vmem:[%s3 + $0x118] sm:$0xff]
    %v120 = vld [vmem:[%s3 + $0x120] sm:$0xff]
    %v121 = vld [vmem:[%s3 + $0x128] sm:$0xff]
    %v122 = vld [vmem:[%s3 + $0x130] sm:$0xff]
    %v123 = vld [vmem:[%s3 + $0x138] sm:$0xff]
    %v124 = vld [vmem:[%s3 + $0x140] sm:$0xff]
    %v125 = vld [vmem:[%s3 + $0x148] sm:$0xff]
    %v126 = vld [vmem:[%s3 + $0x150] sm:$0xff]
    %v127 = vld [vmem:[%s3 + $0x158] sm:$0xff]
    %v128 = vld [vmem:[%s3 + $0x160] sm:$0xff]
    %v129 = vld [vmem:[%s3 + $0x168] sm:$0xff]
    %v130 = vld [vmem:[%s3 + $0x170] sm:$0xff]
    %v131 = vld [vmem:[%s3 + $0x178] sm:$0xff]
    %v132 = vld [vmem:[%s3 + $0x180] sm:$0xff]
    %v133 = vld [vmem:[%s3 + $0x188] sm:$0xff]
    %v134 = vld [vmem:[%s3 + $0x190] sm:$0xff]
    %v135 = vld [vmem:[%s3 + $0x198] sm:$0xff]
    %v136 = vld [vmem:[%s3 + $0x1a0] sm:$0xff]
    %v137 = vld [vmem:[%s3 + $0x1a8] sm:$0xff]
    %v138 = vld [vmem:[%s3 + $0x1b0] sm:$0xff]
    %v139 = vld [vmem:[%s3 + $0x1b8] sm:$0xff]
    %v140 = vld [vmem:[%s3 + $0x1c0] sm:$0xff]
    %v141 = vld [vmem:[%s3 + $0x1c8] sm:$0xff]
    %v142 = vld [vmem:[%s3 + $0x1d0] sm:$0xff]
    %v143 = vld [vmem:[%s3 + $0x1d8] sm:$0xff]
    %v144 = vld [vmem:[%s3 + $0x1e0] sm:$0xff]
    %v145 = vld [vmem:[%s3 + $0x1e8] sm:$0xff]
    %v146 = vld [vmem:[%s3 + $0x1f0] sm:$0xff]
    %v147 = vld [vmem:[%s3 + $0x1f8] sm:$0xff]
    %v148 = vlaneseq
    %v149 = vand.u32 %v148, 127
    %v150 = vadd.s32 %v149, 128
    %v151 = vadd.s32 %v149, 256
    %v152 = vadd.s32 %v149, 384
    %vm153 = vcmp.lt.s32.totalorder %v149, 500
    %vm154 = vcmp.lt.s32.totalorder %v150, 500
    %vm155 = vcmp.lt.s32.totalorder %v151, 500
    %vm156 = vcmp.lt.s32.totalorder %v152, 500
    %v157 = vlaneseq
    %v158 = vshrl.u32 %v157, 7
    %v159 = vadd.s32 %v158, 8
    %v160 = vadd.s32 %v158, 16
    %v161 = vadd.s32 %v158, 24
    %v162 = vadd.s32 %v158, 32
    %v163 = vadd.s32 %v158, 40
    %v164 = vadd.s32 %v158, 48
    %v165 = vadd.s32 %v158, 56
    %v166 = vadd.s32 %v158, 64
    %v167 = vadd.s32 %v158, 72
    %v168 = vadd.s32 %v158, 80
    %v169 = vadd.s32 %v158, 88
    %v170 = vadd.s32 %v158, 96
    %v171 = vadd.s32 %v158, 104
    %v172 = vadd.s32 %v158, 112
    %v173 = vadd.s32 %v158, 120
    %v174 = vadd.s32 %v158, 128
    %v175 = vadd.s32 %v158, 136
    %v176 = vadd.s32 %v158, 144
    %v177 = vadd.s32 %v158, 152
    %v178 = vadd.s32 %v158, 160
    %v179 = vadd.s32 %v158, 168
    %v180 = vadd.s32 %v158, 176
    %v181 = vadd.s32 %v158, 184
    %v182 = vadd.s32 %v158, 192
    %v183 = vadd.s32 %v158, 200
    %v184 = vadd.s32 %v158, 208
    %v185 = vadd.s32 %v158, 216
    %v186 = vadd.s32 %v158, 224
    %v187 = vadd.s32 %v158, 232
    %v188 = vadd.s32 %v158, 240
    %v189 = vadd.s32 %v158, 248
    %v190 = vadd.s32 %v158, 256
    %v191 = vadd.s32 %v158, 264
    %v192 = vadd.s32 %v158, 272
    %v193 = vadd.s32 %v158, 280
    %v194 = vadd.s32 %v158, 288
    %v195 = vadd.s32 %v158, 296
    %v196 = vadd.s32 %v158, 304
    %v197 = vadd.s32 %v158, 312
    %v198 = vadd.s32 %v158, 320
    %v199 = vadd.s32 %v158, 328
    %v200 = vadd.s32 %v158, 336
    %v201 = vadd.s32 %v158, 344
    %v202 = vadd.s32 %v158, 352
    %v203 = vadd.s32 %v158, 360
    %v204 = vadd.s32 %v158, 368
    %v205 = vadd.s32 %v158, 376
    %v206 = vadd.s32 %v158, 384
    %v207 = vadd.s32 %v158, 392
    %v208 = vadd.s32 %v158, 400
    %v209 = vadd.s32 %v158, 408
    %v210 = vadd.s32 %v158, 416
    %v211 = vadd.s32 %v158, 424
    %v212 = vadd.s32 %v158, 432
    %v213 = vadd.s32 %v158, 440
    %v214 = vadd.s32 %v158, 448
    %v215 = vadd.s32 %v158, 456
    %v216 = vadd.s32 %v158, 464
    %v217 = vadd.s32 %v158, 472
    %v218 = vadd.s32 %v158, 480
    %v219 = vadd.s32 %v158, 488
    %v220 = vadd.s32 %v158, 496
    %v221 = vadd.s32 %v158, 504
    %vm222 = vcmp.lt.s32.totalorder %v158, 500
    %vm223 = vcmp.lt.s32.totalorder %v159, 500
    %vm224 = vcmp.lt.s32.totalorder %v160, 500
    %vm225 = vcmp.lt.s32.totalorder %v161, 500
    %vm226 = vcmp.lt.s32.totalorder %v162, 500
    %vm227 = vcmp.lt.s32.totalorder %v163, 500
    %vm228 = vcmp.lt.s32.totalorder %v164, 500
    %vm229 = vcmp.lt.s32.totalorder %v165, 500
    %vm230 = vcmp.lt.s32.totalorder %v166, 500
    %vm231 = vcmp.lt.s32.totalorder %v167, 500
    %vm232 = vcmp.lt.s32.totalorder %v168, 500
    %vm233 = vcmp.lt.s32.totalorder %v169, 500
    %vm234 = vcmp.lt.s32.totalorder %v170, 500
    %vm235 = vcmp.lt.s32.totalorder %v171, 500
    %vm236 = vcmp.lt.s32.totalorder %v172, 500
    %vm237 = vcmp.lt.s32.totalorder %v173, 500
    %vm238 = vcmp.lt.s32.totalorder %v174, 500
    %vm239 = vcmp.lt.s32.totalorder %v175, 500
    %vm240 = vcmp.lt.s32.totalorder %v176, 500
    %vm241 = vcmp.lt.s32.totalorder %v177, 500
    %vm242 = vcmp.lt.s32.totalorder %v178, 500
    %vm243 = vcmp.lt.s32.totalorder %v179, 500
    %vm244 = vcmp.lt.s32.totalorder %v180, 500
    %vm245 = vcmp.lt.s32.totalorder %v181, 500
    %vm246 = vcmp.lt.s32.totalorder %v182, 500
    %vm247 = vcmp.lt.s32.totalorder %v183, 500
    %vm248 = vcmp.lt.s32.totalorder %v184, 500
    %vm249 = vcmp.lt.s32.totalorder %v185, 500
    %vm250 = vcmp.lt.s32.totalorder %v186, 500
    %vm251 = vcmp.lt.s32.totalorder %v187, 500
    %vm252 = vcmp.lt.s32.totalorder %v188, 500
    %vm253 = vcmp.lt.s32.totalorder %v189, 500
    %vm254 = vcmp.lt.s32.totalorder %v190, 500
    %vm255 = vcmp.lt.s32.totalorder %v191, 500
    %vm256 = vcmp.lt.s32.totalorder %v192, 500
    %vm257 = vcmp.lt.s32.totalorder %v193, 500
    %vm258 = vcmp.lt.s32.totalorder %v194, 500
    %vm259 = vcmp.lt.s32.totalorder %v195, 500
    %vm260 = vcmp.lt.s32.totalorder %v196, 500
    %vm261 = vcmp.lt.s32.totalorder %v197, 500
    %vm262 = vcmp.lt.s32.totalorder %v198, 500
    %vm263 = vcmp.lt.s32.totalorder %v199, 500
    %vm264 = vcmp.lt.s32.totalorder %v200, 500
    %vm265 = vcmp.lt.s32.totalorder %v201, 500
    %vm266 = vcmp.lt.s32.totalorder %v202, 500
    %vm267 = vcmp.lt.s32.totalorder %v203, 500
    %vm268 = vcmp.lt.s32.totalorder %v204, 500
    %vm269 = vcmp.lt.s32.totalorder %v205, 500
    %vm270 = vcmp.lt.s32.totalorder %v206, 500
    %vm271 = vcmp.lt.s32.totalorder %v207, 500
    %vm272 = vcmp.lt.s32.totalorder %v208, 500
    %vm273 = vcmp.lt.s32.totalorder %v209, 500
    %vm274 = vcmp.lt.s32.totalorder %v210, 500
    %vm275 = vcmp.lt.s32.totalorder %v211, 500
    %vm276 = vcmp.lt.s32.totalorder %v212, 500
    %vm277 = vcmp.lt.s32.totalorder %v213, 500
    %vm278 = vcmp.lt.s32.totalorder %v214, 500
    %vm279 = vcmp.lt.s32.totalorder %v215, 500
    %vm280 = vcmp.lt.s32.totalorder %v216, 500
    %vm281 = vcmp.lt.s32.totalorder %v217, 500
    %vm282 = vcmp.lt.s32.totalorder %v218, 500
    %vm283 = vcmp.lt.s32.totalorder %v219, 500
    %vm284 = vcmp.lt.s32.totalorder %v220, 500
    %vm285 = vcmp.lt.s32.totalorder %v221, 500
    %vm286 = vcmp.ge.f32.partialorder %v19, 0.5
    %v287 = vsel %vm286, 1, 0
    %v288 = vlaneseq
    %v289 = vshrl.u32 %v288, 7
    %v290 = vsub.s32 0, %v289
    %v291 = vrot.slane %v287, %v290
    %v292 = vlaneseq
    %v293 = vshrl.u32 %v292, 7
    %v294 = vsub.s32 1, %v293
    %v295 = vrot.slane %v287, %v294
    %v296 = vlaneseq
    %v297 = vshrl.u32 %v296, 7
    %v298 = vsub.s32 2, %v297
    %v299 = vrot.slane %v287, %v298
    %v300 = vlaneseq
    %v301 = vshrl.u32 %v300, 7
    %v302 = vsub.s32 3, %v301
    %v303 = vrot.slane %v287, %v302
    %vm304 = vcmp.ne.s32.totalorder %v291, 0
    %vm305 = vcmp.ne.s32.totalorder %v295, 0
    %vm306 = vcmp.ne.s32.totalorder %v299, 0
    %vm307 = vcmp.ne.s32.totalorder %v303, 0
    %vm308 = vmand %vm153, %vm304
    %vm309 = vmand %vm154, %vm305
    %vm310 = vmand %vm155, %vm306
    %vm311 = vmand %vm156, %vm307
    %vm312 = vcmp.lt.f32.partialorder %v19, 0.5
    %v313 = vsel %vm312, 1, 0
    %v314 = vlaneseq
    %v315 = vshrl.u32 %v314, 7
    %v316 = vsub.s32 0, %v315
    %v317 = vrot.slane %v313, %v316
    %v318 = vlaneseq
    %v319 = vshrl.u32 %v318, 7
    %v320 = vsub.s32 1, %v319
    %v321 = vrot.slane %v313, %v320
    %v322 = vlaneseq
    %v323 = vshrl.u32 %v322, 7
    %v324 = vsub.s32 2, %v323
    %v325 = vrot.slane %v313, %v324
    %v326 = vlaneseq
    %v327 = vshrl.u32 %v326, 7
    %v328 = vsub.s32 3, %v327
    %v329 = vrot.slane %v313, %v328
    %vm330 = vcmp.ne.s32.totalorder %v317, 0
    %vm331 = vcmp.ne.s32.totalorder %v321, 0
    %vm332 = vcmp.ne.s32.totalorder %v325, 0
    %vm333 = vcmp.ne.s32.totalorder %v329, 0
    %vm334 = vmand %vm153, %vm330
    %vm335 = vmand %vm154, %vm331
    %vm336 = vmand %vm155, %vm332
    %vm337 = vmand %vm156, %vm333
    %vm338 = vcmp.ge.f32.partialorder %v84, 0.5
    %vm339 = vcmp.ge.f32.partialorder %v85, 0.5
    %vm340 = vcmp.ge.f32.partialorder %v86, 0.5
    %vm341 = vcmp.ge.f32.partialorder %v87, 0.5
    %vm342 = vcmp.ge.f32.partialorder %v88, 0.5
    %vm343 = vcmp.ge.f32.partialorder %v89, 0.5
    %vm344 = vcmp.ge.f32.partialorder %v90, 0.5
    %vm345 = vcmp.ge.f32.partialorder %v91, 0.5
    %vm346 = vcmp.ge.f32.partialorder %v92, 0.5
    %vm347 = vcmp.ge.f32.partialorder %v93, 0.5
    %vm348 = vcmp.ge.f32.partialorder %v94, 0.5
    %vm349 = vcmp.ge.f32.partialorder %v95, 0.5
    %vm350 = vcmp.ge.f32.partialorder %v96, 0.5
    %vm351 = vcmp.ge.f32.partialorder %v97, 0.5
    %vm352 = vcmp.ge.f32.partialorder %v98, 0.5
    %vm353 = vcmp.ge.f32.partialorder %v99, 0.5
    %vm354 = vcmp.ge.f32.partialorder %v100, 0.5
    %vm355 = vcmp.ge.f32.partialorder %v101, 0.5
    %vm356 = vcmp.ge.f32.partialorder %v102, 0.5
    %vm357 = vcmp.ge.f32.partialorder %v103, 0.5
    %vm358 = vcmp.ge.f32.partialorder %v104, 0.5
    %vm359 = vcmp.ge.f32.partialorder %v105, 0.5
    %vm360 = vcmp.ge.f32.partialorder %v106, 0.5
    %vm361 = vcmp.ge.f32.partialorder %v107, 0.5
    %vm362 = vcmp.ge.f32.partialorder %v108, 0.5
    %vm363 = vcmp.ge.f32.partialorder %v109, 0.5
    %vm364 = vcmp.ge.f32.partialorder %v110, 0.5
    %vm365 = vcmp.ge.f32.partialorder %v111, 0.5
    %vm366 = vcmp.ge.f32.partialorder %v112, 0.5
    %vm367 = vcmp.ge.f32.partialorder %v113, 0.5
    %vm368 = vcmp.ge.f32.partialorder %v114, 0.5
    %vm369 = vcmp.ge.f32.partialorder %v115, 0.5
    %vm370 = vcmp.ge.f32.partialorder %v116, 0.5
    %vm371 = vcmp.ge.f32.partialorder %v117, 0.5
    %vm372 = vcmp.ge.f32.partialorder %v118, 0.5
    %vm373 = vcmp.ge.f32.partialorder %v119, 0.5
    %vm374 = vcmp.ge.f32.partialorder %v120, 0.5
    %vm375 = vcmp.ge.f32.partialorder %v121, 0.5
    %vm376 = vcmp.ge.f32.partialorder %v122, 0.5
    %vm377 = vcmp.ge.f32.partialorder %v123, 0.5
    %vm378 = vcmp.ge.f32.partialorder %v124, 0.5
    %vm379 = vcmp.ge.f32.partialorder %v125, 0.5
    %vm380 = vcmp.ge.f32.partialorder %v126, 0.5
    %vm381 = vcmp.ge.f32.partialorder %v127, 0.5
    %vm382 = vcmp.ge.f32.partialorder %v128, 0.5
    %vm383 = vcmp.ge.f32.partialorder %v129, 0.5
    %vm384 = vcmp.ge.f32.partialorder %v130, 0.5
    %vm385 = vcmp.ge.f32.partialorder %v131, 0.5
    %vm386 = vcmp.ge.f32.partialorder %v132, 0.5
    %vm387 = vcmp.ge.f32.partialorder %v133, 0.5
    %vm388 = vcmp.ge.f32.partialorder %v134, 0.5
    %vm389 = vcmp.ge.f32.partialorder %v135, 0.5
    %vm390 = vcmp.ge.f32.partialorder %v136, 0.5
    %vm391 = vcmp.ge.f32.partialorder %v137, 0.5
    %vm392 = vcmp.ge.f32.partialorder %v138, 0.5
    %vm393 = vcmp.ge.f32.partialorder %v139, 0.5
    %vm394 = vcmp.ge.f32.partialorder %v140, 0.5
    %vm395 = vcmp.ge.f32.partialorder %v141, 0.5
    %vm396 = vcmp.ge.f32.partialorder %v142, 0.5
    %vm397 = vcmp.ge.f32.partialorder %v143, 0.5
    %vm398 = vcmp.ge.f32.partialorder %v144, 0.5
    %vm399 = vcmp.ge.f32.partialorder %v145, 0.5
    %vm400 = vcmp.ge.f32.partialorder %v146, 0.5
    %vm401 = vcmp.ge.f32.partialorder %v147, 0.5
    %vm402 = vmand %vm222, %vm338
    %vm403 = vmand %vm223, %vm339
    %vm404 = vmand %vm224, %vm340
    %vm405 = vmand %vm225, %vm341
    %vm406 = vmand %vm226, %vm342
    %vm407 = vmand %vm227, %vm343
    %vm408 = vmand %vm228, %vm344
    %vm409 = vmand %vm229, %vm345
    %vm410 = vmand %vm230, %vm346
    %vm411 = vmand %vm231, %vm347
    %vm412 = vmand %vm232, %vm348
    %vm413 = vmand %vm233, %vm349
    %vm414 = vmand %vm234, %vm350
    %vm415 = vmand %vm235, %vm351
    %vm416 = vmand %vm236, %vm352
    %vm417 = vmand %vm237, %vm353
    %vm418 = vmand %vm238, %vm354
    %vm419 = vmand %vm239, %vm355
    %vm420 = vmand %vm240, %vm356
    %vm421 = vmand %vm241, %vm357
    %vm422 = vmand %vm242, %vm358
    %vm423 = vmand %vm243, %vm359
    %vm424 = vmand %vm244, %vm360
    %vm425 = vmand %vm245, %vm361
    %vm426 = vmand %vm246, %vm362
    %vm427 = vmand %vm247, %vm363
    %vm428 = vmand %vm248, %vm364
    %vm429 = vmand %vm249, %vm365
    %vm430 = vmand %vm250, %vm366
    %vm431 = vmand %vm251, %vm367
    %vm432 = vmand %vm252, %vm368
    %vm433 = vmand %vm253, %vm369
    %vm434 = vmand %vm254, %vm370
    %vm435 = vmand %vm255, %vm371
    %vm436 = vmand %vm256, %vm372
    %vm437 = vmand %vm257, %vm373
    %vm438 = vmand %vm258, %vm374
    %vm439 = vmand %vm259, %vm375
    %vm440 = vmand %vm260, %vm376
    %vm441 = vmand %vm261, %vm377
    %vm442 = vmand %vm262, %vm378
    %vm443 = vmand %vm263, %vm379
    %vm444 = vmand %vm264, %vm380
    %vm445 = vmand %vm265, %vm381
    %vm446 = vmand %vm266, %vm382
    %vm447 = vmand %vm267, %vm383
    %vm448 = vmand %vm268, %vm384
    %vm449 = vmand %vm269, %vm385
    %vm450 = vmand %vm270, %vm386
    %vm451 = vmand %vm271, %vm387
    %vm452 = vmand %vm272, %vm388
    %vm453 = vmand %vm273, %vm389
    %vm454 = vmand %vm274, %vm390
    %vm455 = vmand %vm275, %vm391
    %vm456 = vmand %vm276, %vm392
    %vm457 = vmand %vm277, %vm393
    %vm458 = vmand %vm278, %vm394
    %vm459 = vmand %vm279, %vm395
    %vm460 = vmand %vm280, %vm396
    %vm461 = vmand %vm281, %vm397
    %vm462 = vmand %vm282, %vm398
    %vm463 = vmand %vm283, %vm399
    %vm464 = vmand %vm284, %vm400
    %vm465 = vmand %vm285, %vm401
    %v466 = vsel %vm308, 1, 0
    %v467 = vsel %vm309, 1, 0
    %v468 = vsel %vm310, 1, 0
    %v469 = vsel %vm311, 1, 0
    %v470 = vcvt.s32.f32 %v466
    %v471 = vcvt.s32.f32 %v467
    %v472 = vcvt.s32.f32 %v468
    %v473 = vcvt.s32.f32 %v469
    %vm474 = vcmask 1040384
    %v475 = vsel %vm474, %v470, 0.0
    %v476 = vsel %vm474, %v471, 0.0
    %v477 = vadd.f32 %v475, %v476
    %v478 = vsel %vm474, %v472, 0.0
    %v479 = vadd.f32 %v477, %v478
    %v480 = vsel %vm474, %v473, 0.0
    %v481 = vadd.f32 %v479, %v480
    %482 = vadd.xlane.f32.xlu0 %v481
    %v483 = vpop.xlane.xlu0 %482
    %v484 = vrot.slane %v483, 4
    %v485 = vadd.f32 %v483, %v484
    %v486 = vrot.slane %v485, 2
    %v487 = vadd.f32 %v485, %v486
    %v488 = vrot.slane %v487, 1
    %v489 = vadd.f32 %v487, %v488
    %s490 = vtos %v489
    %v491 = vsel %vm334, 1, 0
    %v492 = vsel %vm335, 1, 0
    %v493 = vsel %vm336, 1, 0
    %v494 = vsel %vm337, 1, 0
    %v495 = vcvt.s32.f32 %v491
    %v496 = vcvt.s32.f32 %v492
    %v497 = vcvt.s32.f32 %v493
    %v498 = vcvt.s32.f32 %v494
    %v499 = vsel %vm474, %v495, 0.0
    %v500 = vsel %vm474, %v496, 0.0
    %v501 = vadd.f32 %v499, %v500
    %v502 = vsel %vm474, %v497, 0.0
    %v503 = vadd.f32 %v501, %v502
    %v504 = vsel %vm474, %v498, 0.0
    %v505 = vadd.f32 %v503, %v504
    %506 = vadd.xlane.f32.xlu0 %v505
    %v507 = vpop.xlane.xlu0 %506
    %v508 = vrot.slane %v507, 4
    %v509 = vadd.f32 %v507, %v508
    %v510 = vrot.slane %v509, 2
    %v511 = vadd.f32 %v509, %v510
    %v512 = vrot.slane %v511, 1
    %v513 = vadd.f32 %v511, %v512
    %s514 = vtos %v513
    %s515 = scvt.f32.s32.to.zero.pseudo %s490
    %s516 = scvt.f32.s32.to.zero.pseudo %s514
    %v517 = vlog2.pop %v18
    %v518 = vmul.f32 %v517, 0.6931472
    %v519 = vmax.f32 %v518, -100.0
    %v520 = vsub.f32 1.0, %v18
    %v521 = vlog2.pop %v520
    %v522 = vmul.f32 %v521, 0.6931472
    %v523 = vmax.f32 %v522, -100.0
    %v524 = vmul.f32 %v19, %v519
    %v525 = vsub.f32 1.0, %v19
    %v526 = vmul.f32 %v525, %v523
    %v527 = vadd.f32 %v524, %v526
    %v528 = vsub.f32 0.0, %v527
    %v530 = vlaneseq
    %v531 = vshrl.u32 %v530, 7
    %v532 = vsub.s32 0, %v531
    %v533 = vrot.slane %v528, %v532
    %v534 = vlaneseq
    %v535 = vshrl.u32 %v534, 7
    %v536 = vsub.s32 1, %v535
    %v537 = vrot.slane %v528, %v536
    %v538 = vlaneseq
    %v539 = vshrl.u32 %v538, 7
    %v540 = vsub.s32 2, %v539
    %v541 = vrot.slane %v528, %v540
    %v542 = vlaneseq
    %v543 = vshrl.u32 %v542, 7
    %v544 = vsub.s32 3, %v543
    %v545 = vrot.slane %v528, %v544
    %v550 = vsel %vm334, %v533, 0.0
    %v551 = vsel %vm335, %v537, 0.0
    %v552 = vsel %vm336, %v541, 0.0
    %v553 = vsel %vm337, %v545, 0.0
    %v554 = vsel %vm474, %v550, 0.0
    %v555 = vsel %vm474, %v551, 0.0
    %v556 = vadd.f32 %v554, %v555
    %v557 = vsel %vm474, %v552, 0.0
    %v558 = vadd.f32 %v556, %v557
    %v559 = vsel %vm474, %v553, 0.0
    %v560 = vadd.f32 %v558, %v559
    %561 = vadd.xlane.f32.xlu0 %v560
    %v562 = vpop.xlane.xlu0 %561
    %v563 = vrot.slane %v562, 4
    %v564 = vadd.f32 %v562, %v563
    %v565 = vrot.slane %v564, 2
    %v566 = vadd.f32 %v564, %v565
    %v567 = vrot.slane %v566, 1
    %v568 = vadd.f32 %v566, %v567
    %s569 = vtos %v568
    %s570 = smax.f32 %s514, 1.0
    %v571 = vstv %s570
    %v572 = vrcp.pop %v571
    %s573 = vtos %v572
    %s574 = smul.f32 %s569, %s573
    %s575 = smul.f32 %s490, 0.5
    %s576 = scvt.f32.s32.to.zero.pseudo %s575
    %p577 = scmp.gt.s32.totalorder %s576, 1
    %s578 = scalar_select %p577, %s576, 1
    %p579 = scmp.lt.s32.totalorder %s578, %s515
    %s580 = scalar_select %p579, %s578, %s515
    %s581 = scvt.s32.f32 %s580
    %v583 = vlaneseq
    %v584 = vshrl.u32 %v583, 7
    %v585 = vsub.s32 0, %v584
    %v586 = vrot.slane %v18, %v585
    %v587 = vlaneseq
    %v588 = vshrl.u32 %v587, 7
    %v589 = vsub.s32 1, %v588
    %v590 = vrot.slane %v18, %v589
    %v591 = vlaneseq
    %v592 = vshrl.u32 %v591, 7
    %v593 = vsub.s32 2, %v592
    %v594 = vrot.slane %v18, %v593
    %v595 = vlaneseq
    %v596 = vshrl.u32 %v595, 7
    %v597 = vsub.s32 3, %v596
    %v598 = vrot.slane %v18, %v597
    %v603 = vsel %vm308, %v586, 3e+38
    %v604 = vsel %vm309, %v590, 3e+38
    %v605 = vsel %vm310, %v594, 3e+38
    %v606 = vsel %vm311, %v598, 3e+38
    %v607 = vsel %vm402, %v20, 3e+38
    %v608 = vsel %vm403, %v21, 3e+38
    %v609 = vsel %vm404, %v22, 3e+38
    %v610 = vsel %vm405, %v23, 3e+38
    %v611 = vsel %vm406, %v24, 3e+38
    %v612 = vsel %vm407, %v25, 3e+38
    %v613 = vsel %vm408, %v26, 3e+38
    %v614 = vsel %vm409, %v27, 3e+38
    %v615 = vsel %vm410, %v28, 3e+38
    %v616 = vsel %vm411, %v29, 3e+38
    %v617 = vsel %vm412, %v30, 3e+38
    %v618 = vsel %vm413, %v31, 3e+38
    %v619 = vsel %vm414, %v32, 3e+38
    %v620 = vsel %vm415, %v33, 3e+38
    %v621 = vsel %vm416, %v34, 3e+38
    %v622 = vsel %vm417, %v35, 3e+38
    %v623 = vsel %vm418, %v36, 3e+38
    %v624 = vsel %vm419, %v37, 3e+38
    %v625 = vsel %vm420, %v38, 3e+38
    %v626 = vsel %vm421, %v39, 3e+38
    %v627 = vsel %vm422, %v40, 3e+38
    %v628 = vsel %vm423, %v41, 3e+38
    %v629 = vsel %vm424, %v42, 3e+38
    %v630 = vsel %vm425, %v43, 3e+38
    %v631 = vsel %vm426, %v44, 3e+38
    %v632 = vsel %vm427, %v45, 3e+38
    %v633 = vsel %vm428, %v46, 3e+38
    %v634 = vsel %vm429, %v47, 3e+38
    %v635 = vsel %vm430, %v48, 3e+38
    %v636 = vsel %vm431, %v49, 3e+38
    %v637 = vsel %vm432, %v50, 3e+38
    %v638 = vsel %vm433, %v51, 3e+38
    %v639 = vsel %vm434, %v52, 3e+38
    %v640 = vsel %vm435, %v53, 3e+38
    %v641 = vsel %vm436, %v54, 3e+38
    %v642 = vsel %vm437, %v55, 3e+38
    %v643 = vsel %vm438, %v56, 3e+38
    %v644 = vsel %vm439, %v57, 3e+38
    %v645 = vsel %vm440, %v58, 3e+38
    %v646 = vsel %vm441, %v59, 3e+38
    %v647 = vsel %vm442, %v60, 3e+38
    %v648 = vsel %vm443, %v61, 3e+38
    %v649 = vsel %vm444, %v62, 3e+38
    %v650 = vsel %vm445, %v63, 3e+38
    %v651 = vsel %vm446, %v64, 3e+38
    %v652 = vsel %vm447, %v65, 3e+38
    %v653 = vsel %vm448, %v66, 3e+38
    %v654 = vsel %vm449, %v67, 3e+38
    %v655 = vsel %vm450, %v68, 3e+38
    %v656 = vsel %vm451, %v69, 3e+38
    %v657 = vsel %vm452, %v70, 3e+38
    %v658 = vsel %vm453, %v71, 3e+38
    %v659 = vsel %vm454, %v72, 3e+38
    %v660 = vsel %vm455, %v73, 3e+38
    %v661 = vsel %vm456, %v74, 3e+38
    %v662 = vsel %vm457, %v75, 3e+38
    %v663 = vsel %vm458, %v76, 3e+38
    %v664 = vsel %vm459, %v77, 3e+38
    %v665 = vsel %vm460, %v78, 3e+38
    %v666 = vsel %vm461, %v79, 3e+38
    %v667 = vsel %vm462, %v80, 3e+38
    %v668 = vsel %vm463, %v81, 3e+38
    %v669 = vsel %vm464, %v82, 3e+38
    %v670 = vsel %vm465, %v83, 3e+38
    %672 = vset.pattern.permute.xlu0 0
    %673 = vperm.xlu0 %672, %v607
    %v674 = vpop.permute.xlu0 %673
    %677 = vset.pattern.permute.xlu0 0
    %678 = vperm.xlu0 %677, %v608
    %v679 = vpop.permute.xlu0 %678
    %682 = vset.pattern.permute.xlu0 0
    %683 = vperm.xlu0 %682, %v609
    %v684 = vpop.permute.xlu0 %683
    %687 = vset.pattern.permute.xlu0 0
    %688 = vperm.xlu0 %687, %v610
    %v689 = vpop.permute.xlu0 %688
    %692 = vset.pattern.permute.xlu0 0
    %693 = vperm.xlu0 %692, %v611
    %v694 = vpop.permute.xlu0 %693
    %697 = vset.pattern.permute.xlu0 0
    %698 = vperm.xlu0 %697, %v612
    %v699 = vpop.permute.xlu0 %698
    %702 = vset.pattern.permute.xlu0 0
    %703 = vperm.xlu0 %702, %v613
    %v704 = vpop.permute.xlu0 %703
    %707 = vset.pattern.permute.xlu0 0
    %708 = vperm.xlu0 %707, %v614
    %v709 = vpop.permute.xlu0 %708
    %712 = vset.pattern.permute.xlu0 0
    %713 = vperm.xlu0 %712, %v615
    %v714 = vpop.permute.xlu0 %713
    %717 = vset.pattern.permute.xlu0 0
    %718 = vperm.xlu0 %717, %v616
    %v719 = vpop.permute.xlu0 %718
    %722 = vset.pattern.permute.xlu0 0
    %723 = vperm.xlu0 %722, %v617
    %v724 = vpop.permute.xlu0 %723
    %727 = vset.pattern.permute.xlu0 0
    %728 = vperm.xlu0 %727, %v618
    %v729 = vpop.permute.xlu0 %728
    %732 = vset.pattern.permute.xlu0 0
    %733 = vperm.xlu0 %732, %v619
    %v734 = vpop.permute.xlu0 %733
    %737 = vset.pattern.permute.xlu0 0
    %738 = vperm.xlu0 %737, %v620
    %v739 = vpop.permute.xlu0 %738
    %742 = vset.pattern.permute.xlu0 0
    %743 = vperm.xlu0 %742, %v621
    %v744 = vpop.permute.xlu0 %743
    %747 = vset.pattern.permute.xlu0 0
    %748 = vperm.xlu0 %747, %v622
    %v749 = vpop.permute.xlu0 %748
    %752 = vset.pattern.permute.xlu0 0
    %753 = vperm.xlu0 %752, %v623
    %v754 = vpop.permute.xlu0 %753
    %757 = vset.pattern.permute.xlu0 0
    %758 = vperm.xlu0 %757, %v624
    %v759 = vpop.permute.xlu0 %758
    %762 = vset.pattern.permute.xlu0 0
    %763 = vperm.xlu0 %762, %v625
    %v764 = vpop.permute.xlu0 %763
    %767 = vset.pattern.permute.xlu0 0
    %768 = vperm.xlu0 %767, %v626
    %v769 = vpop.permute.xlu0 %768
    %772 = vset.pattern.permute.xlu0 0
    %773 = vperm.xlu0 %772, %v627
    %v774 = vpop.permute.xlu0 %773
    %777 = vset.pattern.permute.xlu0 0
    %778 = vperm.xlu0 %777, %v628
    %v779 = vpop.permute.xlu0 %778
    %782 = vset.pattern.permute.xlu0 0
    %783 = vperm.xlu0 %782, %v629
    %v784 = vpop.permute.xlu0 %783
    %787 = vset.pattern.permute.xlu0 0
    %788 = vperm.xlu0 %787, %v630
    %v789 = vpop.permute.xlu0 %788
    %792 = vset.pattern.permute.xlu0 0
    %793 = vperm.xlu0 %792, %v631
    %v794 = vpop.permute.xlu0 %793
    %797 = vset.pattern.permute.xlu0 0
    %798 = vperm.xlu0 %797, %v632
    %v799 = vpop.permute.xlu0 %798
    %802 = vset.pattern.permute.xlu0 0
    %803 = vperm.xlu0 %802, %v633
    %v804 = vpop.permute.xlu0 %803
    %807 = vset.pattern.permute.xlu0 0
    %808 = vperm.xlu0 %807, %v634
    %v809 = vpop.permute.xlu0 %808
    %812 = vset.pattern.permute.xlu0 0
    %813 = vperm.xlu0 %812, %v635
    %v814 = vpop.permute.xlu0 %813
    %817 = vset.pattern.permute.xlu0 0
    %818 = vperm.xlu0 %817, %v636
    %v819 = vpop.permute.xlu0 %818
    %822 = vset.pattern.permute.xlu0 0
    %823 = vperm.xlu0 %822, %v637
    %v824 = vpop.permute.xlu0 %823
    %827 = vset.pattern.permute.xlu0 0
    %828 = vperm.xlu0 %827, %v638
    %v829 = vpop.permute.xlu0 %828
    %832 = vset.pattern.permute.xlu0 0
    %833 = vperm.xlu0 %832, %v639
    %v834 = vpop.permute.xlu0 %833
    %837 = vset.pattern.permute.xlu0 0
    %838 = vperm.xlu0 %837, %v640
    %v839 = vpop.permute.xlu0 %838
    %842 = vset.pattern.permute.xlu0 0
    %843 = vperm.xlu0 %842, %v641
    %v844 = vpop.permute.xlu0 %843
    %847 = vset.pattern.permute.xlu0 0
    %848 = vperm.xlu0 %847, %v642
    %v849 = vpop.permute.xlu0 %848
    %852 = vset.pattern.permute.xlu0 0
    %853 = vperm.xlu0 %852, %v643
    %v854 = vpop.permute.xlu0 %853
    %857 = vset.pattern.permute.xlu0 0
    %858 = vperm.xlu0 %857, %v644
    %v859 = vpop.permute.xlu0 %858
    %862 = vset.pattern.permute.xlu0 0
    %863 = vperm.xlu0 %862, %v645
    %v864 = vpop.permute.xlu0 %863
    %867 = vset.pattern.permute.xlu0 0
    %868 = vperm.xlu0 %867, %v646
    %v869 = vpop.permute.xlu0 %868
    %872 = vset.pattern.permute.xlu0 0
    %873 = vperm.xlu0 %872, %v647
    %v874 = vpop.permute.xlu0 %873
    %877 = vset.pattern.permute.xlu0 0
    %878 = vperm.xlu0 %877, %v648
    %v879 = vpop.permute.xlu0 %878
    %882 = vset.pattern.permute.xlu0 0
    %883 = vperm.xlu0 %882, %v649
    %v884 = vpop.permute.xlu0 %883
    %887 = vset.pattern.permute.xlu0 0
    %888 = vperm.xlu0 %887, %v650
    %v889 = vpop.permute.xlu0 %888
    %892 = vset.pattern.permute.xlu0 0
    %893 = vperm.xlu0 %892, %v651
    %v894 = vpop.permute.xlu0 %893
    %897 = vset.pattern.permute.xlu0 0
    %898 = vperm.xlu0 %897, %v652
    %v899 = vpop.permute.xlu0 %898
    %902 = vset.pattern.permute.xlu0 0
    %903 = vperm.xlu0 %902, %v653
    %v904 = vpop.permute.xlu0 %903
    %907 = vset.pattern.permute.xlu0 0
    %908 = vperm.xlu0 %907, %v654
    %v909 = vpop.permute.xlu0 %908
    %912 = vset.pattern.permute.xlu0 0
    %913 = vperm.xlu0 %912, %v655
    %v914 = vpop.permute.xlu0 %913
    %917 = vset.pattern.permute.xlu0 0
    %918 = vperm.xlu0 %917, %v656
    %v919 = vpop.permute.xlu0 %918
    %922 = vset.pattern.permute.xlu0 0
    %923 = vperm.xlu0 %922, %v657
    %v924 = vpop.permute.xlu0 %923
    %927 = vset.pattern.permute.xlu0 0
    %928 = vperm.xlu0 %927, %v658
    %v929 = vpop.permute.xlu0 %928
    %932 = vset.pattern.permute.xlu0 0
    %933 = vperm.xlu0 %932, %v659
    %v934 = vpop.permute.xlu0 %933
    %937 = vset.pattern.permute.xlu0 0
    %938 = vperm.xlu0 %937, %v660
    %v939 = vpop.permute.xlu0 %938
    %942 = vset.pattern.permute.xlu0 0
    %943 = vperm.xlu0 %942, %v661
    %v944 = vpop.permute.xlu0 %943
    %947 = vset.pattern.permute.xlu0 0
    %948 = vperm.xlu0 %947, %v662
    %v949 = vpop.permute.xlu0 %948
    %952 = vset.pattern.permute.xlu0 0
    %953 = vperm.xlu0 %952, %v663
    %v954 = vpop.permute.xlu0 %953
    %957 = vset.pattern.permute.xlu0 0
    %958 = vperm.xlu0 %957, %v664
    %v959 = vpop.permute.xlu0 %958
    %962 = vset.pattern.permute.xlu0 0
    %963 = vperm.xlu0 %962, %v665
    %v964 = vpop.permute.xlu0 %963
    %967 = vset.pattern.permute.xlu0 0
    %968 = vperm.xlu0 %967, %v666
    %v969 = vpop.permute.xlu0 %968
    %972 = vset.pattern.permute.xlu0 0
    %973 = vperm.xlu0 %972, %v667
    %v974 = vpop.permute.xlu0 %973
    %977 = vset.pattern.permute.xlu0 0
    %978 = vperm.xlu0 %977, %v668
    %v979 = vpop.permute.xlu0 %978
    %982 = vset.pattern.permute.xlu0 0
    %983 = vperm.xlu0 %982, %v669
    %v984 = vpop.permute.xlu0 %983
    %987 = vset.pattern.permute.xlu0 0
    %988 = vperm.xlu0 %987, %v670
    %v989 = vpop.permute.xlu0 %988
    %v991 = vlaneseq
    %v992 = vshrl.u32 %v991, 7
    %v993 = vsub.s32 0, %v992
    %v994 = vrot.slane %v603, %v993
    %v995 = vlaneseq
    %v996 = vshrl.u32 %v995, 7
    %v997 = vsub.s32 0, %v996
    %v998 = vrot.slane %v604, %v997
    %v999 = vlaneseq
    %v1000 = vshrl.u32 %v999, 7
    %v1001 = vsub.s32 0, %v1000
    %v1002 = vrot.slane %v605, %v1001
    %v1003 = vlaneseq
    %v1004 = vshrl.u32 %v1003, 7
    %v1005 = vsub.s32 0, %v1004
    %v1006 = vrot.slane %v606, %v1005
    %vm1007 = vcmp.lt.f32.partialorder %v674, %v994
    %vm1008 = vcmp.lt.f32.partialorder %v674, %v998
    %vm1009 = vcmp.lt.f32.partialorder %v674, %v1002
    %vm1010 = vcmp.lt.f32.partialorder %v674, %v1006
    %vm1011 = vcmp.lt.f32.partialorder %v679, %v994
    %vm1012 = vcmp.lt.f32.partialorder %v679, %v998
    %vm1013 = vcmp.lt.f32.partialorder %v679, %v1002
    %vm1014 = vcmp.lt.f32.partialorder %v679, %v1006
    %vm1015 = vcmp.lt.f32.partialorder %v684, %v994
    %vm1016 = vcmp.lt.f32.partialorder %v684, %v998
    %vm1017 = vcmp.lt.f32.partialorder %v684, %v1002
    %vm1018 = vcmp.lt.f32.partialorder %v684, %v1006
    %vm1019 = vcmp.lt.f32.partialorder %v689, %v994
    %vm1020 = vcmp.lt.f32.partialorder %v689, %v998
    %vm1021 = vcmp.lt.f32.partialorder %v689, %v1002
    %vm1022 = vcmp.lt.f32.partialorder %v689, %v1006
    %vm1023 = vcmp.lt.f32.partialorder %v694, %v994
    %vm1024 = vcmp.lt.f32.partialorder %v694, %v998
    %vm1025 = vcmp.lt.f32.partialorder %v694, %v1002
    %vm1026 = vcmp.lt.f32.partialorder %v694, %v1006
    %vm1027 = vcmp.lt.f32.partialorder %v699, %v994
    %vm1028 = vcmp.lt.f32.partialorder %v699, %v998
    %vm1029 = vcmp.lt.f32.partialorder %v699, %v1002
    %vm1030 = vcmp.lt.f32.partialorder %v699, %v1006
    %vm1031 = vcmp.lt.f32.partialorder %v704, %v994
    %vm1032 = vcmp.lt.f32.partialorder %v704, %v998
    %vm1033 = vcmp.lt.f32.partialorder %v704, %v1002
    %vm1034 = vcmp.lt.f32.partialorder %v704, %v1006
    %vm1035 = vcmp.lt.f32.partialorder %v709, %v994
    %vm1036 = vcmp.lt.f32.partialorder %v709, %v998
    %vm1037 = vcmp.lt.f32.partialorder %v709, %v1002
    %vm1038 = vcmp.lt.f32.partialorder %v709, %v1006
    %vm1039 = vcmp.lt.f32.partialorder %v714, %v994
    %vm1040 = vcmp.lt.f32.partialorder %v714, %v998
    %vm1041 = vcmp.lt.f32.partialorder %v714, %v1002
    %vm1042 = vcmp.lt.f32.partialorder %v714, %v1006
    %vm1043 = vcmp.lt.f32.partialorder %v719, %v994
    %vm1044 = vcmp.lt.f32.partialorder %v719, %v998
    %vm1045 = vcmp.lt.f32.partialorder %v719, %v1002
    %vm1046 = vcmp.lt.f32.partialorder %v719, %v1006
    %vm1047 = vcmp.lt.f32.partialorder %v724, %v994
    %vm1048 = vcmp.lt.f32.partialorder %v724, %v998
    %vm1049 = vcmp.lt.f32.partialorder %v724, %v1002
    %vm1050 = vcmp.lt.f32.partialorder %v724, %v1006
    %vm1051 = vcmp.lt.f32.partialorder %v729, %v994
    %vm1052 = vcmp.lt.f32.partialorder %v729, %v998
    %vm1053 = vcmp.lt.f32.partialorder %v729, %v1002
    %vm1054 = vcmp.lt.f32.partialorder %v729, %v1006
    %vm1055 = vcmp.lt.f32.partialorder %v734, %v994
    %vm1056 = vcmp.lt.f32.partialorder %v734, %v998
    %vm1057 = vcmp.lt.f32.partialorder %v734, %v1002
    %vm1058 = vcmp.lt.f32.partialorder %v734, %v1006
    %vm1059 = vcmp.lt.f32.partialorder %v739, %v994
    %vm1060 = vcmp.lt.f32.partialorder %v739, %v998
    %vm1061 = vcmp.lt.f32.partialorder %v739, %v1002
    %vm1062 = vcmp.lt.f32.partialorder %v739, %v1006
    %vm1063 = vcmp.lt.f32.partialorder %v744, %v994
    %vm1064 = vcmp.lt.f32.partialorder %v744, %v998
    %vm1065 = vcmp.lt.f32.partialorder %v744, %v1002
    %vm1066 = vcmp.lt.f32.partialorder %v744, %v1006
    %vm1067 = vcmp.lt.f32.partialorder %v749, %v994
    %vm1068 = vcmp.lt.f32.partialorder %v749, %v998
    %vm1069 = vcmp.lt.f32.partialorder %v749, %v1002
    %vm1070 = vcmp.lt.f32.partialorder %v749, %v1006
    %vm1071 = vcmp.lt.f32.partialorder %v754, %v994
    %vm1072 = vcmp.lt.f32.partialorder %v754, %v998
    %vm1073 = vcmp.lt.f32.partialorder %v754, %v1002
    %vm1074 = vcmp.lt.f32.partialorder %v754, %v1006
    %vm1075 = vcmp.lt.f32.partialorder %v759, %v994
    %vm1076 = vcmp.lt.f32.partialorder %v759, %v998
    %vm1077 = vcmp.lt.f32.partialorder %v759, %v1002
    %vm1078 = vcmp.lt.f32.partialorder %v759, %v1006
    %vm1079 = vcmp.lt.f32.partialorder %v764, %v994
    %vm1080 = vcmp.lt.f32.partialorder %v764, %v998
    %vm1081 = vcmp.lt.f32.partialorder %v764, %v1002
    %vm1082 = vcmp.lt.f32.partialorder %v764, %v1006
    %vm1083 = vcmp.lt.f32.partialorder %v769, %v994
    %vm1084 = vcmp.lt.f32.partialorder %v769, %v998
    %vm1085 = vcmp.lt.f32.partialorder %v769, %v1002
    %vm1086 = vcmp.lt.f32.partialorder %v769, %v1006
    %vm1087 = vcmp.lt.f32.partialorder %v774, %v994
    %vm1088 = vcmp.lt.f32.partialorder %v774, %v998
    %vm1089 = vcmp.lt.f32.partialorder %v774, %v1002
    %vm1090 = vcmp.lt.f32.partialorder %v774, %v1006
    %vm1091 = vcmp.lt.f32.partialorder %v779, %v994
    %vm1092 = vcmp.lt.f32.partialorder %v779, %v998
    %vm1093 = vcmp.lt.f32.partialorder %v779, %v1002
    %vm1094 = vcmp.lt.f32.partialorder %v779, %v1006
    %vm1095 = vcmp.lt.f32.partialorder %v784, %v994
    %vm1096 = vcmp.lt.f32.partialorder %v784, %v998
    %vm1097 = vcmp.lt.f32.partialorder %v784, %v1002
    %vm1098 = vcmp.lt.f32.partialorder %v784, %v1006
    %vm1099 = vcmp.lt.f32.partialorder %v789, %v994
    %vm1100 = vcmp.lt.f32.partialorder %v789, %v998
    %vm1101 = vcmp.lt.f32.partialorder %v789, %v1002
    %vm1102 = vcmp.lt.f32.partialorder %v789, %v1006
    %vm1103 = vcmp.lt.f32.partialorder %v794, %v994
    %vm1104 = vcmp.lt.f32.partialorder %v794, %v998
    %vm1105 = vcmp.lt.f32.partialorder %v794, %v1002
    %vm1106 = vcmp.lt.f32.partialorder %v794, %v1006
    %vm1107 = vcmp.lt.f32.partialorder %v799, %v994
    %vm1108 = vcmp.lt.f32.partialorder %v799, %v998
    %vm1109 = vcmp.lt.f32.partialorder %v799, %v1002
    %vm1110 = vcmp.lt.f32.partialorder %v799, %v1006
    %vm1111 = vcmp.lt.f32.partialorder %v804, %v994
    %vm1112 = vcmp.lt.f32.partialorder %v804, %v998
    %vm1113 = vcmp.lt.f32.partialorder %v804, %v1002
    %vm1114 = vcmp.lt.f32.partialorder %v804, %v1006
    %vm1115 = vcmp.lt.f32.partialorder %v809, %v994
    %vm1116 = vcmp.lt.f32.partialorder %v809, %v998
    %vm1117 = vcmp.lt.f32.partialorder %v809, %v1002
    %vm1118 = vcmp.lt.f32.partialorder %v809, %v1006
    %vm1119 = vcmp.lt.f32.partialorder %v814, %v994
    %vm1120 = vcmp.lt.f32.partialorder %v814, %v998
    %vm1121 = vcmp.lt.f32.partialorder %v814, %v1002
    %vm1122 = vcmp.lt.f32.partialorder %v814, %v1006
    %vm1123 = vcmp.lt.f32.partialorder %v819, %v994
    %vm1124 = vcmp.lt.f32.partialorder %v819, %v998
    %vm1125 = vcmp.lt.f32.partialorder %v819, %v1002
    %vm1126 = vcmp.lt.f32.partialorder %v819, %v1006
    %vm1127 = vcmp.lt.f32.partialorder %v824, %v994
    %vm1128 = vcmp.lt.f32.partialorder %v824, %v998
    %vm1129 = vcmp.lt.f32.partialorder %v824, %v1002
    %vm1130 = vcmp.lt.f32.partialorder %v824, %v1006
    %vm1131 = vcmp.lt.f32.partialorder %v829, %v994
    %vm1132 = vcmp.lt.f32.partialorder %v829, %v998
    %vm1133 = vcmp.lt.f32.partialorder %v829, %v1002
    %vm1134 = vcmp.lt.f32.partialorder %v829, %v1006
    %vm1135 = vcmp.lt.f32.partialorder %v834, %v994
    %vm1136 = vcmp.lt.f32.partialorder %v834, %v998
    %vm1137 = vcmp.lt.f32.partialorder %v834, %v1002
    %vm1138 = vcmp.lt.f32.partialorder %v834, %v1006
    %vm1139 = vcmp.lt.f32.partialorder %v839, %v994
    %vm1140 = vcmp.lt.f32.partialorder %v839, %v998
    %vm1141 = vcmp.lt.f32.partialorder %v839, %v1002
    %vm1142 = vcmp.lt.f32.partialorder %v839, %v1006
    %vm1143 = vcmp.lt.f32.partialorder %v844, %v994
    %vm1144 = vcmp.lt.f32.partialorder %v844, %v998
    %vm1145 = vcmp.lt.f32.partialorder %v844, %v1002
    %vm1146 = vcmp.lt.f32.partialorder %v844, %v1006
    %vm1147 = vcmp.lt.f32.partialorder %v849, %v994
    %vm1148 = vcmp.lt.f32.partialorder %v849, %v998
    %vm1149 = vcmp.lt.f32.partialorder %v849, %v1002
    %vm1150 = vcmp.lt.f32.partialorder %v849, %v1006
    %vm1151 = vcmp.lt.f32.partialorder %v854, %v994
    %vm1152 = vcmp.lt.f32.partialorder %v854, %v998
    %vm1153 = vcmp.lt.f32.partialorder %v854, %v1002
    %vm1154 = vcmp.lt.f32.partialorder %v854, %v1006
    %vm1155 = vcmp.lt.f32.partialorder %v859, %v994
    %vm1156 = vcmp.lt.f32.partialorder %v859, %v998
    %vm1157 = vcmp.lt.f32.partialorder %v859, %v1002
    %vm1158 = vcmp.lt.f32.partialorder %v859, %v1006
    %vm1159 = vcmp.lt.f32.partialorder %v864, %v994
    %vm1160 = vcmp.lt.f32.partialorder %v864, %v998
    %vm1161 = vcmp.lt.f32.partialorder %v864, %v1002
    %vm1162 = vcmp.lt.f32.partialorder %v864, %v1006
    %vm1163 = vcmp.lt.f32.partialorder %v869, %v994
    %vm1164 = vcmp.lt.f32.partialorder %v869, %v998
    %vm1165 = vcmp.lt.f32.partialorder %v869, %v1002
    %vm1166 = vcmp.lt.f32.partialorder %v869, %v1006
    %vm1167 = vcmp.lt.f32.partialorder %v874, %v994
    %vm1168 = vcmp.lt.f32.partialorder %v874, %v998
    %vm1169 = vcmp.lt.f32.partialorder %v874, %v1002
    %vm1170 = vcmp.lt.f32.partialorder %v874, %v1006
    %vm1171 = vcmp.lt.f32.partialorder %v879, %v994
    %vm1172 = vcmp.lt.f32.partialorder %v879, %v998
    %vm1173 = vcmp.lt.f32.partialorder %v879, %v1002
    %vm1174 = vcmp.lt.f32.partialorder %v879, %v1006
    %vm1175 = vcmp.lt.f32.partialorder %v884, %v994
    %vm1176 = vcmp.lt.f32.partialorder %v884, %v998
    %vm1177 = vcmp.lt.f32.partialorder %v884, %v1002
    %vm1178 = vcmp.lt.f32.partialorder %v884, %v1006
    %vm1179 = vcmp.lt.f32.partialorder %v889, %v994
    %vm1180 = vcmp.lt.f32.partialorder %v889, %v998
    %vm1181 = vcmp.lt.f32.partialorder %v889, %v1002
    %vm1182 = vcmp.lt.f32.partialorder %v889, %v1006
    %vm1183 = vcmp.lt.f32.partialorder %v894, %v994
    %vm1184 = vcmp.lt.f32.partialorder %v894, %v998
    %vm1185 = vcmp.lt.f32.partialorder %v894, %v1002
    %vm1186 = vcmp.lt.f32.partialorder %v894, %v1006
    %vm1187 = vcmp.lt.f32.partialorder %v899, %v994
    %vm1188 = vcmp.lt.f32.partialorder %v899, %v998
    %vm1189 = vcmp.lt.f32.partialorder %v899, %v1002
    %vm1190 = vcmp.lt.f32.partialorder %v899, %v1006
    %vm1191 = vcmp.lt.f32.partialorder %v904, %v994
    %vm1192 = vcmp.lt.f32.partialorder %v904, %v998
    %vm1193 = vcmp.lt.f32.partialorder %v904, %v1002
    %vm1194 = vcmp.lt.f32.partialorder %v904, %v1006
    %vm1195 = vcmp.lt.f32.partialorder %v909, %v994
    %vm1196 = vcmp.lt.f32.partialorder %v909, %v998
    %vm1197 = vcmp.lt.f32.partialorder %v909, %v1002
    %vm1198 = vcmp.lt.f32.partialorder %v909, %v1006
    %vm1199 = vcmp.lt.f32.partialorder %v914, %v994
    %vm1200 = vcmp.lt.f32.partialorder %v914, %v998
    %vm1201 = vcmp.lt.f32.partialorder %v914, %v1002
    %vm1202 = vcmp.lt.f32.partialorder %v914, %v1006
    %vm1203 = vcmp.lt.f32.partialorder %v919, %v994
    %vm1204 = vcmp.lt.f32.partialorder %v919, %v998
    %vm1205 = vcmp.lt.f32.partialorder %v919, %v1002
    %vm1206 = vcmp.lt.f32.partialorder %v919, %v1006
    %vm1207 = vcmp.lt.f32.partialorder %v924, %v994
    %vm1208 = vcmp.lt.f32.partialorder %v924, %v998
    %vm1209 = vcmp.lt.f32.partialorder %v924, %v1002
    %vm1210 = vcmp.lt.f32.partialorder %v924, %v1006
    %vm1211 = vcmp.lt.f32.partialorder %v929, %v994
    %vm1212 = vcmp.lt.f32.partialorder %v929, %v998
    %vm1213 = vcmp.lt.f32.partialorder %v929, %v1002
    %vm1214 = vcmp.lt.f32.partialorder %v929, %v1006
    %vm1215 = vcmp.lt.f32.partialorder %v934, %v994
    %vm1216 = vcmp.lt.f32.partialorder %v934, %v998
    %vm1217 = vcmp.lt.f32.partialorder %v934, %v1002
    %vm1218 = vcmp.lt.f32.partialorder %v934, %v1006
    %vm1219 = vcmp.lt.f32.partialorder %v939, %v994
    %vm1220 = vcmp.lt.f32.partialorder %v939, %v998
    %vm1221 = vcmp.lt.f32.partialorder %v939, %v1002
    %vm1222 = vcmp.lt.f32.partialorder %v939, %v1006
    %vm1223 = vcmp.lt.f32.partialorder %v944, %v994
    %vm1224 = vcmp.lt.f32.partialorder %v944, %v998
    %vm1225 = vcmp.lt.f32.partialorder %v944, %v1002
    %vm1226 = vcmp.lt.f32.partialorder %v944, %v1006
    %vm1227 = vcmp.lt.f32.partialorder %v949, %v994
    %vm1228 = vcmp.lt.f32.partialorder %v949, %v998
    %vm1229 = vcmp.lt.f32.partialorder %v949, %v1002
    %vm1230 = vcmp.lt.f32.partialorder %v949, %v1006
    %vm1231 = vcmp.lt.f32.partialorder %v954, %v994
    %vm1232 = vcmp.lt.f32.partialorder %v954, %v998
    %vm1233 = vcmp.lt.f32.partialorder %v954, %v1002
    %vm1234 = vcmp.lt.f32.partialorder %v954, %v1006
    %vm1235 = vcmp.lt.f32.partialorder %v959, %v994
    %vm1236 = vcmp.lt.f32.partialorder %v959, %v998
    %vm1237 = vcmp.lt.f32.partialorder %v959, %v1002
    %vm1238 = vcmp.lt.f32.partialorder %v959, %v1006
    %vm1239 = vcmp.lt.f32.partialorder %v964, %v994
    %vm1240 = vcmp.lt.f32.partialorder %v964, %v998
    %vm1241 = vcmp.lt.f32.partialorder %v964, %v1002
    %vm1242 = vcmp.lt.f32.partialorder %v964, %v1006
    %vm1243 = vcmp.lt.f32.partialorder %v969, %v994
    %vm1244 = vcmp.lt.f32.partialorder %v969, %v998
    %vm1245 = vcmp.lt.f32.partialorder %v969, %v1002
    %vm1246 = vcmp.lt.f32.partialorder %v969, %v1006
    %vm1247 = vcmp.lt.f32.partialorder %v974, %v994
    %vm1248 = vcmp.lt.f32.partialorder %v974, %v998
    %vm1249 = vcmp.lt.f32.partialorder %v974, %v1002
    %vm1250 = vcmp.lt.f32.partialorder %v974, %v1006
    %vm1251 = vcmp.lt.f32.partialorder %v979, %v994
    %vm1252 = vcmp.lt.f32.partialorder %v979, %v998
    %vm1253 = vcmp.lt.f32.partialorder %v979, %v1002
    %vm1254 = vcmp.lt.f32.partialorder %v979, %v1006
    %vm1255 = vcmp.lt.f32.partialorder %v984, %v994
    %vm1256 = vcmp.lt.f32.partialorder %v984, %v998
    %vm1257 = vcmp.lt.f32.partialorder %v984, %v1002
    %vm1258 = vcmp.lt.f32.partialorder %v984, %v1006
    %vm1259 = vcmp.lt.f32.partialorder %v989, %v994
    %vm1260 = vcmp.lt.f32.partialorder %v989, %v998
    %vm1261 = vcmp.lt.f32.partialorder %v989, %v1002
    %vm1262 = vcmp.lt.f32.partialorder %v989, %v1006
    %vm1263 = vcmp.eq.f32.partialorder %v674, %v994
    %vm1264 = vcmp.eq.f32.partialorder %v674, %v998
    %vm1265 = vcmp.eq.f32.partialorder %v674, %v1002
    %vm1266 = vcmp.eq.f32.partialorder %v674, %v1006
    %vm1267 = vcmp.eq.f32.partialorder %v679, %v994
    %vm1268 = vcmp.eq.f32.partialorder %v679, %v998
    %vm1269 = vcmp.eq.f32.partialorder %v679, %v1002
    %vm1270 = vcmp.eq.f32.partialorder %v679, %v1006
    %vm1271 = vcmp.eq.f32.partialorder %v684, %v994
    %vm1272 = vcmp.eq.f32.partialorder %v684, %v998
    %vm1273 = vcmp.eq.f32.partialorder %v684, %v1002
    %vm1274 = vcmp.eq.f32.partialorder %v684, %v1006
    %vm1275 = vcmp.eq.f32.partialorder %v689, %v994
    %vm1276 = vcmp.eq.f32.partialorder %v689, %v998
    %vm1277 = vcmp.eq.f32.partialorder %v689, %v1002
    %vm1278 = vcmp.eq.f32.partialorder %v689, %v1006
    %vm1279 = vcmp.eq.f32.partialorder %v694, %v994
    %vm1280 = vcmp.eq.f32.partialorder %v694, %v998
    %vm1281 = vcmp.eq.f32.partialorder %v694, %v1002
    %vm1282 = vcmp.eq.f32.partialorder %v694, %v1006
    %vm1283 = vcmp.eq.f32.partialorder %v699, %v994
    %vm1284 = vcmp.eq.f32.partialorder %v699, %v998
    %vm1285 = vcmp.eq.f32.partialorder %v699, %v1002
    %vm1286 = vcmp.eq.f32.partialorder %v699, %v1006
    %vm1287 = vcmp.eq.f32.partialorder %v704, %v994
    %vm1288 = vcmp.eq.f32.partialorder %v704, %v998
    %vm1289 = vcmp.eq.f32.partialorder %v704, %v1002
    %vm1290 = vcmp.eq.f32.partialorder %v704, %v1006
    %vm1291 = vcmp.eq.f32.partialorder %v709, %v994
    %vm1292 = vcmp.eq.f32.partialorder %v709, %v998
    %vm1293 = vcmp.eq.f32.partialorder %v709, %v1002
    %vm1294 = vcmp.eq.f32.partialorder %v709, %v1006
    %vm1295 = vcmp.eq.f32.partialorder %v714, %v994
    %vm1296 = vcmp.eq.f32.partialorder %v714, %v998
    %vm1297 = vcmp.eq.f32.partialorder %v714, %v1002
    %vm1298 = vcmp.eq.f32.partialorder %v714, %v1006
    %vm1299 = vcmp.eq.f32.partialorder %v719, %v994
    %vm1300 = vcmp.eq.f32.partialorder %v719, %v998
    %vm1301 = vcmp.eq.f32.partialorder %v719, %v1002
    %vm1302 = vcmp.eq.f32.partialorder %v719, %v1006
    %vm1303 = vcmp.eq.f32.partialorder %v724, %v994
    %vm1304 = vcmp.eq.f32.partialorder %v724, %v998
    %vm1305 = vcmp.eq.f32.partialorder %v724, %v1002
    %vm1306 = vcmp.eq.f32.partialorder %v724, %v1006
    %vm1307 = vcmp.eq.f32.partialorder %v729, %v994
    %vm1308 = vcmp.eq.f32.partialorder %v729, %v998
    %vm1309 = vcmp.eq.f32.partialorder %v729, %v1002
    %vm1310 = vcmp.eq.f32.partialorder %v729, %v1006
    %vm1311 = vcmp.eq.f32.partialorder %v734, %v994
    %vm1312 = vcmp.eq.f32.partialorder %v734, %v998
    %vm1313 = vcmp.eq.f32.partialorder %v734, %v1002
    %vm1314 = vcmp.eq.f32.partialorder %v734, %v1006
    %vm1315 = vcmp.eq.f32.partialorder %v739, %v994
    %vm1316 = vcmp.eq.f32.partialorder %v739, %v998
    %vm1317 = vcmp.eq.f32.partialorder %v739, %v1002
    %vm1318 = vcmp.eq.f32.partialorder %v739, %v1006
    %vm1319 = vcmp.eq.f32.partialorder %v744, %v994
    %vm1320 = vcmp.eq.f32.partialorder %v744, %v998
    %vm1321 = vcmp.eq.f32.partialorder %v744, %v1002
    %vm1322 = vcmp.eq.f32.partialorder %v744, %v1006
    %vm1323 = vcmp.eq.f32.partialorder %v749, %v994
    %vm1324 = vcmp.eq.f32.partialorder %v749, %v998
    %vm1325 = vcmp.eq.f32.partialorder %v749, %v1002
    %vm1326 = vcmp.eq.f32.partialorder %v749, %v1006
    %vm1327 = vcmp.eq.f32.partialorder %v754, %v994
    %vm1328 = vcmp.eq.f32.partialorder %v754, %v998
    %vm1329 = vcmp.eq.f32.partialorder %v754, %v1002
    %vm1330 = vcmp.eq.f32.partialorder %v754, %v1006
    %vm1331 = vcmp.eq.f32.partialorder %v759, %v994
    %vm1332 = vcmp.eq.f32.partialorder %v759, %v998
    %vm1333 = vcmp.eq.f32.partialorder %v759, %v1002
    %vm1334 = vcmp.eq.f32.partialorder %v759, %v1006
    %vm1335 = vcmp.eq.f32.partialorder %v764, %v994
    %vm1336 = vcmp.eq.f32.partialorder %v764, %v998
    %vm1337 = vcmp.eq.f32.partialorder %v764, %v1002
    %vm1338 = vcmp.eq.f32.partialorder %v764, %v1006
    %vm1339 = vcmp.eq.f32.partialorder %v769, %v994
    %vm1340 = vcmp.eq.f32.partialorder %v769, %v998
    %vm1341 = vcmp.eq.f32.partialorder %v769, %v1002
    %vm1342 = vcmp.eq.f32.partialorder %v769, %v1006
    %vm1343 = vcmp.eq.f32.partialorder %v774, %v994
    %vm1344 = vcmp.eq.f32.partialorder %v774, %v998
    %vm1345 = vcmp.eq.f32.partialorder %v774, %v1002
    %vm1346 = vcmp.eq.f32.partialorder %v774, %v1006
    %vm1347 = vcmp.eq.f32.partialorder %v779, %v994
    %vm1348 = vcmp.eq.f32.partialorder %v779, %v998
    %vm1349 = vcmp.eq.f32.partialorder %v779, %v1002
    %vm1350 = vcmp.eq.f32.partialorder %v779, %v1006
    %vm1351 = vcmp.eq.f32.partialorder %v784, %v994
    %vm1352 = vcmp.eq.f32.partialorder %v784, %v998
    %vm1353 = vcmp.eq.f32.partialorder %v784, %v1002
    %vm1354 = vcmp.eq.f32.partialorder %v784, %v1006
    %vm1355 = vcmp.eq.f32.partialorder %v789, %v994
    %vm1356 = vcmp.eq.f32.partialorder %v789, %v998
    %vm1357 = vcmp.eq.f32.partialorder %v789, %v1002
    %vm1358 = vcmp.eq.f32.partialorder %v789, %v1006
    %vm1359 = vcmp.eq.f32.partialorder %v794, %v994
    %vm1360 = vcmp.eq.f32.partialorder %v794, %v998
    %vm1361 = vcmp.eq.f32.partialorder %v794, %v1002
    %vm1362 = vcmp.eq.f32.partialorder %v794, %v1006
    %vm1363 = vcmp.eq.f32.partialorder %v799, %v994
    %vm1364 = vcmp.eq.f32.partialorder %v799, %v998
    %vm1365 = vcmp.eq.f32.partialorder %v799, %v1002
    %vm1366 = vcmp.eq.f32.partialorder %v799, %v1006
    %vm1367 = vcmp.eq.f32.partialorder %v804, %v994
    %vm1368 = vcmp.eq.f32.partialorder %v804, %v998
    %vm1369 = vcmp.eq.f32.partialorder %v804, %v1002
    %vm1370 = vcmp.eq.f32.partialorder %v804, %v1006
    %vm1371 = vcmp.eq.f32.partialorder %v809, %v994
    %vm1372 = vcmp.eq.f32.partialorder %v809, %v998
    %vm1373 = vcmp.eq.f32.partialorder %v809, %v1002
    %vm1374 = vcmp.eq.f32.partialorder %v809, %v1006
    %vm1375 = vcmp.eq.f32.partialorder %v814, %v994
    %vm1376 = vcmp.eq.f32.partialorder %v814, %v998
    %vm1377 = vcmp.eq.f32.partialorder %v814, %v1002
    %vm1378 = vcmp.eq.f32.partialorder %v814, %v1006
    %vm1379 = vcmp.eq.f32.partialorder %v819, %v994
    %vm1380 = vcmp.eq.f32.partialorder %v819, %v998
    %vm1381 = vcmp.eq.f32.partialorder %v819, %v1002
    %vm1382 = vcmp.eq.f32.partialorder %v819, %v1006
    %vm1383 = vcmp.eq.f32.partialorder %v824, %v994
    %vm1384 = vcmp.eq.f32.partialorder %v824, %v998
    %vm1385 = vcmp.eq.f32.partialorder %v824, %v1002
    %vm1386 = vcmp.eq.f32.partialorder %v824, %v1006
    %vm1387 = vcmp.eq.f32.partialorder %v829, %v994
    %vm1388 = vcmp.eq.f32.partialorder %v829, %v998
    %vm1389 = vcmp.eq.f32.partialorder %v829, %v1002
    %vm1390 = vcmp.eq.f32.partialorder %v829, %v1006
    %vm1391 = vcmp.eq.f32.partialorder %v834, %v994
    %vm1392 = vcmp.eq.f32.partialorder %v834, %v998
    %vm1393 = vcmp.eq.f32.partialorder %v834, %v1002
    %vm1394 = vcmp.eq.f32.partialorder %v834, %v1006
    %vm1395 = vcmp.eq.f32.partialorder %v839, %v994
    %vm1396 = vcmp.eq.f32.partialorder %v839, %v998
    %vm1397 = vcmp.eq.f32.partialorder %v839, %v1002
    %vm1398 = vcmp.eq.f32.partialorder %v839, %v1006
    %vm1399 = vcmp.eq.f32.partialorder %v844, %v994
    %vm1400 = vcmp.eq.f32.partialorder %v844, %v998
    %vm1401 = vcmp.eq.f32.partialorder %v844, %v1002
    %vm1402 = vcmp.eq.f32.partialorder %v844, %v1006
    %vm1403 = vcmp.eq.f32.partialorder %v849, %v994
    %vm1404 = vcmp.eq.f32.partialorder %v849, %v998
    %vm1405 = vcmp.eq.f32.partialorder %v849, %v1002
    %vm1406 = vcmp.eq.f32.partialorder %v849, %v1006
    %vm1407 = vcmp.eq.f32.partialorder %v854, %v994
    %vm1408 = vcmp.eq.f32.partialorder %v854, %v998
    %vm1409 = vcmp.eq.f32.partialorder %v854, %v1002
    %vm1410 = vcmp.eq.f32.partialorder %v854, %v1006
    %vm1411 = vcmp.eq.f32.partialorder %v859, %v994
    %vm1412 = vcmp.eq.f32.partialorder %v859, %v998
    %vm1413 = vcmp.eq.f32.partialorder %v859, %v1002
    %vm1414 = vcmp.eq.f32.partialorder %v859, %v1006
    %vm1415 = vcmp.eq.f32.partialorder %v864, %v994
    %vm1416 = vcmp.eq.f32.partialorder %v864, %v998
    %vm1417 = vcmp.eq.f32.partialorder %v864, %v1002
    %vm1418 = vcmp.eq.f32.partialorder %v864, %v1006
    %vm1419 = vcmp.eq.f32.partialorder %v869, %v994
    %vm1420 = vcmp.eq.f32.partialorder %v869, %v998
    %vm1421 = vcmp.eq.f32.partialorder %v869, %v1002
    %vm1422 = vcmp.eq.f32.partialorder %v869, %v1006
    %vm1423 = vcmp.eq.f32.partialorder %v874, %v994
    %vm1424 = vcmp.eq.f32.partialorder %v874, %v998
    %vm1425 = vcmp.eq.f32.partialorder %v874, %v1002
    %vm1426 = vcmp.eq.f32.partialorder %v874, %v1006
    %vm1427 = vcmp.eq.f32.partialorder %v879, %v994
    %vm1428 = vcmp.eq.f32.partialorder %v879, %v998
    %vm1429 = vcmp.eq.f32.partialorder %v879, %v1002
    %vm1430 = vcmp.eq.f32.partialorder %v879, %v1006
    %vm1431 = vcmp.eq.f32.partialorder %v884, %v994
    %vm1432 = vcmp.eq.f32.partialorder %v884, %v998
    %vm1433 = vcmp.eq.f32.partialorder %v884, %v1002
    %vm1434 = vcmp.eq.f32.partialorder %v884, %v1006
    %vm1435 = vcmp.eq.f32.partialorder %v889, %v994
    %vm1436 = vcmp.eq.f32.partialorder %v889, %v998
    %vm1437 = vcmp.eq.f32.partialorder %v889, %v1002
    %vm1438 = vcmp.eq.f32.partialorder %v889, %v1006
    %vm1439 = vcmp.eq.f32.partialorder %v894, %v994
    %vm1440 = vcmp.eq.f32.partialorder %v894, %v998
    %vm1441 = vcmp.eq.f32.partialorder %v894, %v1002
    %vm1442 = vcmp.eq.f32.partialorder %v894, %v1006
    %vm1443 = vcmp.eq.f32.partialorder %v899, %v994
    %vm1444 = vcmp.eq.f32.partialorder %v899, %v998
    %vm1445 = vcmp.eq.f32.partialorder %v899, %v1002
    %vm1446 = vcmp.eq.f32.partialorder %v899, %v1006
    %vm1447 = vcmp.eq.f32.partialorder %v904, %v994
    %vm1448 = vcmp.eq.f32.partialorder %v904, %v998
    %vm1449 = vcmp.eq.f32.partialorder %v904, %v1002
    %vm1450 = vcmp.eq.f32.partialorder %v904, %v1006
    %vm1451 = vcmp.eq.f32.partialorder %v909, %v994
    %vm1452 = vcmp.eq.f32.partialorder %v909, %v998
    %vm1453 = vcmp.eq.f32.partialorder %v909, %v1002
    %vm1454 = vcmp.eq.f32.partialorder %v909, %v1006
    %vm1455 = vcmp.eq.f32.partialorder %v914, %v994
    %vm1456 = vcmp.eq.f32.partialorder %v914, %v998
    %vm1457 = vcmp.eq.f32.partialorder %v914, %v1002
    %vm1458 = vcmp.eq.f32.partialorder %v914, %v1006
    %vm1459 = vcmp.eq.f32.partialorder %v919, %v994
    %vm1460 = vcmp.eq.f32.partialorder %v919, %v998
    %vm1461 = vcmp.eq.f32.partialorder %v919, %v1002
    %vm1462 = vcmp.eq.f32.partialorder %v919, %v1006
    %vm1463 = vcmp.eq.f32.partialorder %v924, %v994
    %vm1464 = vcmp.eq.f32.partialorder %v924, %v998
    %vm1465 = vcmp.eq.f32.partialorder %v924, %v1002
    %vm1466 = vcmp.eq.f32.partialorder %v924, %v1006
    %vm1467 = vcmp.eq.f32.partialorder %v929, %v994
    %vm1468 = vcmp.eq.f32.partialorder %v929, %v998
    %vm1469 = vcmp.eq.f32.partialorder %v929, %v1002
    %vm1470 = vcmp.eq.f32.partialorder %v929, %v1006
    %vm1471 = vcmp.eq.f32.partialorder %v934, %v994
    %vm1472 = vcmp.eq.f32.partialorder %v934, %v998
    %vm1473 = vcmp.eq.f32.partialorder %v934, %v1002
    %vm1474 = vcmp.eq.f32.partialorder %v934, %v1006
    %vm1475 = vcmp.eq.f32.partialorder %v939, %v994
    %vm1476 = vcmp.eq.f32.partialorder %v939, %v998
    %vm1477 = vcmp.eq.f32.partialorder %v939, %v1002
    %vm1478 = vcmp.eq.f32.partialorder %v939, %v1006
    %vm1479 = vcmp.eq.f32.partialorder %v944, %v994
    %vm1480 = vcmp.eq.f32.partialorder %v944, %v998
    %vm1481 = vcmp.eq.f32.partialorder %v944, %v1002
    %vm1482 = vcmp.eq.f32.partialorder %v944, %v1006
    %vm1483 = vcmp.eq.f32.partialorder %v949, %v994
    %vm1484 = vcmp.eq.f32.partialorder %v949, %v998
    %vm1485 = vcmp.eq.f32.partialorder %v949, %v1002
    %vm1486 = vcmp.eq.f32.partialorder %v949, %v1006
    %vm1487 = vcmp.eq.f32.partialorder %v954, %v994
    %vm1488 = vcmp.eq.f32.partialorder %v954, %v998
    %vm1489 = vcmp.eq.f32.partialorder %v954, %v1002
    %vm1490 = vcmp.eq.f32.partialorder %v954, %v1006
    %vm1491 = vcmp.eq.f32.partialorder %v959, %v994
    %vm1492 = vcmp.eq.f32.partialorder %v959, %v998
    %vm1493 = vcmp.eq.f32.partialorder %v959, %v1002
    %vm1494 = vcmp.eq.f32.partialorder %v959, %v1006
    %vm1495 = vcmp.eq.f32.partialorder %v964, %v994
    %vm1496 = vcmp.eq.f32.partialorder %v964, %v998
    %vm1497 = vcmp.eq.f32.partialorder %v964, %v1002
    %vm1498 = vcmp.eq.f32.partialorder %v964, %v1006
    %vm1499 = vcmp.eq.f32.partialorder %v969, %v994
    %vm1500 = vcmp.eq.f32.partialorder %v969, %v998
    %vm1501 = vcmp.eq.f32.partialorder %v969, %v1002
    %vm1502 = vcmp.eq.f32.partialorder %v969, %v1006
    %vm1503 = vcmp.eq.f32.partialorder %v974, %v994
    %vm1504 = vcmp.eq.f32.partialorder %v974, %v998
    %vm1505 = vcmp.eq.f32.partialorder %v974, %v1002
    %vm1506 = vcmp.eq.f32.partialorder %v974, %v1006
    %vm1507 = vcmp.eq.f32.partialorder %v979, %v994
    %vm1508 = vcmp.eq.f32.partialorder %v979, %v998
    %vm1509 = vcmp.eq.f32.partialorder %v979, %v1002
    %vm1510 = vcmp.eq.f32.partialorder %v979, %v1006
    %vm1511 = vcmp.eq.f32.partialorder %v984, %v994
    %vm1512 = vcmp.eq.f32.partialorder %v984, %v998
    %vm1513 = vcmp.eq.f32.partialorder %v984, %v1002
    %vm1514 = vcmp.eq.f32.partialorder %v984, %v1006
    %vm1515 = vcmp.eq.f32.partialorder %v989, %v994
    %vm1516 = vcmp.eq.f32.partialorder %v989, %v998
    %vm1517 = vcmp.eq.f32.partialorder %v989, %v1002
    %vm1518 = vcmp.eq.f32.partialorder %v989, %v1006
    %vm1519 = vcmp.lt.s32.totalorder %v158, %v149
    %vm1520 = vcmp.lt.s32.totalorder %v158, %v150
    %vm1521 = vcmp.lt.s32.totalorder %v158, %v151
    %vm1522 = vcmp.lt.s32.totalorder %v158, %v152
    %vm1523 = vcmp.lt.s32.totalorder %v159, %v149
    %vm1524 = vcmp.lt.s32.totalorder %v159, %v150
    %vm1525 = vcmp.lt.s32.totalorder %v159, %v151
    %vm1526 = vcmp.lt.s32.totalorder %v159, %v152
    %vm1527 = vcmp.lt.s32.totalorder %v160, %v149
    %vm1528 = vcmp.lt.s32.totalorder %v160, %v150
    %vm1529 = vcmp.lt.s32.totalorder %v160, %v151
    %vm1530 = vcmp.lt.s32.totalorder %v160, %v152
    %vm1531 = vcmp.lt.s32.totalorder %v161, %v149
    %vm1532 = vcmp.lt.s32.totalorder %v161, %v150
    %vm1533 = vcmp.lt.s32.totalorder %v161, %v151
    %vm1534 = vcmp.lt.s32.totalorder %v161, %v152
    %vm1535 = vcmp.lt.s32.totalorder %v162, %v149
    %vm1536 = vcmp.lt.s32.totalorder %v162, %v150
    %vm1537 = vcmp.lt.s32.totalorder %v162, %v151
    %vm1538 = vcmp.lt.s32.totalorder %v162, %v152
    %vm1539 = vcmp.lt.s32.totalorder %v163, %v149
    %vm1540 = vcmp.lt.s32.totalorder %v163, %v150
    %vm1541 = vcmp.lt.s32.totalorder %v163, %v151
    %vm1542 = vcmp.lt.s32.totalorder %v163, %v152
    %vm1543 = vcmp.lt.s32.totalorder %v164, %v149
    %vm1544 = vcmp.lt.s32.totalorder %v164, %v150
    %vm1545 = vcmp.lt.s32.totalorder %v164, %v151
    %vm1546 = vcmp.lt.s32.totalorder %v164, %v152
    %vm1547 = vcmp.lt.s32.totalorder %v165, %v149
    %vm1548 = vcmp.lt.s32.totalorder %v165, %v150
    %vm1549 = vcmp.lt.s32.totalorder %v165, %v151
    %vm1550 = vcmp.lt.s32.totalorder %v165, %v152
    %vm1551 = vcmp.lt.s32.totalorder %v166, %v149
    %vm1552 = vcmp.lt.s32.totalorder %v166, %v150
    %vm1553 = vcmp.lt.s32.totalorder %v166, %v151
    %vm1554 = vcmp.lt.s32.totalorder %v166, %v152
    %vm1555 = vcmp.lt.s32.totalorder %v167, %v149
    %vm1556 = vcmp.lt.s32.totalorder %v167, %v150
    %vm1557 = vcmp.lt.s32.totalorder %v167, %v151
    %vm1558 = vcmp.lt.s32.totalorder %v167, %v152
    %vm1559 = vcmp.lt.s32.totalorder %v168, %v149
    %vm1560 = vcmp.lt.s32.totalorder %v168, %v150
    %vm1561 = vcmp.lt.s32.totalorder %v168, %v151
    %vm1562 = vcmp.lt.s32.totalorder %v168, %v152
    %vm1563 = vcmp.lt.s32.totalorder %v169, %v149
    %vm1564 = vcmp.lt.s32.totalorder %v169, %v150
    %vm1565 = vcmp.lt.s32.totalorder %v169, %v151
    %vm1566 = vcmp.lt.s32.totalorder %v169, %v152
    %vm1567 = vcmp.lt.s32.totalorder %v170, %v149
    %vm1568 = vcmp.lt.s32.totalorder %v170, %v150
    %vm1569 = vcmp.lt.s32.totalorder %v170, %v151
    %vm1570 = vcmp.lt.s32.totalorder %v170, %v152
    %vm1571 = vcmp.lt.s32.totalorder %v171, %v149
    %vm1572 = vcmp.lt.s32.totalorder %v171, %v150
    %vm1573 = vcmp.lt.s32.totalorder %v171, %v151
    %vm1574 = vcmp.lt.s32.totalorder %v171, %v152
    %vm1575 = vcmp.lt.s32.totalorder %v172, %v149
    %vm1576 = vcmp.lt.s32.totalorder %v172, %v150
    %vm1577 = vcmp.lt.s32.totalorder %v172, %v151
    %vm1578 = vcmp.lt.s32.totalorder %v172, %v152
    %vm1579 = vcmp.lt.s32.totalorder %v173, %v149
    %vm1580 = vcmp.lt.s32.totalorder %v173, %v150
    %vm1581 = vcmp.lt.s32.totalorder %v173, %v151
    %vm1582 = vcmp.lt.s32.totalorder %v173, %v152
    %vm1583 = vcmp.lt.s32.totalorder %v174, %v149
    %vm1584 = vcmp.lt.s32.totalorder %v174, %v150
    %vm1585 = vcmp.lt.s32.totalorder %v174, %v151
    %vm1586 = vcmp.lt.s32.totalorder %v174, %v152
    %vm1587 = vcmp.lt.s32.totalorder %v175, %v149
    %vm1588 = vcmp.lt.s32.totalorder %v175, %v150
    %vm1589 = vcmp.lt.s32.totalorder %v175, %v151
    %vm1590 = vcmp.lt.s32.totalorder %v175, %v152
    %vm1591 = vcmp.lt.s32.totalorder %v176, %v149
    %vm1592 = vcmp.lt.s32.totalorder %v176, %v150
    %vm1593 = vcmp.lt.s32.totalorder %v176, %v151
    %vm1594 = vcmp.lt.s32.totalorder %v176, %v152
    %vm1595 = vcmp.lt.s32.totalorder %v177, %v149
    %vm1596 = vcmp.lt.s32.totalorder %v177, %v150
    %vm1597 = vcmp.lt.s32.totalorder %v177, %v151
    %vm1598 = vcmp.lt.s32.totalorder %v177, %v152
    %vm1599 = vcmp.lt.s32.totalorder %v178, %v149
    %vm1600 = vcmp.lt.s32.totalorder %v178, %v150
    %vm1601 = vcmp.lt.s32.totalorder %v178, %v151
    %vm1602 = vcmp.lt.s32.totalorder %v178, %v152
    %vm1603 = vcmp.lt.s32.totalorder %v179, %v149
    %vm1604 = vcmp.lt.s32.totalorder %v179, %v150
    %vm1605 = vcmp.lt.s32.totalorder %v179, %v151
    %vm1606 = vcmp.lt.s32.totalorder %v179, %v152
    %vm1607 = vcmp.lt.s32.totalorder %v180, %v149
    %vm1608 = vcmp.lt.s32.totalorder %v180, %v150
    %vm1609 = vcmp.lt.s32.totalorder %v180, %v151
    %vm1610 = vcmp.lt.s32.totalorder %v180, %v152
    %vm1611 = vcmp.lt.s32.totalorder %v181, %v149
    %vm1612 = vcmp.lt.s32.totalorder %v181, %v150
    %vm1613 = vcmp.lt.s32.totalorder %v181, %v151
    %vm1614 = vcmp.lt.s32.totalorder %v181, %v152
    %vm1615 = vcmp.lt.s32.totalorder %v182, %v149
    %vm1616 = vcmp.lt.s32.totalorder %v182, %v150
    %vm1617 = vcmp.lt.s32.totalorder %v182, %v151
    %vm1618 = vcmp.lt.s32.totalorder %v182, %v152
    %vm1619 = vcmp.lt.s32.totalorder %v183, %v149
    %vm1620 = vcmp.lt.s32.totalorder %v183, %v150
    %vm1621 = vcmp.lt.s32.totalorder %v183, %v151
    %vm1622 = vcmp.lt.s32.totalorder %v183, %v152
    %vm1623 = vcmp.lt.s32.totalorder %v184, %v149
    %vm1624 = vcmp.lt.s32.totalorder %v184, %v150
    %vm1625 = vcmp.lt.s32.totalorder %v184, %v151
    %vm1626 = vcmp.lt.s32.totalorder %v184, %v152
    %vm1627 = vcmp.lt.s32.totalorder %v185, %v149
    %vm1628 = vcmp.lt.s32.totalorder %v185, %v150
    %vm1629 = vcmp.lt.s32.totalorder %v185, %v151
    %vm1630 = vcmp.lt.s32.totalorder %v185, %v152
    %vm1631 = vcmp.lt.s32.totalorder %v186, %v149
    %vm1632 = vcmp.lt.s32.totalorder %v186, %v150
    %vm1633 = vcmp.lt.s32.totalorder %v186, %v151
    %vm1634 = vcmp.lt.s32.totalorder %v186, %v152
    %vm1635 = vcmp.lt.s32.totalorder %v187, %v149
    %vm1636 = vcmp.lt.s32.totalorder %v187, %v150
    %vm1637 = vcmp.lt.s32.totalorder %v187, %v151
    %vm1638 = vcmp.lt.s32.totalorder %v187, %v152
    %vm1639 = vcmp.lt.s32.totalorder %v188, %v149
    %vm1640 = vcmp.lt.s32.totalorder %v188, %v150
    %vm1641 = vcmp.lt.s32.totalorder %v188, %v151
    %vm1642 = vcmp.lt.s32.totalorder %v188, %v152
    %vm1643 = vcmp.lt.s32.totalorder %v189, %v149
    %vm1644 = vcmp.lt.s32.totalorder %v189, %v150
    %vm1645 = vcmp.lt.s32.totalorder %v189, %v151
    %vm1646 = vcmp.lt.s32.totalorder %v189, %v152
    %vm1647 = vcmp.lt.s32.totalorder %v190, %v149
    %vm1648 = vcmp.lt.s32.totalorder %v190, %v150
    %vm1649 = vcmp.lt.s32.totalorder %v190, %v151
    %vm1650 = vcmp.lt.s32.totalorder %v190, %v152
    %vm1651 = vcmp.lt.s32.totalorder %v191, %v149
    %vm1652 = vcmp.lt.s32.totalorder %v191, %v150
    %vm1653 = vcmp.lt.s32.totalorder %v191, %v151
    %vm1654 = vcmp.lt.s32.totalorder %v191, %v152
    %vm1655 = vcmp.lt.s32.totalorder %v192, %v149
    %vm1656 = vcmp.lt.s32.totalorder %v192, %v150
    %vm1657 = vcmp.lt.s32.totalorder %v192, %v151
    %vm1658 = vcmp.lt.s32.totalorder %v192, %v152
    %vm1659 = vcmp.lt.s32.totalorder %v193, %v149
    %vm1660 = vcmp.lt.s32.totalorder %v193, %v150
    %vm1661 = vcmp.lt.s32.totalorder %v193, %v151
    %vm1662 = vcmp.lt.s32.totalorder %v193, %v152
    %vm1663 = vcmp.lt.s32.totalorder %v194, %v149
    %vm1664 = vcmp.lt.s32.totalorder %v194, %v150
    %vm1665 = vcmp.lt.s32.totalorder %v194, %v151
    %vm1666 = vcmp.lt.s32.totalorder %v194, %v152
    %vm1667 = vcmp.lt.s32.totalorder %v195, %v149
    %vm1668 = vcmp.lt.s32.totalorder %v195, %v150
    %vm1669 = vcmp.lt.s32.totalorder %v195, %v151
    %vm1670 = vcmp.lt.s32.totalorder %v195, %v152
    %vm1671 = vcmp.lt.s32.totalorder %v196, %v149
    %vm1672 = vcmp.lt.s32.totalorder %v196, %v150
    %vm1673 = vcmp.lt.s32.totalorder %v196, %v151
    %vm1674 = vcmp.lt.s32.totalorder %v196, %v152
    %vm1675 = vcmp.lt.s32.totalorder %v197, %v149
    %vm1676 = vcmp.lt.s32.totalorder %v197, %v150
    %vm1677 = vcmp.lt.s32.totalorder %v197, %v151
    %vm1678 = vcmp.lt.s32.totalorder %v197, %v152
    %vm1679 = vcmp.lt.s32.totalorder %v198, %v149
    %vm1680 = vcmp.lt.s32.totalorder %v198, %v150
    %vm1681 = vcmp.lt.s32.totalorder %v198, %v151
    %vm1682 = vcmp.lt.s32.totalorder %v198, %v152
    %vm1683 = vcmp.lt.s32.totalorder %v199, %v149
    %vm1684 = vcmp.lt.s32.totalorder %v199, %v150
    %vm1685 = vcmp.lt.s32.totalorder %v199, %v151
    %vm1686 = vcmp.lt.s32.totalorder %v199, %v152
    %vm1687 = vcmp.lt.s32.totalorder %v200, %v149
    %vm1688 = vcmp.lt.s32.totalorder %v200, %v150
    %vm1689 = vcmp.lt.s32.totalorder %v200, %v151
    %vm1690 = vcmp.lt.s32.totalorder %v200, %v152
    %vm1691 = vcmp.lt.s32.totalorder %v201, %v149
    %vm1692 = vcmp.lt.s32.totalorder %v201, %v150
    %vm1693 = vcmp.lt.s32.totalorder %v201, %v151
    %vm1694 = vcmp.lt.s32.totalorder %v201, %v152
    %vm1695 = vcmp.lt.s32.totalorder %v202, %v149
    %vm1696 = vcmp.lt.s32.totalorder %v202, %v150
    %vm1697 = vcmp.lt.s32.totalorder %v202, %v151
    %vm1698 = vcmp.lt.s32.totalorder %v202, %v152
    %vm1699 = vcmp.lt.s32.totalorder %v203, %v149
    %vm1700 = vcmp.lt.s32.totalorder %v203, %v150
    %vm1701 = vcmp.lt.s32.totalorder %v203, %v151
    %vm1702 = vcmp.lt.s32.totalorder %v203, %v152
    %vm1703 = vcmp.lt.s32.totalorder %v204, %v149
    %vm1704 = vcmp.lt.s32.totalorder %v204, %v150
    %vm1705 = vcmp.lt.s32.totalorder %v204, %v151
    %vm1706 = vcmp.lt.s32.totalorder %v204, %v152
    %vm1707 = vcmp.lt.s32.totalorder %v205, %v149
    %vm1708 = vcmp.lt.s32.totalorder %v205, %v150
    %vm1709 = vcmp.lt.s32.totalorder %v205, %v151
    %vm1710 = vcmp.lt.s32.totalorder %v205, %v152
    %vm1711 = vcmp.lt.s32.totalorder %v206, %v149
    %vm1712 = vcmp.lt.s32.totalorder %v206, %v150
    %vm1713 = vcmp.lt.s32.totalorder %v206, %v151
    %vm1714 = vcmp.lt.s32.totalorder %v206, %v152
    %vm1715 = vcmp.lt.s32.totalorder %v207, %v149
    %vm1716 = vcmp.lt.s32.totalorder %v207, %v150
    %vm1717 = vcmp.lt.s32.totalorder %v207, %v151
    %vm1718 = vcmp.lt.s32.totalorder %v207, %v152
    %vm1719 = vcmp.lt.s32.totalorder %v208, %v149
    %vm1720 = vcmp.lt.s32.totalorder %v208, %v150
    %vm1721 = vcmp.lt.s32.totalorder %v208, %v151
    %vm1722 = vcmp.lt.s32.totalorder %v208, %v152
    %vm1723 = vcmp.lt.s32.totalorder %v209, %v149
    %vm1724 = vcmp.lt.s32.totalorder %v209, %v150
    %vm1725 = vcmp.lt.s32.totalorder %v209, %v151
    %vm1726 = vcmp.lt.s32.totalorder %v209, %v152
    %vm1727 = vcmp.lt.s32.totalorder %v210, %v149
    %vm1728 = vcmp.lt.s32.totalorder %v210, %v150
    %vm1729 = vcmp.lt.s32.totalorder %v210, %v151
    %vm1730 = vcmp.lt.s32.totalorder %v210, %v152
    %vm1731 = vcmp.lt.s32.totalorder %v211, %v149
    %vm1732 = vcmp.lt.s32.totalorder %v211, %v150
    %vm1733 = vcmp.lt.s32.totalorder %v211, %v151
    %vm1734 = vcmp.lt.s32.totalorder %v211, %v152
    %vm1735 = vcmp.lt.s32.totalorder %v212, %v149
    %vm1736 = vcmp.lt.s32.totalorder %v212, %v150
    %vm1737 = vcmp.lt.s32.totalorder %v212, %v151
    %vm1738 = vcmp.lt.s32.totalorder %v212, %v152
    %vm1739 = vcmp.lt.s32.totalorder %v213, %v149
    %vm1740 = vcmp.lt.s32.totalorder %v213, %v150
    %vm1741 = vcmp.lt.s32.totalorder %v213, %v151
    %vm1742 = vcmp.lt.s32.totalorder %v213, %v152
    %vm1743 = vcmp.lt.s32.totalorder %v214, %v149
    %vm1744 = vcmp.lt.s32.totalorder %v214, %v150
    %vm1745 = vcmp.lt.s32.totalorder %v214, %v151
    %vm1746 = vcmp.lt.s32.totalorder %v214, %v152
    %vm1747 = vcmp.lt.s32.totalorder %v215, %v149
    %vm1748 = vcmp.lt.s32.totalorder %v215, %v150
    %vm1749 = vcmp.lt.s32.totalorder %v215, %v151
    %vm1750 = vcmp.lt.s32.totalorder %v215, %v152
    %vm1751 = vcmp.lt.s32.totalorder %v216, %v149
    %vm1752 = vcmp.lt.s32.totalorder %v216, %v150
    %vm1753 = vcmp.lt.s32.totalorder %v216, %v151
    %vm1754 = vcmp.lt.s32.totalorder %v216, %v152
    %vm1755 = vcmp.lt.s32.totalorder %v217, %v149
    %vm1756 = vcmp.lt.s32.totalorder %v217, %v150
    %vm1757 = vcmp.lt.s32.totalorder %v217, %v151
    %vm1758 = vcmp.lt.s32.totalorder %v217, %v152
    %vm1759 = vcmp.lt.s32.totalorder %v218, %v149
    %vm1760 = vcmp.lt.s32.totalorder %v218, %v150
    %vm1761 = vcmp.lt.s32.totalorder %v218, %v151
    %vm1762 = vcmp.lt.s32.totalorder %v218, %v152
    %vm1763 = vcmp.lt.s32.totalorder %v219, %v149
    %vm1764 = vcmp.lt.s32.totalorder %v219, %v150
    %vm1765 = vcmp.lt.s32.totalorder %v219, %v151
    %vm1766 = vcmp.lt.s32.totalorder %v219, %v152
    %vm1767 = vcmp.lt.s32.totalorder %v220, %v149
    %vm1768 = vcmp.lt.s32.totalorder %v220, %v150
    %vm1769 = vcmp.lt.s32.totalorder %v220, %v151
    %vm1770 = vcmp.lt.s32.totalorder %v220, %v152
    %vm1771 = vcmp.lt.s32.totalorder %v221, %v149
    %vm1772 = vcmp.lt.s32.totalorder %v221, %v150
    %vm1773 = vcmp.lt.s32.totalorder %v221, %v151
    %vm1774 = vcmp.lt.s32.totalorder %v221, %v152
    %vm1775 = vmand %vm1263, %vm1519
    %vm1776 = vmand %vm1264, %vm1520
    %vm1777 = vmand %vm1265, %vm1521
    %vm1778 = vmand %vm1266, %vm1522
    %vm1779 = vmand %vm1267, %vm1523
    %vm1780 = vmand %vm1268, %vm1524
    %vm1781 = vmand %vm1269, %vm1525
    %vm1782 = vmand %vm1270, %vm1526
    %vm1783 = vmand %vm1271, %vm1527
    %vm1784 = vmand %vm1272, %vm1528
    %vm1785 = vmand %vm1273, %vm1529
    %vm1786 = vmand %vm1274, %vm1530
    %vm1787 = vmand %vm1275, %vm1531
    %vm1788 = vmand %vm1276, %vm1532
    %vm1789 = vmand %vm1277, %vm1533
    %vm1790 = vmand %vm1278, %vm1534
    %vm1791 = vmand %vm1279, %vm1535
    %vm1792 = vmand %vm1280, %vm1536
    %vm1793 = vmand %vm1281, %vm1537
    %vm1794 = vmand %vm1282, %vm1538
    %vm1795 = vmand %vm1283, %vm1539
    %vm1796 = vmand %vm1284, %vm1540
    %vm1797 = vmand %vm1285, %vm1541
    %vm1798 = vmand %vm1286, %vm1542
    %vm1799 = vmand %vm1287, %vm1543
    %vm1800 = vmand %vm1288, %vm1544
    %vm1801 = vmand %vm1289, %vm1545
    %vm1802 = vmand %vm1290, %vm1546
    %vm1803 = vmand %vm1291, %vm1547
    %vm1804 = vmand %vm1292, %vm1548
    %vm1805 = vmand %vm1293, %vm1549
    %vm1806 = vmand %vm1294, %vm1550
    %vm1807 = vmand %vm1295, %vm1551
    %vm1808 = vmand %vm1296, %vm1552
    %vm1809 = vmand %vm1297, %vm1553
    %vm1810 = vmand %vm1298, %vm1554
    %vm1811 = vmand %vm1299, %vm1555
    %vm1812 = vmand %vm1300, %vm1556
    %vm1813 = vmand %vm1301, %vm1557
    %vm1814 = vmand %vm1302, %vm1558
    %vm1815 = vmand %vm1303, %vm1559
    %vm1816 = vmand %vm1304, %vm1560
    %vm1817 = vmand %vm1305, %vm1561
    %vm1818 = vmand %vm1306, %vm1562
    %vm1819 = vmand %vm1307, %vm1563
    %vm1820 = vmand %vm1308, %vm1564
    %vm1821 = vmand %vm1309, %vm1565
    %vm1822 = vmand %vm1310, %vm1566
    %vm1823 = vmand %vm1311, %vm1567
    %vm1824 = vmand %vm1312, %vm1568
    %vm1825 = vmand %vm1313, %vm1569
    %vm1826 = vmand %vm1314, %vm1570
    %vm1827 = vmand %vm1315, %vm1571
    %vm1828 = vmand %vm1316, %vm1572
    %vm1829 = vmand %vm1317, %vm1573
    %vm1830 = vmand %vm1318, %vm1574
    %vm1831 = vmand %vm1319, %vm1575
    %vm1832 = vmand %vm1320, %vm1576
    %vm1833 = vmand %vm1321, %vm1577
    %vm1834 = vmand %vm1322, %vm1578
    %vm1835 = vmand %vm1323, %vm1579
    %vm1836 = vmand %vm1324, %vm1580
    %vm1837 = vmand %vm1325, %vm1581
    %vm1838 = vmand %vm1326, %vm1582
    %vm1839 = vmand %vm1327, %vm1583
    %vm1840 = vmand %vm1328, %vm1584
    %vm1841 = vmand %vm1329, %vm1585
    %vm1842 = vmand %vm1330, %vm1586
    %vm1843 = vmand %vm1331, %vm1587
    %vm1844 = vmand %vm1332, %vm1588
    %vm1845 = vmand %vm1333, %vm1589
    %vm1846 = vmand %vm1334, %vm1590
    %vm1847 = vmand %vm1335, %vm1591
    %vm1848 = vmand %vm1336, %vm1592
    %vm1849 = vmand %vm1337, %vm1593
    %vm1850 = vmand %vm1338, %vm1594
    %vm1851 = vmand %vm1339, %vm1595
    %vm1852 = vmand %vm1340, %vm1596
    %vm1853 = vmand %vm1341, %vm1597
    %vm1854 = vmand %vm1342, %vm1598
    %vm1855 = vmand %vm1343, %vm1599
    %vm1856 = vmand %vm1344, %vm1600
    %vm1857 = vmand %vm1345, %vm1601
    %vm1858 = vmand %vm1346, %vm1602
    %vm1859 = vmand %vm1347, %vm1603
    %vm1860 = vmand %vm1348, %vm1604
    %vm1861 = vmand %vm1349, %vm1605
    %vm1862 = vmand %vm1350, %vm1606
    %vm1863 = vmand %vm1351, %vm1607
    %vm1864 = vmand %vm1352, %vm1608
    %vm1865 = vmand %vm1353, %vm1609
    %vm1866 = vmand %vm1354, %vm1610
    %vm1867 = vmand %vm1355, %vm1611
    %vm1868 = vmand %vm1356, %vm1612
    %vm1869 = vmand %vm1357, %vm1613
    %vm1870 = vmand %vm1358, %vm1614
    %vm1871 = vmand %vm1359, %vm1615
    %vm1872 = vmand %vm1360, %vm1616
    %vm1873 = vmand %vm1361, %vm1617
    %vm1874 = vmand %vm1362, %vm1618
    %vm1875 = vmand %vm1363, %vm1619
    %vm1876 = vmand %vm1364, %vm1620
    %vm1877 = vmand %vm1365, %vm1621
    %vm1878 = vmand %vm1366, %vm1622
    %vm1879 = vmand %vm1367, %vm1623
    %vm1880 = vmand %vm1368, %vm1624
    %vm1881 = vmand %vm1369, %vm1625
    %vm1882 = vmand %vm1370, %vm1626
    %vm1883 = vmand %vm1371, %vm1627
    %vm1884 = vmand %vm1372, %vm1628
    %vm1885 = vmand %vm1373, %vm1629
    %vm1886 = vmand %vm1374, %vm1630
    %vm1887 = vmand %vm1375, %vm1631
    %vm1888 = vmand %vm1376, %vm1632
    %vm1889 = vmand %vm1377, %vm1633
    %vm1890 = vmand %vm1378, %vm1634
    %vm1891 = vmand %vm1379, %vm1635
    %vm1892 = vmand %vm1380, %vm1636
    %vm1893 = vmand %vm1381, %vm1637
    %vm1894 = vmand %vm1382, %vm1638
    %vm1895 = vmand %vm1383, %vm1639
    %vm1896 = vmand %vm1384, %vm1640
    %vm1897 = vmand %vm1385, %vm1641
    %vm1898 = vmand %vm1386, %vm1642
    %vm1899 = vmand %vm1387, %vm1643
    %vm1900 = vmand %vm1388, %vm1644
    %vm1901 = vmand %vm1389, %vm1645
    %vm1902 = vmand %vm1390, %vm1646
    %vm1903 = vmand %vm1391, %vm1647
    %vm1904 = vmand %vm1392, %vm1648
    %vm1905 = vmand %vm1393, %vm1649
    %vm1906 = vmand %vm1394, %vm1650
    %vm1907 = vmand %vm1395, %vm1651
    %vm1908 = vmand %vm1396, %vm1652
    %vm1909 = vmand %vm1397, %vm1653
    %vm1910 = vmand %vm1398, %vm1654
    %vm1911 = vmand %vm1399, %vm1655
    %vm1912 = vmand %vm1400, %vm1656
    %vm1913 = vmand %vm1401, %vm1657
    %vm1914 = vmand %vm1402, %vm1658
    %vm1915 = vmand %vm1403, %vm1659
    %vm1916 = vmand %vm1404, %vm1660
    %vm1917 = vmand %vm1405, %vm1661
    %vm1918 = vmand %vm1406, %vm1662
    %vm1919 = vmand %vm1407, %vm1663
    %vm1920 = vmand %vm1408, %vm1664
    %vm1921 = vmand %vm1409, %vm1665
    %vm1922 = vmand %vm1410, %vm1666
    %vm1923 = vmand %vm1411, %vm1667
    %vm1924 = vmand %vm1412, %vm1668
    %vm1925 = vmand %vm1413, %vm1669
    %vm1926 = vmand %vm1414, %vm1670
    %vm1927 = vmand %vm1415, %vm1671
    %vm1928 = vmand %vm1416, %vm1672
    %vm1929 = vmand %vm1417, %vm1673
    %vm1930 = vmand %vm1418, %vm1674
    %vm1931 = vmand %vm1419, %vm1675
    %vm1932 = vmand %vm1420, %vm1676
    %vm1933 = vmand %vm1421, %vm1677
    %vm1934 = vmand %vm1422, %vm1678
    %vm1935 = vmand %vm1423, %vm1679
    %vm1936 = vmand %vm1424, %vm1680
    %vm1937 = vmand %vm1425, %vm1681
    %vm1938 = vmand %vm1426, %vm1682
    %vm1939 = vmand %vm1427, %vm1683
    %vm1940 = vmand %vm1428, %vm1684
    %vm1941 = vmand %vm1429, %vm1685
    %vm1942 = vmand %vm1430, %vm1686
    %vm1943 = vmand %vm1431, %vm1687
    %vm1944 = vmand %vm1432, %vm1688
    %vm1945 = vmand %vm1433, %vm1689
    %vm1946 = vmand %vm1434, %vm1690
    %vm1947 = vmand %vm1435, %vm1691
    %vm1948 = vmand %vm1436, %vm1692
    %vm1949 = vmand %vm1437, %vm1693
    %vm1950 = vmand %vm1438, %vm1694
    %vm1951 = vmand %vm1439, %vm1695
    %vm1952 = vmand %vm1440, %vm1696
    %vm1953 = vmand %vm1441, %vm1697
    %vm1954 = vmand %vm1442, %vm1698
    %vm1955 = vmand %vm1443, %vm1699
    %vm1956 = vmand %vm1444, %vm1700
    %vm1957 = vmand %vm1445, %vm1701
    %vm1958 = vmand %vm1446, %vm1702
    %vm1959 = vmand %vm1447, %vm1703
    %vm1960 = vmand %vm1448, %vm1704
    %vm1961 = vmand %vm1449, %vm1705
    %vm1962 = vmand %vm1450, %vm1706
    %vm1963 = vmand %vm1451, %vm1707
    %vm1964 = vmand %vm1452, %vm1708
    %vm1965 = vmand %vm1453, %vm1709
    %vm1966 = vmand %vm1454, %vm1710
    %vm1967 = vmand %vm1455, %vm1711
    %vm1968 = vmand %vm1456, %vm1712
    %vm1969 = vmand %vm1457, %vm1713
    %vm1970 = vmand %vm1458, %vm1714
    %vm1971 = vmand %vm1459, %vm1715
    %vm1972 = vmand %vm1460, %vm1716
    %vm1973 = vmand %vm1461, %vm1717
    %vm1974 = vmand %vm1462, %vm1718
    %vm1975 = vmand %vm1463, %vm1719
    %vm1976 = vmand %vm1464, %vm1720
    %vm1977 = vmand %vm1465, %vm1721
    %vm1978 = vmand %vm1466, %vm1722
    %vm1979 = vmand %vm1467, %vm1723
    %vm1980 = vmand %vm1468, %vm1724
    %vm1981 = vmand %vm1469, %vm1725
    %vm1982 = vmand %vm1470, %vm1726
    %vm1983 = vmand %vm1471, %vm1727
    %vm1984 = vmand %vm1472, %vm1728
    %vm1985 = vmand %vm1473, %vm1729
    %vm1986 = vmand %vm1474, %vm1730
    %vm1987 = vmand %vm1475, %vm1731
    %vm1988 = vmand %vm1476, %vm1732
    %vm1989 = vmand %vm1477, %vm1733
    %vm1990 = vmand %vm1478, %vm1734
    %vm1991 = vmand %vm1479, %vm1735
    %vm1992 = vmand %vm1480, %vm1736
    %vm1993 = vmand %vm1481, %vm1737
    %vm1994 = vmand %vm1482, %vm1738
    %vm1995 = vmand %vm1483, %vm1739
    %vm1996 = vmand %vm1484, %vm1740
    %vm1997 = vmand %vm1485, %vm1741
    %vm1998 = vmand %vm1486, %vm1742
    %vm1999 = vmand %vm1487, %vm1743
    %vm2000 = vmand %vm1488, %vm1744
    %vm2001 = vmand %vm1489, %vm1745
    %vm2002 = vmand %vm1490, %vm1746
    %vm2003 = vmand %vm1491, %vm1747
    %vm2004 = vmand %vm1492, %vm1748
    %vm2005 = vmand %vm1493, %vm1749
    %vm2006 = vmand %vm1494, %vm1750
    %vm2007 = vmand %vm1495, %vm1751
    %vm2008 = vmand %vm1496, %vm1752
    %vm2009 = vmand %vm1497, %vm1753
    %vm2010 = vmand %vm1498, %vm1754
    %vm2011 = vmand %vm1499, %vm1755
    %vm2012 = vmand %vm1500, %vm1756
    %vm2013 = vmand %vm1501, %vm1757
    %vm2014 = vmand %vm1502, %vm1758
    %vm2015 = vmand %vm1503, %vm1759
    %vm2016 = vmand %vm1504, %vm1760
    %vm2017 = vmand %vm1505, %vm1761
    %vm2018 = vmand %vm1506, %vm1762
    %vm2019 = vmand %vm1507, %vm1763
    %vm2020 = vmand %vm1508, %vm1764
    %vm2021 = vmand %vm1509, %vm1765
    %vm2022 = vmand %vm1510, %vm1766
    %vm2023 = vmand %vm1511, %vm1767
    %vm2024 = vmand %vm1512, %vm1768
    %vm2025 = vmand %vm1513, %vm1769
    %vm2026 = vmand %vm1514, %vm1770
    %vm2027 = vmand %vm1515, %vm1771
    %vm2028 = vmand %vm1516, %vm1772
    %vm2029 = vmand %vm1517, %vm1773
    %vm2030 = vmand %vm1518, %vm1774
    %vm2031 = vmor %vm1007, %vm1775
    %vm2032 = vmor %vm1008, %vm1776
    %vm2033 = vmor %vm1009, %vm1777
    %vm2034 = vmor %vm1010, %vm1778
    %vm2035 = vmor %vm1011, %vm1779
    %vm2036 = vmor %vm1012, %vm1780
    %vm2037 = vmor %vm1013, %vm1781
    %vm2038 = vmor %vm1014, %vm1782
    %vm2039 = vmor %vm1015, %vm1783
    %vm2040 = vmor %vm1016, %vm1784
    %vm2041 = vmor %vm1017, %vm1785
    %vm2042 = vmor %vm1018, %vm1786
    %vm2043 = vmor %vm1019, %vm1787
    %vm2044 = vmor %vm1020, %vm1788
    %vm2045 = vmor %vm1021, %vm1789
    %vm2046 = vmor %vm1022, %vm1790
    %vm2047 = vmor %vm1023, %vm1791
    %vm2048 = vmor %vm1024, %vm1792
    %vm2049 = vmor %vm1025, %vm1793
    %vm2050 = vmor %vm1026, %vm1794
    %vm2051 = vmor %vm1027, %vm1795
    %vm2052 = vmor %vm1028, %vm1796
    %vm2053 = vmor %vm1029, %vm1797
    %vm2054 = vmor %vm1030, %vm1798
    %vm2055 = vmor %vm1031, %vm1799
    %vm2056 = vmor %vm1032, %vm1800
    %vm2057 = vmor %vm1033, %vm1801
    %vm2058 = vmor %vm1034, %vm1802
    %vm2059 = vmor %vm1035, %vm1803
    %vm2060 = vmor %vm1036, %vm1804
    %vm2061 = vmor %vm1037, %vm1805
    %vm2062 = vmor %vm1038, %vm1806
    %vm2063 = vmor %vm1039, %vm1807
    %vm2064 = vmor %vm1040, %vm1808
    %vm2065 = vmor %vm1041, %vm1809
    %vm2066 = vmor %vm1042, %vm1810
    %vm2067 = vmor %vm1043, %vm1811
    %vm2068 = vmor %vm1044, %vm1812
    %vm2069 = vmor %vm1045, %vm1813
    %vm2070 = vmor %vm1046, %vm1814
    %vm2071 = vmor %vm1047, %vm1815
    %vm2072 = vmor %vm1048, %vm1816
    %vm2073 = vmor %vm1049, %vm1817
    %vm2074 = vmor %vm1050, %vm1818
    %vm2075 = vmor %vm1051, %vm1819
    %vm2076 = vmor %vm1052, %vm1820
    %vm2077 = vmor %vm1053, %vm1821
    %vm2078 = vmor %vm1054, %vm1822
    %vm2079 = vmor %vm1055, %vm1823
    %vm2080 = vmor %vm1056, %vm1824
    %vm2081 = vmor %vm1057, %vm1825
    %vm2082 = vmor %vm1058, %vm1826
    %vm2083 = vmor %vm1059, %vm1827
    %vm2084 = vmor %vm1060, %vm1828
    %vm2085 = vmor %vm1061, %vm1829
    %vm2086 = vmor %vm1062, %vm1830
    %vm2087 = vmor %vm1063, %vm1831
    %vm2088 = vmor %vm1064, %vm1832
    %vm2089 = vmor %vm1065, %vm1833
    %vm2090 = vmor %vm1066, %vm1834
    %vm2091 = vmor %vm1067, %vm1835
    %vm2092 = vmor %vm1068, %vm1836
    %vm2093 = vmor %vm1069, %vm1837
    %vm2094 = vmor %vm1070, %vm1838
    %vm2095 = vmor %vm1071, %vm1839
    %vm2096 = vmor %vm1072, %vm1840
    %vm2097 = vmor %vm1073, %vm1841
    %vm2098 = vmor %vm1074, %vm1842
    %vm2099 = vmor %vm1075, %vm1843
    %vm2100 = vmor %vm1076, %vm1844
    %vm2101 = vmor %vm1077, %vm1845
    %vm2102 = vmor %vm1078, %vm1846
    %vm2103 = vmor %vm1079, %vm1847
    %vm2104 = vmor %vm1080, %vm1848
    %vm2105 = vmor %vm1081, %vm1849
    %vm2106 = vmor %vm1082, %vm1850
    %vm2107 = vmor %vm1083, %vm1851
    %vm2108 = vmor %vm1084, %vm1852
    %vm2109 = vmor %vm1085, %vm1853
    %vm2110 = vmor %vm1086, %vm1854
    %vm2111 = vmor %vm1087, %vm1855
    %vm2112 = vmor %vm1088, %vm1856
    %vm2113 = vmor %vm1089, %vm1857
    %vm2114 = vmor %vm1090, %vm1858
    %vm2115 = vmor %vm1091, %vm1859
    %vm2116 = vmor %vm1092, %vm1860
    %vm2117 = vmor %vm1093, %vm1861
    %vm2118 = vmor %vm1094, %vm1862
    %vm2119 = vmor %vm1095, %vm1863
    %vm2120 = vmor %vm1096, %vm1864
    %vm2121 = vmor %vm1097, %vm1865
    %vm2122 = vmor %vm1098, %vm1866
    %vm2123 = vmor %vm1099, %vm1867
    %vm2124 = vmor %vm1100, %vm1868
    %vm2125 = vmor %vm1101, %vm1869
    %vm2126 = vmor %vm1102, %vm1870
    %vm2127 = vmor %vm1103, %vm1871
    %vm2128 = vmor %vm1104, %vm1872
    %vm2129 = vmor %vm1105, %vm1873
    %vm2130 = vmor %vm1106, %vm1874
    %vm2131 = vmor %vm1107, %vm1875
    %vm2132 = vmor %vm1108, %vm1876
    %vm2133 = vmor %vm1109, %vm1877
    %vm2134 = vmor %vm1110, %vm1878
    %vm2135 = vmor %vm1111, %vm1879
    %vm2136 = vmor %vm1112, %vm1880
    %vm2137 = vmor %vm1113, %vm1881
    %vm2138 = vmor %vm1114, %vm1882
    %vm2139 = vmor %vm1115, %vm1883
    %vm2140 = vmor %vm1116, %vm1884
    %vm2141 = vmor %vm1117, %vm1885
    %vm2142 = vmor %vm1118, %vm1886
    %vm2143 = vmor %vm1119, %vm1887
    %vm2144 = vmor %vm1120, %vm1888
    %vm2145 = vmor %vm1121, %vm1889
    %vm2146 = vmor %vm1122, %vm1890
    %vm2147 = vmor %vm1123, %vm1891
    %vm2148 = vmor %vm1124, %vm1892
    %vm2149 = vmor %vm1125, %vm1893
    %vm2150 = vmor %vm1126, %vm1894
    %vm2151 = vmor %vm1127, %vm1895
    %vm2152 = vmor %vm1128, %vm1896
    %vm2153 = vmor %vm1129, %vm1897
    %vm2154 = vmor %vm1130, %vm1898
    %vm2155 = vmor %vm1131, %vm1899
    %vm2156 = vmor %vm1132, %vm1900
    %vm2157 = vmor %vm1133, %vm1901
    %vm2158 = vmor %vm1134, %vm1902
    %vm2159 = vmor %vm1135, %vm1903
    %vm2160 = vmor %vm1136, %vm1904
    %vm2161 = vmor %vm1137, %vm1905
    %vm2162 = vmor %vm1138, %vm1906
    %vm2163 = vmor %vm1139, %vm1907
    %vm2164 = vmor %vm1140, %vm1908
    %vm2165 = vmor %vm1141, %vm1909
    %vm2166 = vmor %vm1142, %vm1910
    %vm2167 = vmor %vm1143, %vm1911
    %vm2168 = vmor %vm1144, %vm1912
    %vm2169 = vmor %vm1145, %vm1913
    %vm2170 = vmor %vm1146, %vm1914
    %vm2171 = vmor %vm1147, %vm1915
    %vm2172 = vmor %vm1148, %vm1916
    %vm2173 = vmor %vm1149, %vm1917
    %vm2174 = vmor %vm1150, %vm1918
    %vm2175 = vmor %vm1151, %vm1919
    %vm2176 = vmor %vm1152, %vm1920
    %vm2177 = vmor %vm1153, %vm1921
    %vm2178 = vmor %vm1154, %vm1922
    %vm2179 = vmor %vm1155, %vm1923
    %vm2180 = vmor %vm1156, %vm1924
    %vm2181 = vmor %vm1157, %vm1925
    %vm2182 = vmor %vm1158, %vm1926
    %vm2183 = vmor %vm1159, %vm1927
    %vm2184 = vmor %vm1160, %vm1928
    %vm2185 = vmor %vm1161, %vm1929
    %vm2186 = vmor %vm1162, %vm1930
    %vm2187 = vmor %vm1163, %vm1931
    %vm2188 = vmor %vm1164, %vm1932
    %vm2189 = vmor %vm1165, %vm1933
    %vm2190 = vmor %vm1166, %vm1934
    %vm2191 = vmor %vm1167, %vm1935
    %vm2192 = vmor %vm1168, %vm1936
    %vm2193 = vmor %vm1169, %vm1937
    %vm2194 = vmor %vm1170, %vm1938
    %vm2195 = vmor %vm1171, %vm1939
    %vm2196 = vmor %vm1172, %vm1940
    %vm2197 = vmor %vm1173, %vm1941
    %vm2198 = vmor %vm1174, %vm1942
    %vm2199 = vmor %vm1175, %vm1943
    %vm2200 = vmor %vm1176, %vm1944
    %vm2201 = vmor %vm1177, %vm1945
    %vm2202 = vmor %vm1178, %vm1946
    %vm2203 = vmor %vm1179, %vm1947
    %vm2204 = vmor %vm1180, %vm1948
    %vm2205 = vmor %vm1181, %vm1949
    %vm2206 = vmor %vm1182, %vm1950
    %vm2207 = vmor %vm1183, %vm1951
    %vm2208 = vmor %vm1184, %vm1952
    %vm2209 = vmor %vm1185, %vm1953
    %vm2210 = vmor %vm1186, %vm1954
    %vm2211 = vmor %vm1187, %vm1955
    %vm2212 = vmor %vm1188, %vm1956
    %vm2213 = vmor %vm1189, %vm1957
    %vm2214 = vmor %vm1190, %vm1958
    %vm2215 = vmor %vm1191, %vm1959
    %vm2216 = vmor %vm1192, %vm1960
    %vm2217 = vmor %vm1193, %vm1961
    %vm2218 = vmor %vm1194, %vm1962
    %vm2219 = vmor %vm1195, %vm1963
    %vm2220 = vmor %vm1196, %vm1964
    %vm2221 = vmor %vm1197, %vm1965
    %vm2222 = vmor %vm1198, %vm1966
    %vm2223 = vmor %vm1199, %vm1967
    %vm2224 = vmor %vm1200, %vm1968
    %vm2225 = vmor %vm1201, %vm1969
    %vm2226 = vmor %vm1202, %vm1970
    %vm2227 = vmor %vm1203, %vm1971
    %vm2228 = vmor %vm1204, %vm1972
    %vm2229 = vmor %vm1205, %vm1973
    %vm2230 = vmor %vm1206, %vm1974
    %vm2231 = vmor %vm1207, %vm1975
    %vm2232 = vmor %vm1208, %vm1976
    %vm2233 = vmor %vm1209, %vm1977
    %vm2234 = vmor %vm1210, %vm1978
    %vm2235 = vmor %vm1211, %vm1979
    %vm2236 = vmor %vm1212, %vm1980
    %vm2237 = vmor %vm1213, %vm1981
    %vm2238 = vmor %vm1214, %vm1982
    %vm2239 = vmor %vm1215, %vm1983
    %vm2240 = vmor %vm1216, %vm1984
    %vm2241 = vmor %vm1217, %vm1985
    %vm2242 = vmor %vm1218, %vm1986
    %vm2243 = vmor %vm1219, %vm1987
    %vm2244 = vmor %vm1220, %vm1988
    %vm2245 = vmor %vm1221, %vm1989
    %vm2246 = vmor %vm1222, %vm1990
    %vm2247 = vmor %vm1223, %vm1991
    %vm2248 = vmor %vm1224, %vm1992
    %vm2249 = vmor %vm1225, %vm1993
    %vm2250 = vmor %vm1226, %vm1994
    %vm2251 = vmor %vm1227, %vm1995
    %vm2252 = vmor %vm1228, %vm1996
    %vm2253 = vmor %vm1229, %vm1997
    %vm2254 = vmor %vm1230, %vm1998
    %vm2255 = vmor %vm1231, %vm1999
    %vm2256 = vmor %vm1232, %vm2000
    %vm2257 = vmor %vm1233, %vm2001
    %vm2258 = vmor %vm1234, %vm2002
    %vm2259 = vmor %vm1235, %vm2003
    %vm2260 = vmor %vm1236, %vm2004
    %vm2261 = vmor %vm1237, %vm2005
    %vm2262 = vmor %vm1238, %vm2006
    %vm2263 = vmor %vm1239, %vm2007
    %vm2264 = vmor %vm1240, %vm2008
    %vm2265 = vmor %vm1241, %vm2009
    %vm2266 = vmor %vm1242, %vm2010
    %vm2267 = vmor %vm1243, %vm2011
    %vm2268 = vmor %vm1244, %vm2012
    %vm2269 = vmor %vm1245, %vm2013
    %vm2270 = vmor %vm1246, %vm2014
    %vm2271 = vmor %vm1247, %vm2015
    %vm2272 = vmor %vm1248, %vm2016
    %vm2273 = vmor %vm1249, %vm2017
    %vm2274 = vmor %vm1250, %vm2018
    %vm2275 = vmor %vm1251, %vm2019
    %vm2276 = vmor %vm1252, %vm2020
    %vm2277 = vmor %vm1253, %vm2021
    %vm2278 = vmor %vm1254, %vm2022
    %vm2279 = vmor %vm1255, %vm2023
    %vm2280 = vmor %vm1256, %vm2024
    %vm2281 = vmor %vm1257, %vm2025
    %vm2282 = vmor %vm1258, %vm2026
    %vm2283 = vmor %vm1259, %vm2027
    %vm2284 = vmor %vm1260, %vm2028
    %vm2285 = vmor %vm1261, %vm2029
    %vm2286 = vmor %vm1262, %vm2030
    %v2287 = vsel %vm2031, 1, 0
    %v2288 = vsel %vm2032, 1, 0
    %v2289 = vsel %vm2033, 1, 0
    %v2290 = vsel %vm2034, 1, 0
    %v2291 = vsel %vm2035, 1, 0
    %v2292 = vsel %vm2036, 1, 0
    %v2293 = vsel %vm2037, 1, 0
    %v2294 = vsel %vm2038, 1, 0
    %v2295 = vsel %vm2039, 1, 0
    %v2296 = vsel %vm2040, 1, 0
    %v2297 = vsel %vm2041, 1, 0
    %v2298 = vsel %vm2042, 1, 0
    %v2299 = vsel %vm2043, 1, 0
    %v2300 = vsel %vm2044, 1, 0
    %v2301 = vsel %vm2045, 1, 0
    %v2302 = vsel %vm2046, 1, 0
    %v2303 = vsel %vm2047, 1, 0
    %v2304 = vsel %vm2048, 1, 0
    %v2305 = vsel %vm2049, 1, 0
    %v2306 = vsel %vm2050, 1, 0
    %v2307 = vsel %vm2051, 1, 0
    %v2308 = vsel %vm2052, 1, 0
    %v2309 = vsel %vm2053, 1, 0
    %v2310 = vsel %vm2054, 1, 0
    %v2311 = vsel %vm2055, 1, 0
    %v2312 = vsel %vm2056, 1, 0
    %v2313 = vsel %vm2057, 1, 0
    %v2314 = vsel %vm2058, 1, 0
    %v2315 = vsel %vm2059, 1, 0
    %v2316 = vsel %vm2060, 1, 0
    %v2317 = vsel %vm2061, 1, 0
    %v2318 = vsel %vm2062, 1, 0
    %v2319 = vsel %vm2063, 1, 0
    %v2320 = vsel %vm2064, 1, 0
    %v2321 = vsel %vm2065, 1, 0
    %v2322 = vsel %vm2066, 1, 0
    %v2323 = vsel %vm2067, 1, 0
    %v2324 = vsel %vm2068, 1, 0
    %v2325 = vsel %vm2069, 1, 0
    %v2326 = vsel %vm2070, 1, 0
    %v2327 = vsel %vm2071, 1, 0
    %v2328 = vsel %vm2072, 1, 0
    %v2329 = vsel %vm2073, 1, 0
    %v2330 = vsel %vm2074, 1, 0
    %v2331 = vsel %vm2075, 1, 0
    %v2332 = vsel %vm2076, 1, 0
    %v2333 = vsel %vm2077, 1, 0
    %v2334 = vsel %vm2078, 1, 0
    %v2335 = vsel %vm2079, 1, 0
    %v2336 = vsel %vm2080, 1, 0
    %v2337 = vsel %vm2081, 1, 0
    %v2338 = vsel %vm2082, 1, 0
    %v2339 = vsel %vm2083, 1, 0
    %v2340 = vsel %vm2084, 1, 0
    %v2341 = vsel %vm2085, 1, 0
    %v2342 = vsel %vm2086, 1, 0
    %v2343 = vsel %vm2087, 1, 0
    %v2344 = vsel %vm2088, 1, 0
    %v2345 = vsel %vm2089, 1, 0
    %v2346 = vsel %vm2090, 1, 0
    %v2347 = vsel %vm2091, 1, 0
    %v2348 = vsel %vm2092, 1, 0
    %v2349 = vsel %vm2093, 1, 0
    %v2350 = vsel %vm2094, 1, 0
    %v2351 = vsel %vm2095, 1, 0
    %v2352 = vsel %vm2096, 1, 0
    %v2353 = vsel %vm2097, 1, 0
    %v2354 = vsel %vm2098, 1, 0
    %v2355 = vsel %vm2099, 1, 0
    %v2356 = vsel %vm2100, 1, 0
    %v2357 = vsel %vm2101, 1, 0
    %v2358 = vsel %vm2102, 1, 0
    %v2359 = vsel %vm2103, 1, 0
    %v2360 = vsel %vm2104, 1, 0
    %v2361 = vsel %vm2105, 1, 0
    %v2362 = vsel %vm2106, 1, 0
    %v2363 = vsel %vm2107, 1, 0
    %v2364 = vsel %vm2108, 1, 0
    %v2365 = vsel %vm2109, 1, 0
    %v2366 = vsel %vm2110, 1, 0
    %v2367 = vsel %vm2111, 1, 0
    %v2368 = vsel %vm2112, 1, 0
    %v2369 = vsel %vm2113, 1, 0
    %v2370 = vsel %vm2114, 1, 0
    %v2371 = vsel %vm2115, 1, 0
    %v2372 = vsel %vm2116, 1, 0
    %v2373 = vsel %vm2117, 1, 0
    %v2374 = vsel %vm2118, 1, 0
    %v2375 = vsel %vm2119, 1, 0
    %v2376 = vsel %vm2120, 1, 0
    %v2377 = vsel %vm2121, 1, 0
    %v2378 = vsel %vm2122, 1, 0
    %v2379 = vsel %vm2123, 1, 0
    %v2380 = vsel %vm2124, 1, 0
    %v2381 = vsel %vm2125, 1, 0
    %v2382 = vsel %vm2126, 1, 0
    %v2383 = vsel %vm2127, 1, 0
    %v2384 = vsel %vm2128, 1, 0
    %v2385 = vsel %vm2129, 1, 0
    %v2386 = vsel %vm2130, 1, 0
    %v2387 = vsel %vm2131, 1, 0
    %v2388 = vsel %vm2132, 1, 0
    %v2389 = vsel %vm2133, 1, 0
    %v2390 = vsel %vm2134, 1, 0
    %v2391 = vsel %vm2135, 1, 0
    %v2392 = vsel %vm2136, 1, 0
    %v2393 = vsel %vm2137, 1, 0
    %v2394 = vsel %vm2138, 1, 0
    %v2395 = vsel %vm2139, 1, 0
    %v2396 = vsel %vm2140, 1, 0
    %v2397 = vsel %vm2141, 1, 0
    %v2398 = vsel %vm2142, 1, 0
    %v2399 = vsel %vm2143, 1, 0
    %v2400 = vsel %vm2144, 1, 0
    %v2401 = vsel %vm2145, 1, 0
    %v2402 = vsel %vm2146, 1, 0
    %v2403 = vsel %vm2147, 1, 0
    %v2404 = vsel %vm2148, 1, 0
    %v2405 = vsel %vm2149, 1, 0
    %v2406 = vsel %vm2150, 1, 0
    %v2407 = vsel %vm2151, 1, 0
    %v2408 = vsel %vm2152, 1, 0
    %v2409 = vsel %vm2153, 1, 0
    %v2410 = vsel %vm2154, 1, 0
    %v2411 = vsel %vm2155, 1, 0
    %v2412 = vsel %vm2156, 1, 0
    %v2413 = vsel %vm2157, 1, 0
    %v2414 = vsel %vm2158, 1, 0
    %v2415 = vsel %vm2159, 1, 0
    %v2416 = vsel %vm2160, 1, 0
    %v2417 = vsel %vm2161, 1, 0
    %v2418 = vsel %vm2162, 1, 0
    %v2419 = vsel %vm2163, 1, 0
    %v2420 = vsel %vm2164, 1, 0
    %v2421 = vsel %vm2165, 1, 0
    %v2422 = vsel %vm2166, 1, 0
    %v2423 = vsel %vm2167, 1, 0
    %v2424 = vsel %vm2168, 1, 0
    %v2425 = vsel %vm2169, 1, 0
    %v2426 = vsel %vm2170, 1, 0
    %v2427 = vsel %vm2171, 1, 0
    %v2428 = vsel %vm2172, 1, 0
    %v2429 = vsel %vm2173, 1, 0
    %v2430 = vsel %vm2174, 1, 0
    %v2431 = vsel %vm2175, 1, 0
    %v2432 = vsel %vm2176, 1, 0
    %v2433 = vsel %vm2177, 1, 0
    %v2434 = vsel %vm2178, 1, 0
    %v2435 = vsel %vm2179, 1, 0
    %v2436 = vsel %vm2180, 1, 0
    %v2437 = vsel %vm2181, 1, 0
    %v2438 = vsel %vm2182, 1, 0
    %v2439 = vsel %vm2183, 1, 0
    %v2440 = vsel %vm2184, 1, 0
    %v2441 = vsel %vm2185, 1, 0
    %v2442 = vsel %vm2186, 1, 0
    %v2443 = vsel %vm2187, 1, 0
    %v2444 = vsel %vm2188, 1, 0
    %v2445 = vsel %vm2189, 1, 0
    %v2446 = vsel %vm2190, 1, 0
    %v2447 = vsel %vm2191, 1, 0
    %v2448 = vsel %vm2192, 1, 0
    %v2449 = vsel %vm2193, 1, 0
    %v2450 = vsel %vm2194, 1, 0
    %v2451 = vsel %vm2195, 1, 0
    %v2452 = vsel %vm2196, 1, 0
    %v2453 = vsel %vm2197, 1, 0
    %v2454 = vsel %vm2198, 1, 0
    %v2455 = vsel %vm2199, 1, 0
    %v2456 = vsel %vm2200, 1, 0
    %v2457 = vsel %vm2201, 1, 0
    %v2458 = vsel %vm2202, 1, 0
    %v2459 = vsel %vm2203, 1, 0
    %v2460 = vsel %vm2204, 1, 0
    %v2461 = vsel %vm2205, 1, 0
    %v2462 = vsel %vm2206, 1, 0
    %v2463 = vsel %vm2207, 1, 0
    %v2464 = vsel %vm2208, 1, 0
    %v2465 = vsel %vm2209, 1, 0
    %v2466 = vsel %vm2210, 1, 0
    %v2467 = vsel %vm2211, 1, 0
    %v2468 = vsel %vm2212, 1, 0
    %v2469 = vsel %vm2213, 1, 0
    %v2470 = vsel %vm2214, 1, 0
    %v2471 = vsel %vm2215, 1, 0
    %v2472 = vsel %vm2216, 1, 0
    %v2473 = vsel %vm2217, 1, 0
    %v2474 = vsel %vm2218, 1, 0
    %v2475 = vsel %vm2219, 1, 0
    %v2476 = vsel %vm2220, 1, 0
    %v2477 = vsel %vm2221, 1, 0
    %v2478 = vsel %vm2222, 1, 0
    %v2479 = vsel %vm2223, 1, 0
    %v2480 = vsel %vm2224, 1, 0
    %v2481 = vsel %vm2225, 1, 0
    %v2482 = vsel %vm2226, 1, 0
    %v2483 = vsel %vm2227, 1, 0
    %v2484 = vsel %vm2228, 1, 0
    %v2485 = vsel %vm2229, 1, 0
    %v2486 = vsel %vm2230, 1, 0
    %v2487 = vsel %vm2231, 1, 0
    %v2488 = vsel %vm2232, 1, 0
    %v2489 = vsel %vm2233, 1, 0
    %v2490 = vsel %vm2234, 1, 0
    %v2491 = vsel %vm2235, 1, 0
    %v2492 = vsel %vm2236, 1, 0
    %v2493 = vsel %vm2237, 1, 0
    %v2494 = vsel %vm2238, 1, 0
    %v2495 = vsel %vm2239, 1, 0
    %v2496 = vsel %vm2240, 1, 0
    %v2497 = vsel %vm2241, 1, 0
    %v2498 = vsel %vm2242, 1, 0
    %v2499 = vsel %vm2243, 1, 0
    %v2500 = vsel %vm2244, 1, 0
    %v2501 = vsel %vm2245, 1, 0
    %v2502 = vsel %vm2246, 1, 0
    %v2503 = vsel %vm2247, 1, 0
    %v2504 = vsel %vm2248, 1, 0
    %v2505 = vsel %vm2249, 1, 0
    %v2506 = vsel %vm2250, 1, 0
    %v2507 = vsel %vm2251, 1, 0
    %v2508 = vsel %vm2252, 1, 0
    %v2509 = vsel %vm2253, 1, 0
    %v2510 = vsel %vm2254, 1, 0
    %v2511 = vsel %vm2255, 1, 0
    %v2512 = vsel %vm2256, 1, 0
    %v2513 = vsel %vm2257, 1, 0
    %v2514 = vsel %vm2258, 1, 0
    %v2515 = vsel %vm2259, 1, 0
    %v2516 = vsel %vm2260, 1, 0
    %v2517 = vsel %vm2261, 1, 0
    %v2518 = vsel %vm2262, 1, 0
    %v2519 = vsel %vm2263, 1, 0
    %v2520 = vsel %vm2264, 1, 0
    %v2521 = vsel %vm2265, 1, 0
    %v2522 = vsel %vm2266, 1, 0
    %v2523 = vsel %vm2267, 1, 0
    %v2524 = vsel %vm2268, 1, 0
    %v2525 = vsel %vm2269, 1, 0
    %v2526 = vsel %vm2270, 1, 0
    %v2527 = vsel %vm2271, 1, 0
    %v2528 = vsel %vm2272, 1, 0
    %v2529 = vsel %vm2273, 1, 0
    %v2530 = vsel %vm2274, 1, 0
    %v2531 = vsel %vm2275, 1, 0
    %v2532 = vsel %vm2276, 1, 0
    %v2533 = vsel %vm2277, 1, 0
    %v2534 = vsel %vm2278, 1, 0
    %v2535 = vsel %vm2279, 1, 0
    %v2536 = vsel %vm2280, 1, 0
    %v2537 = vsel %vm2281, 1, 0
    %v2538 = vsel %vm2282, 1, 0
    %v2539 = vsel %vm2283, 1, 0
    %v2540 = vsel %vm2284, 1, 0
    %v2541 = vsel %vm2285, 1, 0
    %v2542 = vsel %vm2286, 1, 0
    %v2543 = vcvt.s32.f32 %v2287
    %v2544 = vcvt.s32.f32 %v2288
    %v2545 = vcvt.s32.f32 %v2289
    %v2546 = vcvt.s32.f32 %v2290
    %v2547 = vcvt.s32.f32 %v2291
    %v2548 = vcvt.s32.f32 %v2292
    %v2549 = vcvt.s32.f32 %v2293
    %v2550 = vcvt.s32.f32 %v2294
    %v2551 = vcvt.s32.f32 %v2295
    %v2552 = vcvt.s32.f32 %v2296
    %v2553 = vcvt.s32.f32 %v2297
    %v2554 = vcvt.s32.f32 %v2298
    %v2555 = vcvt.s32.f32 %v2299
    %v2556 = vcvt.s32.f32 %v2300
    %v2557 = vcvt.s32.f32 %v2301
    %v2558 = vcvt.s32.f32 %v2302
    %v2559 = vcvt.s32.f32 %v2303
    %v2560 = vcvt.s32.f32 %v2304
    %v2561 = vcvt.s32.f32 %v2305
    %v2562 = vcvt.s32.f32 %v2306
    %v2563 = vcvt.s32.f32 %v2307
    %v2564 = vcvt.s32.f32 %v2308
    %v2565 = vcvt.s32.f32 %v2309
    %v2566 = vcvt.s32.f32 %v2310
    %v2567 = vcvt.s32.f32 %v2311
    %v2568 = vcvt.s32.f32 %v2312
    %v2569 = vcvt.s32.f32 %v2313
    %v2570 = vcvt.s32.f32 %v2314
    %v2571 = vcvt.s32.f32 %v2315
    %v2572 = vcvt.s32.f32 %v2316
    %v2573 = vcvt.s32.f32 %v2317
    %v2574 = vcvt.s32.f32 %v2318
    %v2575 = vcvt.s32.f32 %v2319
    %v2576 = vcvt.s32.f32 %v2320
    %v2577 = vcvt.s32.f32 %v2321
    %v2578 = vcvt.s32.f32 %v2322
    %v2579 = vcvt.s32.f32 %v2323
    %v2580 = vcvt.s32.f32 %v2324
    %v2581 = vcvt.s32.f32 %v2325
    %v2582 = vcvt.s32.f32 %v2326
    %v2583 = vcvt.s32.f32 %v2327
    %v2584 = vcvt.s32.f32 %v2328
    %v2585 = vcvt.s32.f32 %v2329
    %v2586 = vcvt.s32.f32 %v2330
    %v2587 = vcvt.s32.f32 %v2331
    %v2588 = vcvt.s32.f32 %v2332
    %v2589 = vcvt.s32.f32 %v2333
    %v2590 = vcvt.s32.f32 %v2334
    %v2591 = vcvt.s32.f32 %v2335
    %v2592 = vcvt.s32.f32 %v2336
    %v2593 = vcvt.s32.f32 %v2337
    %v2594 = vcvt.s32.f32 %v2338
    %v2595 = vcvt.s32.f32 %v2339
    %v2596 = vcvt.s32.f32 %v2340
    %v2597 = vcvt.s32.f32 %v2341
    %v2598 = vcvt.s32.f32 %v2342
    %v2599 = vcvt.s32.f32 %v2343
    %v2600 = vcvt.s32.f32 %v2344
    %v2601 = vcvt.s32.f32 %v2345
    %v2602 = vcvt.s32.f32 %v2346
    %v2603 = vcvt.s32.f32 %v2347
    %v2604 = vcvt.s32.f32 %v2348
    %v2605 = vcvt.s32.f32 %v2349
    %v2606 = vcvt.s32.f32 %v2350
    %v2607 = vcvt.s32.f32 %v2351
    %v2608 = vcvt.s32.f32 %v2352
    %v2609 = vcvt.s32.f32 %v2353
    %v2610 = vcvt.s32.f32 %v2354
    %v2611 = vcvt.s32.f32 %v2355
    %v2612 = vcvt.s32.f32 %v2356
    %v2613 = vcvt.s32.f32 %v2357
    %v2614 = vcvt.s32.f32 %v2358
    %v2615 = vcvt.s32.f32 %v2359
    %v2616 = vcvt.s32.f32 %v2360
    %v2617 = vcvt.s32.f32 %v2361
    %v2618 = vcvt.s32.f32 %v2362
    %v2619 = vcvt.s32.f32 %v2363
    %v2620 = vcvt.s32.f32 %v2364
    %v2621 = vcvt.s32.f32 %v2365
    %v2622 = vcvt.s32.f32 %v2366
    %v2623 = vcvt.s32.f32 %v2367
    %v2624 = vcvt.s32.f32 %v2368
    %v2625 = vcvt.s32.f32 %v2369
    %v2626 = vcvt.s32.f32 %v2370
    %v2627 = vcvt.s32.f32 %v2371
    %v2628 = vcvt.s32.f32 %v2372
    %v2629 = vcvt.s32.f32 %v2373
    %v2630 = vcvt.s32.f32 %v2374
    %v2631 = vcvt.s32.f32 %v2375
    %v2632 = vcvt.s32.f32 %v2376
    %v2633 = vcvt.s32.f32 %v2377
    %v2634 = vcvt.s32.f32 %v2378
    %v2635 = vcvt.s32.f32 %v2379
    %v2636 = vcvt.s32.f32 %v2380
    %v2637 = vcvt.s32.f32 %v2381
    %v2638 = vcvt.s32.f32 %v2382
    %v2639 = vcvt.s32.f32 %v2383
    %v2640 = vcvt.s32.f32 %v2384
    %v2641 = vcvt.s32.f32 %v2385
    %v2642 = vcvt.s32.f32 %v2386
    %v2643 = vcvt.s32.f32 %v2387
    %v2644 = vcvt.s32.f32 %v2388
    %v2645 = vcvt.s32.f32 %v2389
    %v2646 = vcvt.s32.f32 %v2390
    %v2647 = vcvt.s32.f32 %v2391
    %v2648 = vcvt.s32.f32 %v2392
    %v2649 = vcvt.s32.f32 %v2393
    %v2650 = vcvt.s32.f32 %v2394
    %v2651 = vcvt.s32.f32 %v2395
    %v2652 = vcvt.s32.f32 %v2396
    %v2653 = vcvt.s32.f32 %v2397
    %v2654 = vcvt.s32.f32 %v2398
    %v2655 = vcvt.s32.f32 %v2399
    %v2656 = vcvt.s32.f32 %v2400
    %v2657 = vcvt.s32.f32 %v2401
    %v2658 = vcvt.s32.f32 %v2402
    %v2659 = vcvt.s32.f32 %v2403
    %v2660 = vcvt.s32.f32 %v2404
    %v2661 = vcvt.s32.f32 %v2405
    %v2662 = vcvt.s32.f32 %v2406
    %v2663 = vcvt.s32.f32 %v2407
    %v2664 = vcvt.s32.f32 %v2408
    %v2665 = vcvt.s32.f32 %v2409
    %v2666 = vcvt.s32.f32 %v2410
    %v2667 = vcvt.s32.f32 %v2411
    %v2668 = vcvt.s32.f32 %v2412
    %v2669 = vcvt.s32.f32 %v2413
    %v2670 = vcvt.s32.f32 %v2414
    %v2671 = vcvt.s32.f32 %v2415
    %v2672 = vcvt.s32.f32 %v2416
    %v2673 = vcvt.s32.f32 %v2417
    %v2674 = vcvt.s32.f32 %v2418
    %v2675 = vcvt.s32.f32 %v2419
    %v2676 = vcvt.s32.f32 %v2420
    %v2677 = vcvt.s32.f32 %v2421
    %v2678 = vcvt.s32.f32 %v2422
    %v2679 = vcvt.s32.f32 %v2423
    %v2680 = vcvt.s32.f32 %v2424
    %v2681 = vcvt.s32.f32 %v2425
    %v2682 = vcvt.s32.f32 %v2426
    %v2683 = vcvt.s32.f32 %v2427
    %v2684 = vcvt.s32.f32 %v2428
    %v2685 = vcvt.s32.f32 %v2429
    %v2686 = vcvt.s32.f32 %v2430
    %v2687 = vcvt.s32.f32 %v2431
    %v2688 = vcvt.s32.f32 %v2432
    %v2689 = vcvt.s32.f32 %v2433
    %v2690 = vcvt.s32.f32 %v2434
    %v2691 = vcvt.s32.f32 %v2435
    %v2692 = vcvt.s32.f32 %v2436
    %v2693 = vcvt.s32.f32 %v2437
    %v2694 = vcvt.s32.f32 %v2438
    %v2695 = vcvt.s32.f32 %v2439
    %v2696 = vcvt.s32.f32 %v2440
    %v2697 = vcvt.s32.f32 %v2441
    %v2698 = vcvt.s32.f32 %v2442
    %v2699 = vcvt.s32.f32 %v2443
    %v2700 = vcvt.s32.f32 %v2444
    %v2701 = vcvt.s32.f32 %v2445
    %v2702 = vcvt.s32.f32 %v2446
    %v2703 = vcvt.s32.f32 %v2447
    %v2704 = vcvt.s32.f32 %v2448
    %v2705 = vcvt.s32.f32 %v2449
    %v2706 = vcvt.s32.f32 %v2450
    %v2707 = vcvt.s32.f32 %v2451
    %v2708 = vcvt.s32.f32 %v2452
    %v2709 = vcvt.s32.f32 %v2453
    %v2710 = vcvt.s32.f32 %v2454
    %v2711 = vcvt.s32.f32 %v2455
    %v2712 = vcvt.s32.f32 %v2456
    %v2713 = vcvt.s32.f32 %v2457
    %v2714 = vcvt.s32.f32 %v2458
    %v2715 = vcvt.s32.f32 %v2459
    %v2716 = vcvt.s32.f32 %v2460
    %v2717 = vcvt.s32.f32 %v2461
    %v2718 = vcvt.s32.f32 %v2462
    %v2719 = vcvt.s32.f32 %v2463
    %v2720 = vcvt.s32.f32 %v2464
    %v2721 = vcvt.s32.f32 %v2465
    %v2722 = vcvt.s32.f32 %v2466
    %v2723 = vcvt.s32.f32 %v2467
    %v2724 = vcvt.s32.f32 %v2468
    %v2725 = vcvt.s32.f32 %v2469
    %v2726 = vcvt.s32.f32 %v2470
    %v2727 = vcvt.s32.f32 %v2471
    %v2728 = vcvt.s32.f32 %v2472
    %v2729 = vcvt.s32.f32 %v2473
    %v2730 = vcvt.s32.f32 %v2474
    %v2731 = vcvt.s32.f32 %v2475
    %v2732 = vcvt.s32.f32 %v2476
    %v2733 = vcvt.s32.f32 %v2477
    %v2734 = vcvt.s32.f32 %v2478
    %v2735 = vcvt.s32.f32 %v2479
    %v2736 = vcvt.s32.f32 %v2480
    %v2737 = vcvt.s32.f32 %v2481
    %v2738 = vcvt.s32.f32 %v2482
    %v2739 = vcvt.s32.f32 %v2483
    %v2740 = vcvt.s32.f32 %v2484
    %v2741 = vcvt.s32.f32 %v2485
    %v2742 = vcvt.s32.f32 %v2486
    %v2743 = vcvt.s32.f32 %v2487
    %v2744 = vcvt.s32.f32 %v2488
    %v2745 = vcvt.s32.f32 %v2489
    %v2746 = vcvt.s32.f32 %v2490
    %v2747 = vcvt.s32.f32 %v2491
    %v2748 = vcvt.s32.f32 %v2492
    %v2749 = vcvt.s32.f32 %v2493
    %v2750 = vcvt.s32.f32 %v2494
    %v2751 = vcvt.s32.f32 %v2495
    %v2752 = vcvt.s32.f32 %v2496
    %v2753 = vcvt.s32.f32 %v2497
    %v2754 = vcvt.s32.f32 %v2498
    %v2755 = vcvt.s32.f32 %v2499
    %v2756 = vcvt.s32.f32 %v2500
    %v2757 = vcvt.s32.f32 %v2501
    %v2758 = vcvt.s32.f32 %v2502
    %v2759 = vcvt.s32.f32 %v2503
    %v2760 = vcvt.s32.f32 %v2504
    %v2761 = vcvt.s32.f32 %v2505
    %v2762 = vcvt.s32.f32 %v2506
    %v2763 = vcvt.s32.f32 %v2507
    %v2764 = vcvt.s32.f32 %v2508
    %v2765 = vcvt.s32.f32 %v2509
    %v2766 = vcvt.s32.f32 %v2510
    %v2767 = vcvt.s32.f32 %v2511
    %v2768 = vcvt.s32.f32 %v2512
    %v2769 = vcvt.s32.f32 %v2513
    %v2770 = vcvt.s32.f32 %v2514
    %v2771 = vcvt.s32.f32 %v2515
    %v2772 = vcvt.s32.f32 %v2516
    %v2773 = vcvt.s32.f32 %v2517
    %v2774 = vcvt.s32.f32 %v2518
    %v2775 = vcvt.s32.f32 %v2519
    %v2776 = vcvt.s32.f32 %v2520
    %v2777 = vcvt.s32.f32 %v2521
    %v2778 = vcvt.s32.f32 %v2522
    %v2779 = vcvt.s32.f32 %v2523
    %v2780 = vcvt.s32.f32 %v2524
    %v2781 = vcvt.s32.f32 %v2525
    %v2782 = vcvt.s32.f32 %v2526
    %v2783 = vcvt.s32.f32 %v2527
    %v2784 = vcvt.s32.f32 %v2528
    %v2785 = vcvt.s32.f32 %v2529
    %v2786 = vcvt.s32.f32 %v2530
    %v2787 = vcvt.s32.f32 %v2531
    %v2788 = vcvt.s32.f32 %v2532
    %v2789 = vcvt.s32.f32 %v2533
    %v2790 = vcvt.s32.f32 %v2534
    %v2791 = vcvt.s32.f32 %v2535
    %v2792 = vcvt.s32.f32 %v2536
    %v2793 = vcvt.s32.f32 %v2537
    %v2794 = vcvt.s32.f32 %v2538
    %v2795 = vcvt.s32.f32 %v2539
    %v2796 = vcvt.s32.f32 %v2540
    %v2797 = vcvt.s32.f32 %v2541
    %v2798 = vcvt.s32.f32 %v2542
    %v2799 = vadd.f32 %v2543, %v2547
    %v2800 = vadd.f32 %v2799, %v2551
    %v2801 = vadd.f32 %v2800, %v2555
    %v2802 = vadd.f32 %v2801, %v2559
    %v2803 = vadd.f32 %v2802, %v2563
    %v2804 = vadd.f32 %v2803, %v2567
    %v2805 = vadd.f32 %v2804, %v2571
    %v2806 = vadd.f32 %v2805, %v2575
    %v2807 = vadd.f32 %v2806, %v2579
    %v2808 = vadd.f32 %v2807, %v2583
    %v2809 = vadd.f32 %v2808, %v2587
    %v2810 = vadd.f32 %v2809, %v2591
    %v2811 = vadd.f32 %v2810, %v2595
    %v2812 = vadd.f32 %v2811, %v2599
    %v2813 = vadd.f32 %v2812, %v2603
    %v2814 = vadd.f32 %v2813, %v2607
    %v2815 = vadd.f32 %v2814, %v2611
    %v2816 = vadd.f32 %v2815, %v2615
    %v2817 = vadd.f32 %v2816, %v2619
    %v2818 = vadd.f32 %v2817, %v2623
    %v2819 = vadd.f32 %v2818, %v2627
    %v2820 = vadd.f32 %v2819, %v2631
    %v2821 = vadd.f32 %v2820, %v2635
    %v2822 = vadd.f32 %v2821, %v2639
    %v2823 = vadd.f32 %v2822, %v2643
    %v2824 = vadd.f32 %v2823, %v2647
    %v2825 = vadd.f32 %v2824, %v2651
    %v2826 = vadd.f32 %v2825, %v2655
    %v2827 = vadd.f32 %v2826, %v2659
    %v2828 = vadd.f32 %v2827, %v2663
    %v2829 = vadd.f32 %v2828, %v2667
    %v2830 = vadd.f32 %v2829, %v2671
    %v2831 = vadd.f32 %v2830, %v2675
    %v2832 = vadd.f32 %v2831, %v2679
    %v2833 = vadd.f32 %v2832, %v2683
    %v2834 = vadd.f32 %v2833, %v2687
    %v2835 = vadd.f32 %v2834, %v2691
    %v2836 = vadd.f32 %v2835, %v2695
    %v2837 = vadd.f32 %v2836, %v2699
    %v2838 = vadd.f32 %v2837, %v2703
    %v2839 = vadd.f32 %v2838, %v2707
    %v2840 = vadd.f32 %v2839, %v2711
    %v2841 = vadd.f32 %v2840, %v2715
    %v2842 = vadd.f32 %v2841, %v2719
    %v2843 = vadd.f32 %v2842, %v2723
    %v2844 = vadd.f32 %v2843, %v2727
    %v2845 = vadd.f32 %v2844, %v2731
    %v2846 = vadd.f32 %v2845, %v2735
    %v2847 = vadd.f32 %v2846, %v2739
    %v2848 = vadd.f32 %v2847, %v2743
    %v2849 = vadd.f32 %v2848, %v2747
    %v2850 = vadd.f32 %v2849, %v2751
    %v2851 = vadd.f32 %v2850, %v2755
    %v2852 = vadd.f32 %v2851, %v2759
    %v2853 = vadd.f32 %v2852, %v2763
    %v2854 = vadd.f32 %v2853, %v2767
    %v2855 = vadd.f32 %v2854, %v2771
    %v2856 = vadd.f32 %v2855, %v2775
    %v2857 = vadd.f32 %v2856, %v2779
    %v2858 = vadd.f32 %v2857, %v2783
    %v2859 = vadd.f32 %v2858, %v2787
    %v2860 = vadd.f32 %v2859, %v2791
    %v2861 = vadd.f32 %v2860, %v2795
    %v2862 = vrot.slane %v2861, 4
    %v2863 = vadd.f32 %v2861, %v2862
    %v2864 = vrot.slane %v2863, 2
    %v2865 = vadd.f32 %v2863, %v2864
    %v2866 = vrot.slane %v2865, 1
    %v2867 = vadd.f32 %v2865, %v2866
    %v2868 = vadd.f32 %v2544, %v2548
    %v2869 = vadd.f32 %v2868, %v2552
    %v2870 = vadd.f32 %v2869, %v2556
    %v2871 = vadd.f32 %v2870, %v2560
    %v2872 = vadd.f32 %v2871, %v2564
    %v2873 = vadd.f32 %v2872, %v2568
    %v2874 = vadd.f32 %v2873, %v2572
    %v2875 = vadd.f32 %v2874, %v2576
    %v2876 = vadd.f32 %v2875, %v2580
    %v2877 = vadd.f32 %v2876, %v2584
    %v2878 = vadd.f32 %v2877, %v2588
    %v2879 = vadd.f32 %v2878, %v2592
    %v2880 = vadd.f32 %v2879, %v2596
    %v2881 = vadd.f32 %v2880, %v2600
    %v2882 = vadd.f32 %v2881, %v2604
    %v2883 = vadd.f32 %v2882, %v2608
    %v2884 = vadd.f32 %v2883, %v2612
    %v2885 = vadd.f32 %v2884, %v2616
    %v2886 = vadd.f32 %v2885, %v2620
    %v2887 = vadd.f32 %v2886, %v2624
    %v2888 = vadd.f32 %v2887, %v2628
    %v2889 = vadd.f32 %v2888, %v2632
    %v2890 = vadd.f32 %v2889, %v2636
    %v2891 = vadd.f32 %v2890, %v2640
    %v2892 = vadd.f32 %v2891, %v2644
    %v2893 = vadd.f32 %v2892, %v2648
    %v2894 = vadd.f32 %v2893, %v2652
    %v2895 = vadd.f32 %v2894, %v2656
    %v2896 = vadd.f32 %v2895, %v2660
    %v2897 = vadd.f32 %v2896, %v2664
    %v2898 = vadd.f32 %v2897, %v2668
    %v2899 = vadd.f32 %v2898, %v2672
    %v2900 = vadd.f32 %v2899, %v2676
    %v2901 = vadd.f32 %v2900, %v2680
    %v2902 = vadd.f32 %v2901, %v2684
    %v2903 = vadd.f32 %v2902, %v2688
    %v2904 = vadd.f32 %v2903, %v2692
    %v2905 = vadd.f32 %v2904, %v2696
    %v2906 = vadd.f32 %v2905, %v2700
    %v2907 = vadd.f32 %v2906, %v2704
    %v2908 = vadd.f32 %v2907, %v2708
    %v2909 = vadd.f32 %v2908, %v2712
    %v2910 = vadd.f32 %v2909, %v2716
    %v2911 = vadd.f32 %v2910, %v2720
    %v2912 = vadd.f32 %v2911, %v2724
    %v2913 = vadd.f32 %v2912, %v2728
    %v2914 = vadd.f32 %v2913, %v2732
    %v2915 = vadd.f32 %v2914, %v2736
    %v2916 = vadd.f32 %v2915, %v2740
    %v2917 = vadd.f32 %v2916, %v2744
    %v2918 = vadd.f32 %v2917, %v2748
    %v2919 = vadd.f32 %v2918, %v2752
    %v2920 = vadd.f32 %v2919, %v2756
    %v2921 = vadd.f32 %v2920, %v2760
    %v2922 = vadd.f32 %v2921, %v2764
    %v2923 = vadd.f32 %v2922, %v2768
    %v2924 = vadd.f32 %v2923, %v2772
    %v2925 = vadd.f32 %v2924, %v2776
    %v2926 = vadd.f32 %v2925, %v2780
    %v2927 = vadd.f32 %v2926, %v2784
    %v2928 = vadd.f32 %v2927, %v2788
    %v2929 = vadd.f32 %v2928, %v2792
    %v2930 = vadd.f32 %v2929, %v2796
    %v2931 = vrot.slane %v2930, 4
    %v2932 = vadd.f32 %v2930, %v2931
    %v2933 = vrot.slane %v2932, 2
    %v2934 = vadd.f32 %v2932, %v2933
    %v2935 = vrot.slane %v2934, 1
    %v2936 = vadd.f32 %v2934, %v2935
    %v2937 = vadd.f32 %v2545, %v2549
    %v2938 = vadd.f32 %v2937, %v2553
    %v2939 = vadd.f32 %v2938, %v2557
    %v2940 = vadd.f32 %v2939, %v2561
    %v2941 = vadd.f32 %v2940, %v2565
    %v2942 = vadd.f32 %v2941, %v2569
    %v2943 = vadd.f32 %v2942, %v2573
    %v2944 = vadd.f32 %v2943, %v2577
    %v2945 = vadd.f32 %v2944, %v2581
    %v2946 = vadd.f32 %v2945, %v2585
    %v2947 = vadd.f32 %v2946, %v2589
    %v2948 = vadd.f32 %v2947, %v2593
    %v2949 = vadd.f32 %v2948, %v2597
    %v2950 = vadd.f32 %v2949, %v2601
    %v2951 = vadd.f32 %v2950, %v2605
    %v2952 = vadd.f32 %v2951, %v2609
    %v2953 = vadd.f32 %v2952, %v2613
    %v2954 = vadd.f32 %v2953, %v2617
    %v2955 = vadd.f32 %v2954, %v2621
    %v2956 = vadd.f32 %v2955, %v2625
    %v2957 = vadd.f32 %v2956, %v2629
    %v2958 = vadd.f32 %v2957, %v2633
    %v2959 = vadd.f32 %v2958, %v2637
    %v2960 = vadd.f32 %v2959, %v2641
    %v2961 = vadd.f32 %v2960, %v2645
    %v2962 = vadd.f32 %v2961, %v2649
    %v2963 = vadd.f32 %v2962, %v2653
    %v2964 = vadd.f32 %v2963, %v2657
    %v2965 = vadd.f32 %v2964, %v2661
    %v2966 = vadd.f32 %v2965, %v2665
    %v2967 = vadd.f32 %v2966, %v2669
    %v2968 = vadd.f32 %v2967, %v2673
    %v2969 = vadd.f32 %v2968, %v2677
    %v2970 = vadd.f32 %v2969, %v2681
    %v2971 = vadd.f32 %v2970, %v2685
    %v2972 = vadd.f32 %v2971, %v2689
    %v2973 = vadd.f32 %v2972, %v2693
    %v2974 = vadd.f32 %v2973, %v2697
    %v2975 = vadd.f32 %v2974, %v2701
    %v2976 = vadd.f32 %v2975, %v2705
    %v2977 = vadd.f32 %v2976, %v2709
    %v2978 = vadd.f32 %v2977, %v2713
    %v2979 = vadd.f32 %v2978, %v2717
    %v2980 = vadd.f32 %v2979, %v2721
    %v2981 = vadd.f32 %v2980, %v2725
    %v2982 = vadd.f32 %v2981, %v2729
    %v2983 = vadd.f32 %v2982, %v2733
    %v2984 = vadd.f32 %v2983, %v2737
    %v2985 = vadd.f32 %v2984, %v2741
    %v2986 = vadd.f32 %v2985, %v2745
    %v2987 = vadd.f32 %v2986, %v2749
    %v2988 = vadd.f32 %v2987, %v2753
    %v2989 = vadd.f32 %v2988, %v2757
    %v2990 = vadd.f32 %v2989, %v2761
    %v2991 = vadd.f32 %v2990, %v2765
    %v2992 = vadd.f32 %v2991, %v2769
    %v2993 = vadd.f32 %v2992, %v2773
    %v2994 = vadd.f32 %v2993, %v2777
    %v2995 = vadd.f32 %v2994, %v2781
    %v2996 = vadd.f32 %v2995, %v2785
    %v2997 = vadd.f32 %v2996, %v2789
    %v2998 = vadd.f32 %v2997, %v2793
    %v2999 = vadd.f32 %v2998, %v2797
    %v3000 = vrot.slane %v2999, 4
    %v3001 = vadd.f32 %v2999, %v3000
    %v3002 = vrot.slane %v3001, 2
    %v3003 = vadd.f32 %v3001, %v3002
    %v3004 = vrot.slane %v3003, 1
    %v3005 = vadd.f32 %v3003, %v3004
    %v3006 = vadd.f32 %v2546, %v2550
    %v3007 = vadd.f32 %v3006, %v2554
    %v3008 = vadd.f32 %v3007, %v2558
    %v3009 = vadd.f32 %v3008, %v2562
    %v3010 = vadd.f32 %v3009, %v2566
    %v3011 = vadd.f32 %v3010, %v2570
    %v3012 = vadd.f32 %v3011, %v2574
    %v3013 = vadd.f32 %v3012, %v2578
    %v3014 = vadd.f32 %v3013, %v2582
    %v3015 = vadd.f32 %v3014, %v2586
    %v3016 = vadd.f32 %v3015, %v2590
    %v3017 = vadd.f32 %v3016, %v2594
    %v3018 = vadd.f32 %v3017, %v2598
    %v3019 = vadd.f32 %v3018, %v2602
    %v3020 = vadd.f32 %v3019, %v2606
    %v3021 = vadd.f32 %v3020, %v2610
    %v3022 = vadd.f32 %v3021, %v2614
    %v3023 = vadd.f32 %v3022, %v2618
    %v3024 = vadd.f32 %v3023, %v2622
    %v3025 = vadd.f32 %v3024, %v2626
    %v3026 = vadd.f32 %v3025, %v2630
    %v3027 = vadd.f32 %v3026, %v2634
    %v3028 = vadd.f32 %v3027, %v2638
    %v3029 = vadd.f32 %v3028, %v2642
    %v3030 = vadd.f32 %v3029, %v2646
    %v3031 = vadd.f32 %v3030, %v2650
    %v3032 = vadd.f32 %v3031, %v2654
    %v3033 = vadd.f32 %v3032, %v2658
    %v3034 = vadd.f32 %v3033, %v2662
    %v3035 = vadd.f32 %v3034, %v2666
    %v3036 = vadd.f32 %v3035, %v2670
    %v3037 = vadd.f32 %v3036, %v2674
    %v3038 = vadd.f32 %v3037, %v2678
    %v3039 = vadd.f32 %v3038, %v2682
    %v3040 = vadd.f32 %v3039, %v2686
    %v3041 = vadd.f32 %v3040, %v2690
    %v3042 = vadd.f32 %v3041, %v2694
    %v3043 = vadd.f32 %v3042, %v2698
    %v3044 = vadd.f32 %v3043, %v2702
    %v3045 = vadd.f32 %v3044, %v2706
    %v3046 = vadd.f32 %v3045, %v2710
    %v3047 = vadd.f32 %v3046, %v2714
    %v3048 = vadd.f32 %v3047, %v2718
    %v3049 = vadd.f32 %v3048, %v2722
    %v3050 = vadd.f32 %v3049, %v2726
    %v3051 = vadd.f32 %v3050, %v2730
    %v3052 = vadd.f32 %v3051, %v2734
    %v3053 = vadd.f32 %v3052, %v2738
    %v3054 = vadd.f32 %v3053, %v2742
    %v3055 = vadd.f32 %v3054, %v2746
    %v3056 = vadd.f32 %v3055, %v2750
    %v3057 = vadd.f32 %v3056, %v2754
    %v3058 = vadd.f32 %v3057, %v2758
    %v3059 = vadd.f32 %v3058, %v2762
    %v3060 = vadd.f32 %v3059, %v2766
    %v3061 = vadd.f32 %v3060, %v2770
    %v3062 = vadd.f32 %v3061, %v2774
    %v3063 = vadd.f32 %v3062, %v2778
    %v3064 = vadd.f32 %v3063, %v2782
    %v3065 = vadd.f32 %v3064, %v2786
    %v3066 = vadd.f32 %v3065, %v2790
    %v3067 = vadd.f32 %v3066, %v2794
    %v3068 = vadd.f32 %v3067, %v2798
    %v3069 = vrot.slane %v3068, 4
    %v3070 = vadd.f32 %v3068, %v3069
    %v3071 = vrot.slane %v3070, 2
    %v3072 = vadd.f32 %v3070, %v3071
    %v3073 = vrot.slane %v3072, 1
    %v3074 = vadd.f32 %v3072, %v3073
    %v3075 = vstv %s581
    %vm3076 = vcmp.lt.f32.partialorder %v2867, %v3075
    %vm3077 = vcmp.lt.f32.partialorder %v2936, %v3075
    %vm3078 = vcmp.lt.f32.partialorder %v3005, %v3075
    %vm3079 = vcmp.lt.f32.partialorder %v3074, %v3075
    %vm3080 = vmand %vm308, %vm3076
    %vm3081 = vmand %vm309, %vm3077
    %vm3082 = vmand %vm310, %vm3078
    %vm3083 = vmand %vm311, %vm3079
    %v3084 = vsel %vm3080, %v533, 0.0
    %v3085 = vsel %vm3081, %v537, 0.0
    %v3086 = vsel %vm3082, %v541, 0.0
    %v3087 = vsel %vm3083, %v545, 0.0
    %v3088 = vsel %vm474, %v3084, 0.0
    %v3089 = vsel %vm474, %v3085, 0.0
    %v3090 = vadd.f32 %v3088, %v3089
    %v3091 = vsel %vm474, %v3086, 0.0
    %v3092 = vadd.f32 %v3090, %v3091
    %v3093 = vsel %vm474, %v3087, 0.0
    %v3094 = vadd.f32 %v3092, %v3093
    %3095 = vadd.xlane.f32.xlu0 %v3094
    %v3096 = vpop.xlane.xlu0 %3095
    %v3097 = vrot.slane %v3096, 4
    %v3098 = vadd.f32 %v3096, %v3097
    %v3099 = vrot.slane %v3098, 2
    %v3100 = vadd.f32 %v3098, %v3099
    %v3101 = vrot.slane %v3100, 1
    %v3102 = vadd.f32 %v3100, %v3101
    %s3103 = vtos %v3102
    %s3104 = smax.f32 %s581, 1.0
    %v3105 = vstv %s3104
    %v3106 = vrcp.pop %v3105
    %s3107 = vtos %v3106
    %s3108 = smul.f32 %s3103, %s3107
    %s3109 = smul.f32 %s3108, 0.5
    %s3110 = smul.f32 %s574, 0.5
    %s3111 = sadd.f32 %s3109, %s3110
    %p3112 = scmp.eq.s32.totalorder %s515, 0
    %p3113 = scmp.eq.s32.totalorder %s516, 0
    %s3114 = scalar_select %p3113, %s3108, %s3111
    %s3115 = scalar_select %p3112, %s574, %s3114
    %v3116 = vstv %s3115
    %3117 = vst [vmem:[#allocation2] sm:$0x1] %v3116
    // Predicated region
    $region18: #{tpu_custom_call.1} parent=1 // pred_check
      _
    $region19: #{tpu_custom_call.1} parent=1 // pred_check_branch
      %3119 = sbr.rel (0) target = $region21
    $region20: #{tpu_custom_call.1} parent=1 // pred_region
      %s3121 = ssub.s32 16, 16
      %3122 = vsyncadd [#allocation3], %s3121
      %s3124 = sshll.u32 [#allocation2], 4
      %s3125 = int_to_ptr.vmem [resolvable:$true] %s3124
      %3127 = dma.vmem_to_hbm [thread:$0]  %s3125, 16, %s4, [#allocation3]
    $region21: #{tpu_custom_call.1} parent=1 // pred_fallthru
      _
    // Predicated region
    $region22: #{tpu_custom_call.1} parent=1 // pred_check
      _
    $region23: #{tpu_custom_call.1} parent=1 // pred_check_branch
      %3129 = sbr.rel (0) target = $region25
    $region24: #{tpu_custom_call.1} parent=1 // pred_region
      %3130 = dma.done [#allocation3], 16
    $region25: #{tpu_custom_call.1} parent=1 // pred_fallthru
      _
    %3131 = vsyncpa [#allocation3], 1

</llo_original>
